<compile_context>
chip_gen: v6e
topology: v6e:2x2x1
jax: 0.10.0
libtpu: 0.0.40
codegen_flags: <defaults>
</compile_context>

<pallas_src>
from math import ceil

import numpy as np
import jax
import jax.numpy as jnp
from jax import lax
from jax.experimental import pallas as pl
from jax.experimental.pallas import tpu as pltpu

EPS = 1e-15
SELU_ALPHA = 1.6732632423543772
SELU_SCALE = 1.0507009873554805

_VMEM = pl.BlockSpec(memory_space=pltpu.MemorySpace.VMEM)
_SMEM = pl.BlockSpec(memory_space=pltpu.MemorySpace.SMEM)


def _selu(x):
    return SELU_SCALE * jnp.where(
        x > 0, x, SELU_ALPHA * (jnp.exp(jnp.minimum(x, 0.0)) - 1.0))


def _dmon_graph(x, adj, mask, w1, b1, w2, b2):
    """DMoNPooling for a single graph.

    x: (n, h), adj: (n, n), mask: (n, 1) float or None (pool2 is mask-less).
    Returns pooled x (k, h), pooled adj (k, k), spectral loss, ortho loss,
    ||cluster_size|| and 1/num_valid_nodes (losses are (1,1)-shaped).
    """
    n = x.shape[0]
    k = w2.shape[1]
    inv_sqrt_k = 1.0 / float(k) ** 0.5

    # Cluster-assignment MLP (Linear -> Linear, no activation) + softmax over k.
    hid = jnp.dot(x, w1, preferred_element_type=jnp.float32) + b1
    logits = jnp.dot(hid, w2, preferred_element_type=jnp.float32) + b2
    z = logits - jnp.max(logits, axis=-1, keepdims=True)
    ez = jnp.exp(z)
    s = ez * pl.reciprocal(jnp.sum(ez, axis=-1, keepdims=True), approx=True)   # (n, k)

    if mask is not None:                      # mask applied after computing s (PyG order)
        x = x * mask
        s = s * mask

    # Single small transpose of S, reused by every S^T· product below
    # (replaces the old 3-D swapaxes + batched einsums).
    st = s.T                                                           # (k, n)

    x_pool = _selu(jnp.dot(st, x, preferred_element_type=jnp.float32))  # (k, h)

    sta = jnp.dot(st, adj, preferred_element_type=jnp.float32)          # (k, n)
    out_adj = jnp.dot(sta, s, preferred_element_type=jnp.float32)       # (k, k)

    row = lax.broadcasted_iota(jnp.int32, (k, k), 0)
    col = lax.broadcasted_iota(jnp.int32, (k, k), 1)
    eye = (row == col).astype(jnp.float32)

    # Spectral (modularity) loss; trace(decompose) in closed form (no normalizer matrix):
    #   trace = trace(S^T A S) - sum_k c_k^2 / (2m)
    deg = jnp.sum(adj, axis=1, keepdims=True)                            # (n, 1)
    if mask is not None:
        deg = deg * mask
    two_m = jnp.maximum(jnp.sum(deg, keepdims=True), EPS)                # (1,1) guard: edgeless graph
    inv_two_m = pl.reciprocal(two_m, approx=True)
    ck = jnp.dot(st, deg, preferred_element_type=jnp.float32)            # (k, 1) cluster degrees
    trace_out = jnp.sum(out_adj * eye, keepdims=True)
    spectral = -(trace_out - jnp.sum(ck * ck, keepdims=True) * inv_two_m) * inv_two_m

    # Orthogonality loss.
    ss = jnp.dot(st, s, preferred_element_type=jnp.float32)              # (k, k)
    inv_ss_norm = lax.rsqrt(jnp.maximum(jnp.sum(ss * ss, keepdims=True), EPS))  # guard ||S^T S||=0
    diff = ss * inv_ss_norm - eye * inv_sqrt_k
    ortho = jnp.sqrt(jnp.sum(diff * diff, keepdims=True))

    # Cluster-size loss pieces (combined across the batch by the caller,
    # reproducing PyG's [b]/[b,1] broadcast in closed form).
    csize = jnp.sum(s, axis=0, keepdims=True)                            # (1, k)
    cnorm = jnp.sqrt(jnp.sum(csize * csize, keepdims=True))
    if mask is not None:
        inv_nodes = pl.reciprocal(jnp.sum(mask, keepdims=True), approx=True)
    else:
        inv_nodes = 1.0 / float(n)

    # Zero the diagonal, then symmetric degree-normalize the coarsened adjacency.
    out_adj = out_adj * (1.0 - eye)
    dr = jnp.sum(out_adj, axis=1, keepdims=True)                         # (k, 1)
    dc = jnp.sum(out_adj, axis=0, keepdims=True)                         # (1, k)
    out_adj = (out_adj
               * pl.reciprocal(jnp.sqrt(dr) + EPS, approx=True)
               * pl.reciprocal(jnp.sqrt(dc) + EPS, approx=True))
    return x_pool, out_adj, spectral, ortho, cnorm, inv_nodes


def _graph_conv(x, adj, w_cat, b_rel, relu):
    """DenseGraphConv(aggr='add'): lin_rel(A @ X) + lin_root(X) as ONE K=2h matmul."""
    agg = jnp.dot(adj, x, preferred_element_type=jnp.float32)
    cat = jnp.concatenate([agg, x], axis=-1)                             # (n, 2h)
    out = jnp.dot(cat, w_cat, preferred_element_type=jnp.float32) + b_rel
    return jnp.maximum(out, 0.0) if relu else out


def _net_fused_kernel(a_ref, x_ref, scat_ref, adj_ref, mask_ref,
                      gcn_w_ref, gcn_b_ref,
                      p1w1_ref, p1b1_ref, p1w2_ref, p1b2_ref,
                      c2w_ref, c2b_ref,
                      p2w1_ref, p2b1_ref, p2w2_ref, p2b2_ref,
                      c3w_ref, c3b_ref,
                      l1w_ref, l1b_ref, l2w_ref, l2b_ref,
                      logp_ref, aux_ref):
    b = adj_ref.shape[0]
    k1 = p1w2_ref.shape[1]
    k2 = p2w2_ref.shape[1]

    # GCNConv + ReLU on the flat node set, (A @ X) @ W ordering (in_channels << hidden).
    ax = jnp.dot(a_ref[...], x_ref[...], preferred_element_type=jnp.float32)
    xg = jnp.maximum(
        jnp.dot(ax, gcn_w_ref[...], preferred_element_type=jnp.float32) + gcn_b_ref[...],
        0.0)

    p1 = (p1w1_ref[...], p1b1_ref[...], p1w2_ref[...], p1b2_ref[...])
    p2 = (p2w1_ref[...], p2b1_ref[...], p2w2_ref[...], p2b2_ref[...])
    c2w, c2b = c2w_ref[...], c2b_ref[...]
    c3w, c3b = c3w_ref[...], c3b_ref[...]

    sp1 = o1 = cn1 = in1 = 0.0
    sp2 = o2 = cn2 = in2 = 0.0
    means = []
    for bi in range(b):                       # static unroll over graphs: pure 2-D math
        # to_dense_batch for this graph: scatter GCN rows into (max_nodes, h).
        xb = jnp.dot(scat_ref[bi], xg, preferred_element_type=jnp.float32)
        xp, ap, sp_b, or_b, cn_b, in_b = _dmon_graph(xb, adj_ref[bi], mask_ref[bi], *p1)
        sp1 += sp_b; o1 += or_b; cn1 += cn_b; in1 += in_b
        xc = _graph_conv(xp, ap, c2w, c2b, relu=True)
        xp, ap, sp_b, or_b, cn_b, in_b = _dmon_graph(xc, ap, None, *p2)   # pool2: no mask
        sp2 += sp_b; o2 += or_b; cn2 += cn_b; in2 += in_b
        xc = _graph_conv(xp, ap, c3w, c3b, relu=False)
        means.append(jnp.sum(xc, axis=0, keepdims=True) * (1.0 / k2))     # mean over clusters

    # Readout head: lin1 + ReLU, lin2, log_softmax.
    xm = jnp.concatenate(means, axis=0)                                   # (b, h)
    h1 = jnp.maximum(
        jnp.dot(xm, l1w_ref[...], preferred_element_type=jnp.float32) + l1b_ref[...], 0.0)
    logits = jnp.dot(h1, l2w_ref[...], preferred_element_type=jnp.float32) + l2b_ref[...]
    z = logits - jnp.max(logits, axis=-1, keepdims=True)
    logp_ref[...] = z - jnp.log(jnp.sum(jnp.exp(z), axis=-1, keepdims=True))

    # Auxiliary losses: means over the batch; cluster loss reproduces PyG's
    # [b]/[b,1] broadcast quirk in closed form.  Single SMEM scalar leaves the chip.
    binv = 1.0 / b
    sp_loss = (sp1 + sp2) * binv
    or_loss = (o1 + o2) * binv
    cl_loss = (cn1 * in1 * float(k1) ** 0.5
               + cn2 * in2 * float(k2) ** 0.5) * (binv * binv) - 2.0
    total = sp_loss + or_loss + cl_loss
    aux_ref[0] = total[0, 0]


@jax.jit
def net_forward(params, x, a_norm, scatter, adj, mask):
    b = adj.shape[0]
    out_c = params['lin2_w'].shape[1]
    # Stack DenseGraphConv weights once: [w_rel; w_root] -> single K=2h matmul in-kernel.
    c2_wcat = jnp.concatenate([params['c2_rel_w'], params['c2_root_w']], axis=0)
    c3_wcat = jnp.concatenate([params['c3_rel_w'], params['c3_root_w']], axis=0)
    log_probs, aux = pl.pallas_call(
        _net_fused_kernel,
        out_shape=(jax.ShapeDtypeStruct((b, out_c), jnp.float32),
                   jax.ShapeDtypeStruct((1,), jnp.float32)),
        in_specs=[_VMEM] * 23,
        out_specs=(_VMEM, _SMEM),
    )(a_norm, x, scatter, adj, mask,
      params['gcn_w'], params['gcn_b'],
      params['p1_l1_w'], params['p1_l1_b'], params['p1_l2_w'], params['p1_l2_b'],
      c2_wcat, params['c2_rel_b'],
      params['p2_l1_w'], params['p2_l1_b'], params['p2_l2_w'], params['p2_l2_b'],
      c3_wcat, params['c3_rel_b'],
      params['lin1_w'], params['lin1_b'], params['lin2_w'], params['lin2_b'])
    return log_probs, aux[0]


# ------------------------- host-side (topology-only, done once) -------------------------
def build_graph_constants(edge_index, batch, pos, sizes):
    edge_index = np.asarray(edge_index)
    batch = np.asarray(batch)
    pos = np.asarray(pos)
    num_nodes = batch.shape[0]
    batch_size = len(sizes)
    max_nodes = int(max(sizes))
    src, dst = edge_index

    # D^-1/2 (A + I) D^-1/2 for GCNConv (edges aggregated source -> target).
    a = np.zeros((num_nodes, num_nodes), np.float32)
    np.add.at(a, (dst, src), 1.0)
    a += np.eye(num_nodes, dtype=np.float32)
    dinv = 1.0 / np.sqrt(a.sum(axis=1))
    a_norm = dinv[:, None] * a * dinv[None, :]

    # to_dense_batch as a per-graph scatter matrix + node mask.
    scatter = np.zeros((batch_size, max_nodes, num_nodes), np.float32)
    scatter[batch, pos, np.arange(num_nodes)] = 1.0
    mask = np.zeros((batch_size, max_nodes, 1), np.float32)
    mask[batch, pos, 0] = 1.0

    # to_dense_adj.
    adj = np.zeros((batch_size, max_nodes, max_nodes), np.float32)
    np.add.at(adj, (batch[src], pos[src], pos[dst]), 1.0)

    return (jnp.asarray(a_norm), jnp.asarray(scatter),
            jnp.asarray(adj), jnp.asarray(mask))


def init_params(key, in_channels, hidden, out_channels, k1, k2):
    dims = {'gcn': (in_channels, hidden),
            'p1_l1': (hidden, hidden), 'p1_l2': (hidden, k1),
            'c2_rel': (hidden, hidden), 'c2_root': (hidden, hidden),
            'p2_l1': (hidden, hidden), 'p2_l2': (hidden, k2),
            'c3_rel': (hidden, hidden), 'c3_root': (hidden, hidden),
            'lin1': (hidden, hidden), 'lin2': (hidden, out_channels)}
    params = {}
    keys = jax.random.split(key, len(dims))
    for (name, (fan_in, fan_out)), kk in zip(dims.items(), keys):
        kw, kb = jax.random.split(kk)
        bound = 1.0 / np.sqrt(fan_in)
        params[name + '_w'] = jax.random.uniform(kw, (fan_in, fan_out), jnp.float32, -bound, bound)
        params[name + '_b'] = jax.random.uniform(kb, (1, fan_out), jnp.float32, -bound, bound)
    return params


if __name__ == "__main__":
    in_channels = 4
    hidden_channels = 32
    out_channels = 6
    avg_num_nodes = 16
    k1 = ceil(0.5 * avg_num_nodes)   # 8 clusters after pool1
    k2 = ceil(0.5 * k1)              # 4 clusters after pool2

    # Two small ring graphs (+ one chord each), undirected edges stored both ways.
    sizes = [10, 12]
    edges = []
    offset = 0
    for n in sizes:
        for i in range(n):
            edges.append((offset + i, offset + (i + 1) % n))
            edges.append((offset + (i + 1) % n, offset + i))
        edges.append((offset, offset + n // 2))
        edges.append((offset + n // 2, offset))
        offset += n
    edge_index = np.array(edges, dtype=np.int32).T          # (2, 48)
    batch = np.concatenate([np.full(n, i, np.int32) for i, n in enumerate(sizes)])
    pos = np.concatenate([np.arange(n, dtype=np.int32) for n in sizes])

    a_norm, scatter, adj, mask = build_graph_constants(edge_index, batch, pos, sizes)

    key = jax.random.PRNGKey(0)
    kx, kp = jax.random.split(key)
    x = jax.random.normal(kx, (int(sum(sizes)), in_channels), jnp.float32)
    params = init_params(kp, in_channels, hidden_channels, out_channels, k1, k2)

    log_probs, aux_loss = net_forward(params, x, a_norm, scatter, adj, mask)
    jax.block_until_ready((log_probs, aux_loss))
    assert log_probs.shape == (len(sizes), out_channels)
    assert bool(jnp.isfinite(log_probs).all()) and bool(jnp.isfinite(aux_loss))
    print("KERNEL_OK")
</pallas_src>

<mosaic_0001>
module attributes {stable_mosaic.version = 11 : i64} {
  func.func @_net_fused_kernel(%arg0: memref<22x22xf32, #tpu.memory_space<vmem>>, %arg1: memref<22x4xf32, #tpu.memory_space<vmem>>, %arg2: memref<2x12x22xf32, #tpu.memory_space<vmem>>, %arg3: memref<2x12x12xf32, #tpu.memory_space<vmem>>, %arg4: memref<2x12x1xf32, #tpu.memory_space<vmem>>, %arg5: memref<4x32xf32, #tpu.memory_space<vmem>>, %arg6: memref<1x32xf32, #tpu.memory_space<vmem>>, %arg7: memref<32x32xf32, #tpu.memory_space<vmem>>, %arg8: memref<1x32xf32, #tpu.memory_space<vmem>>, %arg9: memref<32x8xf32, #tpu.memory_space<vmem>>, %arg10: memref<1x8xf32, #tpu.memory_space<vmem>>, %arg11: memref<64x32xf32, #tpu.memory_space<vmem>>, %arg12: memref<1x32xf32, #tpu.memory_space<vmem>>, %arg13: memref<32x32xf32, #tpu.memory_space<vmem>>, %arg14: memref<1x32xf32, #tpu.memory_space<vmem>>, %arg15: memref<32x4xf32, #tpu.memory_space<vmem>>, %arg16: memref<1x4xf32, #tpu.memory_space<vmem>>, %arg17: memref<64x32xf32, #tpu.memory_space<vmem>>, %arg18: memref<1x32xf32, #tpu.memory_space<vmem>>, %arg19: memref<32x32xf32, #tpu.memory_space<vmem>>, %arg20: memref<1x32xf32, #tpu.memory_space<vmem>>, %arg21: memref<32x6xf32, #tpu.memory_space<vmem>>, %arg22: memref<1x6xf32, #tpu.memory_space<vmem>>, %arg23: memref<2x6xf32, #tpu.memory_space<vmem>>, %arg24: memref<1xf32, #tpu.memory_space<smem>>) attributes {dimension_semantics = [], scalar_prefetch = 0 : i64, scratch_operands = 0 : i64, tpu.core_type = #tpu.core_type<tc>} {
    %c0 = arith.constant 0 : index
    %c0_0 = arith.constant 0 : index
    %0 = vector.load %arg0[%c0, %c0_0] : memref<22x22xf32, #tpu.memory_space<vmem>>, vector<22x22xf32>
    %c0_1 = arith.constant 0 : index
    %c0_2 = arith.constant 0 : index
    %1 = vector.load %arg1[%c0_1, %c0_2] : memref<22x4xf32, #tpu.memory_space<vmem>>, vector<22x4xf32>
    %cst = arith.constant dense<0.000000e+00> : vector<22x4xf32>
    %2 = tpu.matmul %0, %1, %cst {dimension_numbers = #tpu.dot_dimension_numbers<[1], [0], [0], [1], [0, 0, 1, 1], [], []>} : vector<22x22xf32>, vector<22x4xf32>, vector<22x4xf32> -> vector<22x4xf32>
    %c0_3 = arith.constant 0 : index
    %c0_4 = arith.constant 0 : index
    %3 = vector.load %arg5[%c0_3, %c0_4] : memref<4x32xf32, #tpu.memory_space<vmem>>, vector<4x32xf32>
    %cst_5 = arith.constant dense<0.000000e+00> : vector<22x32xf32>
    %4 = tpu.matmul %2, %3, %cst_5 {dimension_numbers = #tpu.dot_dimension_numbers<[1], [0], [0], [1], [0, 0, 1, 1], [], []>} : vector<22x4xf32>, vector<4x32xf32>, vector<22x32xf32> -> vector<22x32xf32>
    %c0_6 = arith.constant 0 : index
    %c0_7 = arith.constant 0 : index
    %5 = vector.load %arg6[%c0_6, %c0_7] : memref<1x32xf32, #tpu.memory_space<vmem>>, vector<1x32xf32>
    %6 = vector.broadcast %5 : vector<1x32xf32> to vector<22x32xf32>
    %7 = arith.addf %4, %6 : vector<22x32xf32>
    %cst_8 = arith.constant 0.000000e+00 : f32
    %8 = vector.broadcast %cst_8 : f32 to vector<22x32xf32>
    %9 = arith.maximumf %7, %8 : vector<22x32xf32>
    %c0_9 = arith.constant 0 : index
    %c0_10 = arith.constant 0 : index
    %10 = vector.load %arg7[%c0_9, %c0_10] : memref<32x32xf32, #tpu.memory_space<vmem>>, vector<32x32xf32>
    %c0_11 = arith.constant 0 : index
    %c0_12 = arith.constant 0 : index
    %11 = vector.load %arg8[%c0_11, %c0_12] : memref<1x32xf32, #tpu.memory_space<vmem>>, vector<1x32xf32>
    %c0_13 = arith.constant 0 : index
    %c0_14 = arith.constant 0 : index
    %12 = vector.load %arg9[%c0_13, %c0_14] : memref<32x8xf32, #tpu.memory_space<vmem>>, vector<32x8xf32>
    %c0_15 = arith.constant 0 : index
    %c0_16 = arith.constant 0 : index
    %13 = vector.load %arg10[%c0_15, %c0_16] : memref<1x8xf32, #tpu.memory_space<vmem>>, vector<1x8xf32>
    %c0_17 = arith.constant 0 : index
    %c0_18 = arith.constant 0 : index
    %14 = vector.load %arg13[%c0_17, %c0_18] : memref<32x32xf32, #tpu.memory_space<vmem>>, vector<32x32xf32>
    %c0_19 = arith.constant 0 : index
    %c0_20 = arith.constant 0 : index
    %15 = vector.load %arg14[%c0_19, %c0_20] : memref<1x32xf32, #tpu.memory_space<vmem>>, vector<1x32xf32>
    %c0_21 = arith.constant 0 : index
    %c0_22 = arith.constant 0 : index
    %16 = vector.load %arg15[%c0_21, %c0_22] : memref<32x4xf32, #tpu.memory_space<vmem>>, vector<32x4xf32>
    %c0_23 = arith.constant 0 : index
    %c0_24 = arith.constant 0 : index
    %17 = vector.load %arg16[%c0_23, %c0_24] : memref<1x4xf32, #tpu.memory_space<vmem>>, vector<1x4xf32>
    %c0_25 = arith.constant 0 : index
    %c0_26 = arith.constant 0 : index
    %18 = vector.load %arg11[%c0_25, %c0_26] : memref<64x32xf32, #tpu.memory_space<vmem>>, vector<64x32xf32>
    %c0_27 = arith.constant 0 : index
    %c0_28 = arith.constant 0 : index
    %19 = vector.load %arg12[%c0_27, %c0_28] : memref<1x32xf32, #tpu.memory_space<vmem>>, vector<1x32xf32>
    %c0_29 = arith.constant 0 : index
    %c0_30 = arith.constant 0 : index
    %20 = vector.load %arg17[%c0_29, %c0_30] : memref<64x32xf32, #tpu.memory_space<vmem>>, vector<64x32xf32>
    %c0_31 = arith.constant 0 : index
    %c0_32 = arith.constant 0 : index
    %21 = vector.load %arg18[%c0_31, %c0_32] : memref<1x32xf32, #tpu.memory_space<vmem>>, vector<1x32xf32>
    %c0_33 = arith.constant 0 : index
    %c0_34 = arith.constant 0 : index
    %c0_35 = arith.constant 0 : index
    %22 = vector.load %arg2[%c0_33, %c0_34, %c0_35] : memref<2x12x22xf32, #tpu.memory_space<vmem>>, vector<1x12x22xf32>
    %23 = vector.shape_cast %22 : vector<1x12x22xf32> to vector<12x22xf32>
    %cst_36 = arith.constant dense<0.000000e+00> : vector<12x32xf32>
    %24 = tpu.matmul %23, %9, %cst_36 {dimension_numbers = #tpu.dot_dimension_numbers<[1], [0], [0], [1], [0, 0, 1, 1], [], []>} : vector<12x22xf32>, vector<22x32xf32>, vector<12x32xf32> -> vector<12x32xf32>
    %c0_37 = arith.constant 0 : index
    %c0_38 = arith.constant 0 : index
    %c0_39 = arith.constant 0 : index
    %25 = vector.load %arg3[%c0_37, %c0_38, %c0_39] : memref<2x12x12xf32, #tpu.memory_space<vmem>>, vector<1x12x12xf32>
    %26 = vector.shape_cast %25 : vector<1x12x12xf32> to vector<12x12xf32>
    %c0_40 = arith.constant 0 : index
    %c0_41 = arith.constant 0 : index
    %c0_42 = arith.constant 0 : index
    %27 = vector.load %arg4[%c0_40, %c0_41, %c0_42] : memref<2x12x1xf32, #tpu.memory_space<vmem>>, vector<1x12x1xf32>
    %28 = vector.shape_cast %27 : vector<1x12x1xf32> to vector<12x1xf32>
    %cst_43 = arith.constant dense<0.000000e+00> : vector<12x32xf32>
    %29 = tpu.matmul %24, %10, %cst_43 {dimension_numbers = #tpu.dot_dimension_numbers<[1], [0], [0], [1], [0, 0, 1, 1], [], []>} : vector<12x32xf32>, vector<32x32xf32>, vector<12x32xf32> -> vector<12x32xf32>
    %30 = vector.broadcast %11 : vector<1x32xf32> to vector<12x32xf32>
    %31 = arith.addf %29, %30 : vector<12x32xf32>
    %cst_44 = arith.constant dense<0.000000e+00> : vector<12x8xf32>
    %32 = tpu.matmul %31, %12, %cst_44 {dimension_numbers = #tpu.dot_dimension_numbers<[1], [0], [0], [1], [0, 0, 1, 1], [], []>} : vector<12x32xf32>, vector<32x8xf32>, vector<12x8xf32> -> vector<12x8xf32>
    %33 = vector.broadcast %13 : vector<1x8xf32> to vector<12x8xf32>
    %34 = arith.addf %32, %33 : vector<12x8xf32>
    %cst_45 = arith.constant dense<0xFF800000> : vector<12xf32>
    %35 = vector.multi_reduction <maximumf>, %34, %cst_45 [1] : vector<12x8xf32> to vector<12xf32>
    %36 = vector.shape_cast %35 : vector<12xf32> to vector<12x1xf32>
    %37 = vector.broadcast %36 : vector<12x1xf32> to vector<12x8xf32>
    %38 = arith.subf %34, %37 : vector<12x8xf32>
    %39 = math.exp %38 : vector<12x8xf32>
    %cst_46 = arith.constant dense<0.000000e+00> : vector<12xf32>
    %40 = vector.multi_reduction <add>, %39, %cst_46 [1] : vector<12x8xf32> to vector<12xf32>
    %41 = vector.shape_cast %40 : vector<12xf32> to vector<12x1xf32>
    %42 = tpu.reciprocal %41 {approx = true} : vector<12x1xf32> -> vector<12x1xf32>
    %43 = vector.broadcast %42 : vector<12x1xf32> to vector<12x8xf32>
    %44 = arith.mulf %39, %43 : vector<12x8xf32>
    %45 = vector.broadcast %28 : vector<12x1xf32> to vector<12x32xf32>
    %46 = arith.mulf %24, %45 : vector<12x32xf32>
    %47 = vector.broadcast %28 : vector<12x1xf32> to vector<12x8xf32>
    %48 = arith.mulf %44, %47 : vector<12x8xf32>
    %49 = tpu.transpose %48, [1, 0] : vector<12x8xf32> -> vector<8x12xf32>
    %cst_47 = arith.constant dense<0.000000e+00> : vector<8x32xf32>
    %50 = tpu.matmul %49, %46, %cst_47 {dimension_numbers = #tpu.dot_dimension_numbers<[1], [0], [0], [1], [0, 0, 1, 1], [], []>} : vector<8x12xf32>, vector<12x32xf32>, vector<8x32xf32> -> vector<8x32xf32>
    %cst_48 = arith.constant 0.000000e+00 : f32
    %51 = vector.broadcast %cst_48 : f32 to vector<8x32xf32>
    %52 = arith.cmpf ogt, %50, %51 : vector<8x32xf32>
    %cst_49 = arith.constant 0.000000e+00 : f32
    %53 = vector.broadcast %cst_49 : f32 to vector<8x32xf32>
    %54 = arith.minimumf %50, %53 : vector<8x32xf32>
    %55 = math.exp %54 : vector<8x32xf32>
    %cst_50 = arith.constant 1.000000e+00 : f32
    %56 = vector.broadcast %cst_50 : f32 to vector<8x32xf32>
    %57 = arith.subf %55, %56 : vector<8x32xf32>
    %cst_51 = arith.constant 1.67326319 : f32
    %58 = vector.broadcast %cst_51 : f32 to vector<8x32xf32>
    %59 = arith.mulf %58, %57 : vector<8x32xf32>
    %60 = arith.select %52, %50, %59 : vector<8x32xi1>, vector<8x32xf32>
    %cst_52 = arith.constant 1.05070102 : f32
    %61 = vector.broadcast %cst_52 : f32 to vector<8x32xf32>
    %62 = arith.mulf %61, %60 : vector<8x32xf32>
    %cst_53 = arith.constant dense<0.000000e+00> : vector<8x12xf32>
    %63 = tpu.matmul %49, %26, %cst_53 {dimension_numbers = #tpu.dot_dimension_numbers<[1], [0], [0], [1], [0, 0, 1, 1], [], []>} : vector<8x12xf32>, vector<12x12xf32>, vector<8x12xf32> -> vector<8x12xf32>
    %cst_54 = arith.constant dense<0.000000e+00> : vector<8x8xf32>
    %64 = tpu.matmul %63, %48, %cst_54 {dimension_numbers = #tpu.dot_dimension_numbers<[1], [0], [0], [1], [0, 0, 1, 1], [], []>} : vector<8x12xf32>, vector<12x8xf32>, vector<8x8xf32> -> vector<8x8xf32>
    %65 = tpu.iota {dimensions = array<i32: 0>} : vector<8x8xi32>
    %66 = tpu.iota {dimensions = array<i32: 1>} : vector<8x8xi32>
    %67 = arith.cmpi eq, %65, %66 : vector<8x8xi32>
    %68 = arith.extui %67 : vector<8x8xi1> to vector<8x8xi32>
    %69 = arith.sitofp %68 : vector<8x8xi32> to vector<8x8xf32>
    %cst_55 = arith.constant dense<0.000000e+00> : vector<12xf32>
    %70 = vector.multi_reduction <add>, %26, %cst_55 [1] : vector<12x12xf32> to vector<12xf32>
    %71 = vector.shape_cast %70 : vector<12xf32> to vector<12x1xf32>
    %72 = arith.mulf %71, %28 : vector<12x1xf32>
    %73 = vector.shape_cast %72 : vector<12x1xf32> to vector<1x12x1xf32>
    %cst_56 = arith.constant dense<0.000000e+00> : vector<1xf32>
    %74 = vector.multi_reduction <add>, %73, %cst_56 [1, 2] : vector<1x12x1xf32> to vector<1xf32>
    %75 = vector.shape_cast %74 : vector<1xf32> to vector<1x1x1xf32>
    %76 = vector.extract %75[0, 0, 0] : f32 from vector<1x1x1xf32>
    %77 = vector.broadcast %76 : f32 to vector<1x1xf32>
    %cst_57 = arith.constant 1.000000e-15 : f32
    %78 = vector.broadcast %cst_57 : f32 to vector<1x1xf32>
    %79 = arith.maximumf %77, %78 : vector<1x1xf32>
    %80 = tpu.reciprocal %79 {approx = true} : vector<1x1xf32> -> vector<1x1xf32>
    %cst_58 = arith.constant dense<0.000000e+00> : vector<8x1xf32>
    %81 = tpu.matmul %49, %72, %cst_58 {dimension_numbers = #tpu.dot_dimension_numbers<[1], [0], [0], [1], [0, 0, 1, 1], [], []>} : vector<8x12xf32>, vector<12x1xf32>, vector<8x1xf32> -> vector<8x1xf32>
    %82 = arith.mulf %64, %69 : vector<8x8xf32>
    %83 = vector.shape_cast %82 : vector<8x8xf32> to vector<1x8x8xf32>
    %cst_59 = arith.constant dense<0.000000e+00> : vector<1xf32>
    %84 = vector.multi_reduction <add>, %83, %cst_59 [1, 2] : vector<1x8x8xf32> to vector<1xf32>
    %85 = vector.shape_cast %84 : vector<1xf32> to vector<1x1x1xf32>
    %86 = vector.extract %85[0, 0, 0] : f32 from vector<1x1x1xf32>
    %87 = vector.broadcast %86 : f32 to vector<1x1xf32>
    %88 = arith.mulf %81, %81 : vector<8x1xf32>
    %89 = vector.shape_cast %88 : vector<8x1xf32> to vector<1x8x1xf32>
    %cst_60 = arith.constant dense<0.000000e+00> : vector<1xf32>
    %90 = vector.multi_reduction <add>, %89, %cst_60 [1, 2] : vector<1x8x1xf32> to vector<1xf32>
    %91 = vector.shape_cast %90 : vector<1xf32> to vector<1x1x1xf32>
    %92 = vector.extract %91[0, 0, 0] : f32 from vector<1x1x1xf32>
    %93 = vector.broadcast %92 : f32 to vector<1x1xf32>
    %94 = arith.mulf %93, %80 : vector<1x1xf32>
    %95 = arith.subf %87, %94 : vector<1x1xf32>
    %cst_61 = arith.constant 0.000000e+00 : f32
    %96 = vector.broadcast %cst_61 : f32 to vector<1x1xf32>
    %97 = arith.subf %96, %95 : vector<1x1xf32>
    %98 = arith.mulf %97, %80 : vector<1x1xf32>
    %cst_62 = arith.constant dense<0.000000e+00> : vector<8x8xf32>
    %99 = tpu.matmul %49, %48, %cst_62 {dimension_numbers = #tpu.dot_dimension_numbers<[1], [0], [0], [1], [0, 0, 1, 1], [], []>} : vector<8x12xf32>, vector<12x8xf32>, vector<8x8xf32> -> vector<8x8xf32>
    %100 = arith.mulf %99, %99 : vector<8x8xf32>
    %101 = vector.shape_cast %100 : vector<8x8xf32> to vector<1x8x8xf32>
    %cst_63 = arith.constant dense<0.000000e+00> : vector<1xf32>
    %102 = vector.multi_reduction <add>, %101, %cst_63 [1, 2] : vector<1x8x8xf32> to vector<1xf32>
    %103 = vector.shape_cast %102 : vector<1xf32> to vector<1x1x1xf32>
    %104 = vector.extract %103[0, 0, 0] : f32 from vector<1x1x1xf32>
    %105 = vector.broadcast %104 : f32 to vector<1x1xf32>
    %cst_64 = arith.constant 1.000000e-15 : f32
    %106 = vector.broadcast %cst_64 : f32 to vector<1x1xf32>
    %107 = arith.maximumf %105, %106 : vector<1x1xf32>
    %108 = math.rsqrt %107 : vector<1x1xf32>
    %109 = vector.broadcast %108 : vector<1x1xf32> to vector<8x8xf32>
    %110 = arith.mulf %99, %109 : vector<8x8xf32>
    %cst_65 = arith.constant 0.353553385 : f32
    %111 = vector.broadcast %cst_65 : f32 to vector<8x8xf32>
    %112 = arith.mulf %69, %111 : vector<8x8xf32>
    %113 = arith.subf %110, %112 : vector<8x8xf32>
    %114 = arith.mulf %113, %113 : vector<8x8xf32>
    %115 = vector.shape_cast %114 : vector<8x8xf32> to vector<1x8x8xf32>
    %cst_66 = arith.constant dense<0.000000e+00> : vector<1xf32>
    %116 = vector.multi_reduction <add>, %115, %cst_66 [1, 2] : vector<1x8x8xf32> to vector<1xf32>
    %117 = vector.shape_cast %116 : vector<1xf32> to vector<1x1x1xf32>
    %118 = vector.extract %117[0, 0, 0] : f32 from vector<1x1x1xf32>
    %119 = vector.broadcast %118 : f32 to vector<1x1xf32>
    %120 = math.sqrt %119 : vector<1x1xf32>
    %cst_67 = arith.constant dense<0.000000e+00> : vector<8xf32>
    %121 = vector.multi_reduction <add>, %48, %cst_67 [0] : vector<12x8xf32> to vector<8xf32>
    %122 = vector.shape_cast %121 : vector<8xf32> to vector<1x8xf32>
    %123 = arith.mulf %122, %122 : vector<1x8xf32>
    %124 = vector.shape_cast %123 : vector<1x8xf32> to vector<1x1x8xf32>
    %cst_68 = arith.constant dense<0.000000e+00> : vector<1xf32>
    %125 = vector.multi_reduction <add>, %124, %cst_68 [1, 2] : vector<1x1x8xf32> to vector<1xf32>
    %126 = vector.shape_cast %125 : vector<1xf32> to vector<1x1x1xf32>
    %127 = vector.extract %126[0, 0, 0] : f32 from vector<1x1x1xf32>
    %128 = vector.broadcast %127 : f32 to vector<1x1xf32>
    %129 = math.sqrt %128 : vector<1x1xf32>
    %130 = vector.shape_cast %28 : vector<12x1xf32> to vector<1x12x1xf32>
    %cst_69 = arith.constant dense<0.000000e+00> : vector<1xf32>
    %131 = vector.multi_reduction <add>, %130, %cst_69 [1, 2] : vector<1x12x1xf32> to vector<1xf32>
    %132 = vector.shape_cast %131 : vector<1xf32> to vector<1x1x1xf32>
    %133 = vector.extract %132[0, 0, 0] : f32 from vector<1x1x1xf32>
    %134 = vector.broadcast %133 : f32 to vector<1x1xf32>
    %135 = tpu.reciprocal %134 {approx = true} : vector<1x1xf32> -> vector<1x1xf32>
    %cst_70 = arith.constant 1.000000e+00 : f32
    %136 = vector.broadcast %cst_70 : f32 to vector<8x8xf32>
    %137 = arith.subf %136, %69 : vector<8x8xf32>
    %138 = arith.mulf %64, %137 : vector<8x8xf32>
    %cst_71 = arith.constant dense<0.000000e+00> : vector<8xf32>
    %139 = vector.multi_reduction <add>, %138, %cst_71 [1] : vector<8x8xf32> to vector<8xf32>
    %140 = vector.shape_cast %139 : vector<8xf32> to vector<8x1xf32>
    %cst_72 = arith.constant dense<0.000000e+00> : vector<8xf32>
    %141 = vector.multi_reduction <add>, %138, %cst_72 [0] : vector<8x8xf32> to vector<8xf32>
    %142 = vector.shape_cast %141 : vector<8xf32> to vector<1x8xf32>
    %143 = math.sqrt %140 : vector<8x1xf32>
    %cst_73 = arith.constant 1.000000e-15 : f32
    %144 = vector.broadcast %cst_73 : f32 to vector<8x1xf32>
    %145 = arith.addf %143, %144 : vector<8x1xf32>
    %146 = tpu.reciprocal %145 {approx = true} : vector<8x1xf32> -> vector<8x1xf32>
    %147 = vector.broadcast %146 : vector<8x1xf32> to vector<8x8xf32>
    %148 = arith.mulf %138, %147 : vector<8x8xf32>
    %149 = math.sqrt %142 : vector<1x8xf32>
    %cst_74 = arith.constant 1.000000e-15 : f32
    %150 = vector.broadcast %cst_74 : f32 to vector<1x8xf32>
    %151 = arith.addf %149, %150 : vector<1x8xf32>
    %152 = tpu.reciprocal %151 {approx = true} : vector<1x8xf32> -> vector<1x8xf32>
    %153 = vector.broadcast %152 : vector<1x8xf32> to vector<8x8xf32>
    %154 = arith.mulf %148, %153 : vector<8x8xf32>
    %cst_75 = arith.constant 0.000000e+00 : f32
    %155 = vector.broadcast %cst_75 : f32 to vector<1x1xf32>
    %156 = arith.addf %155, %98 : vector<1x1xf32>
    %cst_76 = arith.constant 0.000000e+00 : f32
    %157 = vector.broadcast %cst_76 : f32 to vector<1x1xf32>
    %158 = arith.addf %157, %120 : vector<1x1xf32>
    %cst_77 = arith.constant 0.000000e+00 : f32
    %159 = vector.broadcast %cst_77 : f32 to vector<1x1xf32>
    %160 = arith.addf %159, %129 : vector<1x1xf32>
    %cst_78 = arith.constant 0.000000e+00 : f32
    %161 = vector.broadcast %cst_78 : f32 to vector<1x1xf32>
    %162 = arith.addf %161, %135 : vector<1x1xf32>
    %cst_79 = arith.constant dense<0.000000e+00> : vector<8x32xf32>
    %163 = tpu.matmul %154, %62, %cst_79 {dimension_numbers = #tpu.dot_dimension_numbers<[1], [0], [0], [1], [0, 0, 1, 1], [], []>} : vector<8x8xf32>, vector<8x32xf32>, vector<8x32xf32> -> vector<8x32xf32>
    %164 = tpu.concatenate %163, %62 in 1 : vector<8x32xf32>, vector<8x32xf32> -> vector<8x64xf32>
    %cst_80 = arith.constant dense<0.000000e+00> : vector<8x32xf32>
    %165 = tpu.matmul %164, %18, %cst_80 {dimension_numbers = #tpu.dot_dimension_numbers<[1], [0], [0], [1], [0, 0, 1, 1], [], []>} : vector<8x64xf32>, vector<64x32xf32>, vector<8x32xf32> -> vector<8x32xf32>
    %166 = vector.broadcast %19 : vector<1x32xf32> to vector<8x32xf32>
    %167 = arith.addf %165, %166 : vector<8x32xf32>
    %cst_81 = arith.constant 0.000000e+00 : f32
    %168 = vector.broadcast %cst_81 : f32 to vector<8x32xf32>
    %169 = arith.maximumf %167, %168 : vector<8x32xf32>
    %cst_82 = arith.constant dense<0.000000e+00> : vector<8x32xf32>
    %170 = tpu.matmul %169, %14, %cst_82 {dimension_numbers = #tpu.dot_dimension_numbers<[1], [0], [0], [1], [0, 0, 1, 1], [], []>} : vector<8x32xf32>, vector<32x32xf32>, vector<8x32xf32> -> vector<8x32xf32>
    %171 = vector.broadcast %15 : vector<1x32xf32> to vector<8x32xf32>
    %172 = arith.addf %170, %171 : vector<8x32xf32>
    %cst_83 = arith.constant dense<0.000000e+00> : vector<8x4xf32>
    %173 = tpu.matmul %172, %16, %cst_83 {dimension_numbers = #tpu.dot_dimension_numbers<[1], [0], [0], [1], [0, 0, 1, 1], [], []>} : vector<8x32xf32>, vector<32x4xf32>, vector<8x4xf32> -> vector<8x4xf32>
    %174 = vector.broadcast %17 : vector<1x4xf32> to vector<8x4xf32>
    %175 = arith.addf %173, %174 : vector<8x4xf32>
    %cst_84 = arith.constant dense<0xFF800000> : vector<8xf32>
    %176 = vector.multi_reduction <maximumf>, %175, %cst_84 [1] : vector<8x4xf32> to vector<8xf32>
    %177 = vector.shape_cast %176 : vector<8xf32> to vector<8x1xf32>
    %178 = vector.broadcast %177 : vector<8x1xf32> to vector<8x4xf32>
    %179 = arith.subf %175, %178 : vector<8x4xf32>
    %180 = math.exp %179 : vector<8x4xf32>
    %cst_85 = arith.constant dense<0.000000e+00> : vector<8xf32>
    %181 = vector.multi_reduction <add>, %180, %cst_85 [1] : vector<8x4xf32> to vector<8xf32>
    %182 = vector.shape_cast %181 : vector<8xf32> to vector<8x1xf32>
    %183 = tpu.reciprocal %182 {approx = true} : vector<8x1xf32> -> vector<8x1xf32>
    %184 = vector.broadcast %183 : vector<8x1xf32> to vector<8x4xf32>
    %185 = arith.mulf %180, %184 : vector<8x4xf32>
    %186 = tpu.transpose %185, [1, 0] : vector<8x4xf32> -> vector<4x8xf32>
    %cst_86 = arith.constant dense<0.000000e+00> : vector<4x32xf32>
    %187 = tpu.matmul %186, %169, %cst_86 {dimension_numbers = #tpu.dot_dimension_numbers<[1], [0], [0], [1], [0, 0, 1, 1], [], []>} : vector<4x8xf32>, vector<8x32xf32>, vector<4x32xf32> -> vector<4x32xf32>
    %cst_87 = arith.constant 0.000000e+00 : f32
    %188 = vector.broadcast %cst_87 : f32 to vector<4x32xf32>
    %189 = arith.cmpf ogt, %187, %188 : vector<4x32xf32>
    %cst_88 = arith.constant 0.000000e+00 : f32
    %190 = vector.broadcast %cst_88 : f32 to vector<4x32xf32>
    %191 = arith.minimumf %187, %190 : vector<4x32xf32>
    %192 = math.exp %191 : vector<4x32xf32>
    %cst_89 = arith.constant 1.000000e+00 : f32
    %193 = vector.broadcast %cst_89 : f32 to vector<4x32xf32>
    %194 = arith.subf %192, %193 : vector<4x32xf32>
    %cst_90 = arith.constant 1.67326319 : f32
    %195 = vector.broadcast %cst_90 : f32 to vector<4x32xf32>
    %196 = arith.mulf %195, %194 : vector<4x32xf32>
    %197 = arith.select %189, %187, %196 : vector<4x32xi1>, vector<4x32xf32>
    %cst_91 = arith.constant 1.05070102 : f32
    %198 = vector.broadcast %cst_91 : f32 to vector<4x32xf32>
    %199 = arith.mulf %198, %197 : vector<4x32xf32>
    %cst_92 = arith.constant dense<0.000000e+00> : vector<4x8xf32>
    %200 = tpu.matmul %186, %154, %cst_92 {dimension_numbers = #tpu.dot_dimension_numbers<[1], [0], [0], [1], [0, 0, 1, 1], [], []>} : vector<4x8xf32>, vector<8x8xf32>, vector<4x8xf32> -> vector<4x8xf32>
    %cst_93 = arith.constant dense<0.000000e+00> : vector<4x4xf32>
    %201 = tpu.matmul %200, %185, %cst_93 {dimension_numbers = #tpu.dot_dimension_numbers<[1], [0], [0], [1], [0, 0, 1, 1], [], []>} : vector<4x8xf32>, vector<8x4xf32>, vector<4x4xf32> -> vector<4x4xf32>
    %202 = tpu.iota {dimensions = array<i32: 0>} : vector<4x4xi32>
    %203 = tpu.iota {dimensions = array<i32: 1>} : vector<4x4xi32>
    %204 = arith.cmpi eq, %202, %203 : vector<4x4xi32>
    %205 = arith.extui %204 : vector<4x4xi1> to vector<4x4xi32>
    %206 = arith.sitofp %205 : vector<4x4xi32> to vector<4x4xf32>
    %cst_94 = arith.constant dense<0.000000e+00> : vector<8xf32>
    %207 = vector.multi_reduction <add>, %154, %cst_94 [1] : vector<8x8xf32> to vector<8xf32>
    %208 = vector.shape_cast %207 : vector<8xf32> to vector<8x1xf32>
    %209 = vector.shape_cast %208 : vector<8x1xf32> to vector<1x8x1xf32>
    %cst_95 = arith.constant dense<0.000000e+00> : vector<1xf32>
    %210 = vector.multi_reduction <add>, %209, %cst_95 [1, 2] : vector<1x8x1xf32> to vector<1xf32>
    %211 = vector.shape_cast %210 : vector<1xf32> to vector<1x1x1xf32>
    %212 = vector.extract %211[0, 0, 0] : f32 from vector<1x1x1xf32>
    %213 = vector.broadcast %212 : f32 to vector<1x1xf32>
    %cst_96 = arith.constant 1.000000e-15 : f32
    %214 = vector.broadcast %cst_96 : f32 to vector<1x1xf32>
    %215 = arith.maximumf %213, %214 : vector<1x1xf32>
    %216 = tpu.reciprocal %215 {approx = true} : vector<1x1xf32> -> vector<1x1xf32>
    %cst_97 = arith.constant dense<0.000000e+00> : vector<4x1xf32>
    %217 = tpu.matmul %186, %208, %cst_97 {dimension_numbers = #tpu.dot_dimension_numbers<[1], [0], [0], [1], [0, 0, 1, 1], [], []>} : vector<4x8xf32>, vector<8x1xf32>, vector<4x1xf32> -> vector<4x1xf32>
    %218 = arith.mulf %201, %206 : vector<4x4xf32>
    %219 = vector.shape_cast %218 : vector<4x4xf32> to vector<1x4x4xf32>
    %cst_98 = arith.constant dense<0.000000e+00> : vector<1xf32>
    %220 = vector.multi_reduction <add>, %219, %cst_98 [1, 2] : vector<1x4x4xf32> to vector<1xf32>
    %221 = vector.shape_cast %220 : vector<1xf32> to vector<1x1x1xf32>
    %222 = vector.extract %221[0, 0, 0] : f32 from vector<1x1x1xf32>
    %223 = vector.broadcast %222 : f32 to vector<1x1xf32>
    %224 = arith.mulf %217, %217 : vector<4x1xf32>
    %225 = vector.shape_cast %224 : vector<4x1xf32> to vector<1x4x1xf32>
    %cst_99 = arith.constant dense<0.000000e+00> : vector<1xf32>
    %226 = vector.multi_reduction <add>, %225, %cst_99 [1, 2] : vector<1x4x1xf32> to vector<1xf32>
    %227 = vector.shape_cast %226 : vector<1xf32> to vector<1x1x1xf32>
    %228 = vector.extract %227[0, 0, 0] : f32 from vector<1x1x1xf32>
    %229 = vector.broadcast %228 : f32 to vector<1x1xf32>
    %230 = arith.mulf %229, %216 : vector<1x1xf32>
    %231 = arith.subf %223, %230 : vector<1x1xf32>
    %cst_100 = arith.constant 0.000000e+00 : f32
    %232 = vector.broadcast %cst_100 : f32 to vector<1x1xf32>
    %233 = arith.subf %232, %231 : vector<1x1xf32>
    %234 = arith.mulf %233, %216 : vector<1x1xf32>
    %cst_101 = arith.constant dense<0.000000e+00> : vector<4x4xf32>
    %235 = tpu.matmul %186, %185, %cst_101 {dimension_numbers = #tpu.dot_dimension_numbers<[1], [0], [0], [1], [0, 0, 1, 1], [], []>} : vector<4x8xf32>, vector<8x4xf32>, vector<4x4xf32> -> vector<4x4xf32>
    %236 = arith.mulf %235, %235 : vector<4x4xf32>
    %237 = vector.shape_cast %236 : vector<4x4xf32> to vector<1x4x4xf32>
    %cst_102 = arith.constant dense<0.000000e+00> : vector<1xf32>
    %238 = vector.multi_reduction <add>, %237, %cst_102 [1, 2] : vector<1x4x4xf32> to vector<1xf32>
    %239 = vector.shape_cast %238 : vector<1xf32> to vector<1x1x1xf32>
    %240 = vector.extract %239[0, 0, 0] : f32 from vector<1x1x1xf32>
    %241 = vector.broadcast %240 : f32 to vector<1x1xf32>
    %cst_103 = arith.constant 1.000000e-15 : f32
    %242 = vector.broadcast %cst_103 : f32 to vector<1x1xf32>
    %243 = arith.maximumf %241, %242 : vector<1x1xf32>
    %244 = math.rsqrt %243 : vector<1x1xf32>
    %245 = vector.broadcast %244 : vector<1x1xf32> to vector<4x4xf32>
    %246 = arith.mulf %235, %245 : vector<4x4xf32>
    %cst_104 = arith.constant 5.000000e-01 : f32
    %247 = vector.broadcast %cst_104 : f32 to vector<4x4xf32>
    %248 = arith.mulf %206, %247 : vector<4x4xf32>
    %249 = arith.subf %246, %248 : vector<4x4xf32>
    %250 = arith.mulf %249, %249 : vector<4x4xf32>
    %251 = vector.shape_cast %250 : vector<4x4xf32> to vector<1x4x4xf32>
    %cst_105 = arith.constant dense<0.000000e+00> : vector<1xf32>
    %252 = vector.multi_reduction <add>, %251, %cst_105 [1, 2] : vector<1x4x4xf32> to vector<1xf32>
    %253 = vector.shape_cast %252 : vector<1xf32> to vector<1x1x1xf32>
    %254 = vector.extract %253[0, 0, 0] : f32 from vector<1x1x1xf32>
    %255 = vector.broadcast %254 : f32 to vector<1x1xf32>
    %256 = math.sqrt %255 : vector<1x1xf32>
    %cst_106 = arith.constant dense<0.000000e+00> : vector<4xf32>
    %257 = vector.multi_reduction <add>, %185, %cst_106 [0] : vector<8x4xf32> to vector<4xf32>
    %258 = vector.shape_cast %257 : vector<4xf32> to vector<1x4xf32>
    %259 = arith.mulf %258, %258 : vector<1x4xf32>
    %260 = vector.shape_cast %259 : vector<1x4xf32> to vector<1x1x4xf32>
    %cst_107 = arith.constant dense<0.000000e+00> : vector<1xf32>
    %261 = vector.multi_reduction <add>, %260, %cst_107 [1, 2] : vector<1x1x4xf32> to vector<1xf32>
    %262 = vector.shape_cast %261 : vector<1xf32> to vector<1x1x1xf32>
    %263 = vector.extract %262[0, 0, 0] : f32 from vector<1x1x1xf32>
    %264 = vector.broadcast %263 : f32 to vector<1x1xf32>
    %265 = math.sqrt %264 : vector<1x1xf32>
    %cst_108 = arith.constant 1.000000e+00 : f32
    %266 = vector.broadcast %cst_108 : f32 to vector<4x4xf32>
    %267 = arith.subf %266, %206 : vector<4x4xf32>
    %268 = arith.mulf %201, %267 : vector<4x4xf32>
    %cst_109 = arith.constant dense<0.000000e+00> : vector<4xf32>
    %269 = vector.multi_reduction <add>, %268, %cst_109 [1] : vector<4x4xf32> to vector<4xf32>
    %270 = vector.shape_cast %269 : vector<4xf32> to vector<4x1xf32>
    %cst_110 = arith.constant dense<0.000000e+00> : vector<4xf32>
    %271 = vector.multi_reduction <add>, %268, %cst_110 [0] : vector<4x4xf32> to vector<4xf32>
    %272 = vector.shape_cast %271 : vector<4xf32> to vector<1x4xf32>
    %273 = math.sqrt %270 : vector<4x1xf32>
    %cst_111 = arith.constant 1.000000e-15 : f32
    %274 = vector.broadcast %cst_111 : f32 to vector<4x1xf32>
    %275 = arith.addf %273, %274 : vector<4x1xf32>
    %276 = tpu.reciprocal %275 {approx = true} : vector<4x1xf32> -> vector<4x1xf32>
    %277 = vector.broadcast %276 : vector<4x1xf32> to vector<4x4xf32>
    %278 = arith.mulf %268, %277 : vector<4x4xf32>
    %279 = math.sqrt %272 : vector<1x4xf32>
    %cst_112 = arith.constant 1.000000e-15 : f32
    %280 = vector.broadcast %cst_112 : f32 to vector<1x4xf32>
    %281 = arith.addf %279, %280 : vector<1x4xf32>
    %282 = tpu.reciprocal %281 {approx = true} : vector<1x4xf32> -> vector<1x4xf32>
    %283 = vector.broadcast %282 : vector<1x4xf32> to vector<4x4xf32>
    %284 = arith.mulf %278, %283 : vector<4x4xf32>
    %cst_113 = arith.constant 0.000000e+00 : f32
    %285 = vector.broadcast %cst_113 : f32 to vector<1x1xf32>
    %286 = arith.addf %285, %234 : vector<1x1xf32>
    %cst_114 = arith.constant 0.000000e+00 : f32
    %287 = vector.broadcast %cst_114 : f32 to vector<1x1xf32>
    %288 = arith.addf %287, %256 : vector<1x1xf32>
    %cst_115 = arith.constant 0.000000e+00 : f32
    %289 = vector.broadcast %cst_115 : f32 to vector<1x1xf32>
    %290 = arith.addf %289, %265 : vector<1x1xf32>
    %cst_116 = arith.constant dense<0.000000e+00> : vector<4x32xf32>
    %291 = tpu.matmul %284, %199, %cst_116 {dimension_numbers = #tpu.dot_dimension_numbers<[1], [0], [0], [1], [0, 0, 1, 1], [], []>} : vector<4x4xf32>, vector<4x32xf32>, vector<4x32xf32> -> vector<4x32xf32>
    %292 = tpu.concatenate %291, %199 in 1 : vector<4x32xf32>, vector<4x32xf32> -> vector<4x64xf32>
    %cst_117 = arith.constant dense<0.000000e+00> : vector<4x32xf32>
    %293 = tpu.matmul %292, %20, %cst_117 {dimension_numbers = #tpu.dot_dimension_numbers<[1], [0], [0], [1], [0, 0, 1, 1], [], []>} : vector<4x64xf32>, vector<64x32xf32>, vector<4x32xf32> -> vector<4x32xf32>
    %294 = vector.broadcast %21 : vector<1x32xf32> to vector<4x32xf32>
    %295 = arith.addf %293, %294 : vector<4x32xf32>
    %cst_118 = arith.constant dense<0.000000e+00> : vector<32xf32>
    %296 = vector.multi_reduction <add>, %295, %cst_118 [0] : vector<4x32xf32> to vector<32xf32>
    %297 = vector.shape_cast %296 : vector<32xf32> to vector<1x32xf32>
    %cst_119 = arith.constant 2.500000e-01 : f32
    %298 = vector.broadcast %cst_119 : f32 to vector<1x32xf32>
    %299 = arith.mulf %297, %298 : vector<1x32xf32>
    %c1 = arith.constant 1 : index
    %c0_120 = arith.constant 0 : index
    %c0_121 = arith.constant 0 : index
    %300 = vector.load %arg2[%c1, %c0_120, %c0_121] : memref<2x12x22xf32, #tpu.memory_space<vmem>>, vector<1x12x22xf32>
    %301 = vector.shape_cast %300 : vector<1x12x22xf32> to vector<12x22xf32>
    %cst_122 = arith.constant dense<0.000000e+00> : vector<12x32xf32>
    %302 = tpu.matmul %301, %9, %cst_122 {dimension_numbers = #tpu.dot_dimension_numbers<[1], [0], [0], [1], [0, 0, 1, 1], [], []>} : vector<12x22xf32>, vector<22x32xf32>, vector<12x32xf32> -> vector<12x32xf32>
    %c1_123 = arith.constant 1 : index
    %c0_124 = arith.constant 0 : index
    %c0_125 = arith.constant 0 : index
    %303 = vector.load %arg3[%c1_123, %c0_124, %c0_125] : memref<2x12x12xf32, #tpu.memory_space<vmem>>, vector<1x12x12xf32>
    %304 = vector.shape_cast %303 : vector<1x12x12xf32> to vector<12x12xf32>
    %c1_126 = arith.constant 1 : index
    %c0_127 = arith.constant 0 : index
    %c0_128 = arith.constant 0 : index
    %305 = vector.load %arg4[%c1_126, %c0_127, %c0_128] : memref<2x12x1xf32, #tpu.memory_space<vmem>>, vector<1x12x1xf32>
    %306 = vector.shape_cast %305 : vector<1x12x1xf32> to vector<12x1xf32>
    %cst_129 = arith.constant dense<0.000000e+00> : vector<12x32xf32>
    %307 = tpu.matmul %302, %10, %cst_129 {dimension_numbers = #tpu.dot_dimension_numbers<[1], [0], [0], [1], [0, 0, 1, 1], [], []>} : vector<12x32xf32>, vector<32x32xf32>, vector<12x32xf32> -> vector<12x32xf32>
    %308 = vector.broadcast %11 : vector<1x32xf32> to vector<12x32xf32>
    %309 = arith.addf %307, %308 : vector<12x32xf32>
    %cst_130 = arith.constant dense<0.000000e+00> : vector<12x8xf32>
    %310 = tpu.matmul %309, %12, %cst_130 {dimension_numbers = #tpu.dot_dimension_numbers<[1], [0], [0], [1], [0, 0, 1, 1], [], []>} : vector<12x32xf32>, vector<32x8xf32>, vector<12x8xf32> -> vector<12x8xf32>
    %311 = vector.broadcast %13 : vector<1x8xf32> to vector<12x8xf32>
    %312 = arith.addf %310, %311 : vector<12x8xf32>
    %cst_131 = arith.constant dense<0xFF800000> : vector<12xf32>
    %313 = vector.multi_reduction <maximumf>, %312, %cst_131 [1] : vector<12x8xf32> to vector<12xf32>
    %314 = vector.shape_cast %313 : vector<12xf32> to vector<12x1xf32>
    %315 = vector.broadcast %314 : vector<12x1xf32> to vector<12x8xf32>
    %316 = arith.subf %312, %315 : vector<12x8xf32>
    %317 = math.exp %316 : vector<12x8xf32>
    %cst_132 = arith.constant dense<0.000000e+00> : vector<12xf32>
    %318 = vector.multi_reduction <add>, %317, %cst_132 [1] : vector<12x8xf32> to vector<12xf32>
    %319 = vector.shape_cast %318 : vector<12xf32> to vector<12x1xf32>
    %320 = tpu.reciprocal %319 {approx = true} : vector<12x1xf32> -> vector<12x1xf32>
    %321 = vector.broadcast %320 : vector<12x1xf32> to vector<12x8xf32>
    %322 = arith.mulf %317, %321 : vector<12x8xf32>
    %323 = vector.broadcast %306 : vector<12x1xf32> to vector<12x32xf32>
    %324 = arith.mulf %302, %323 : vector<12x32xf32>
    %325 = vector.broadcast %306 : vector<12x1xf32> to vector<12x8xf32>
    %326 = arith.mulf %322, %325 : vector<12x8xf32>
    %327 = tpu.transpose %326, [1, 0] : vector<12x8xf32> -> vector<8x12xf32>
    %cst_133 = arith.constant dense<0.000000e+00> : vector<8x32xf32>
    %328 = tpu.matmul %327, %324, %cst_133 {dimension_numbers = #tpu.dot_dimension_numbers<[1], [0], [0], [1], [0, 0, 1, 1], [], []>} : vector<8x12xf32>, vector<12x32xf32>, vector<8x32xf32> -> vector<8x32xf32>
    %cst_134 = arith.constant 0.000000e+00 : f32
    %329 = vector.broadcast %cst_134 : f32 to vector<8x32xf32>
    %330 = arith.cmpf ogt, %328, %329 : vector<8x32xf32>
    %cst_135 = arith.constant 0.000000e+00 : f32
    %331 = vector.broadcast %cst_135 : f32 to vector<8x32xf32>
    %332 = arith.minimumf %328, %331 : vector<8x32xf32>
    %333 = math.exp %332 : vector<8x32xf32>
    %cst_136 = arith.constant 1.000000e+00 : f32
    %334 = vector.broadcast %cst_136 : f32 to vector<8x32xf32>
    %335 = arith.subf %333, %334 : vector<8x32xf32>
    %cst_137 = arith.constant 1.67326319 : f32
    %336 = vector.broadcast %cst_137 : f32 to vector<8x32xf32>
    %337 = arith.mulf %336, %335 : vector<8x32xf32>
    %338 = arith.select %330, %328, %337 : vector<8x32xi1>, vector<8x32xf32>
    %cst_138 = arith.constant 1.05070102 : f32
    %339 = vector.broadcast %cst_138 : f32 to vector<8x32xf32>
    %340 = arith.mulf %339, %338 : vector<8x32xf32>
    %cst_139 = arith.constant dense<0.000000e+00> : vector<8x12xf32>
    %341 = tpu.matmul %327, %304, %cst_139 {dimension_numbers = #tpu.dot_dimension_numbers<[1], [0], [0], [1], [0, 0, 1, 1], [], []>} : vector<8x12xf32>, vector<12x12xf32>, vector<8x12xf32> -> vector<8x12xf32>
    %cst_140 = arith.constant dense<0.000000e+00> : vector<8x8xf32>
    %342 = tpu.matmul %341, %326, %cst_140 {dimension_numbers = #tpu.dot_dimension_numbers<[1], [0], [0], [1], [0, 0, 1, 1], [], []>} : vector<8x12xf32>, vector<12x8xf32>, vector<8x8xf32> -> vector<8x8xf32>
    %343 = tpu.iota {dimensions = array<i32: 0>} : vector<8x8xi32>
    %344 = tpu.iota {dimensions = array<i32: 1>} : vector<8x8xi32>
    %345 = arith.cmpi eq, %343, %344 : vector<8x8xi32>
    %346 = arith.extui %345 : vector<8x8xi1> to vector<8x8xi32>
    %347 = arith.sitofp %346 : vector<8x8xi32> to vector<8x8xf32>
    %cst_141 = arith.constant dense<0.000000e+00> : vector<12xf32>
    %348 = vector.multi_reduction <add>, %304, %cst_141 [1] : vector<12x12xf32> to vector<12xf32>
    %349 = vector.shape_cast %348 : vector<12xf32> to vector<12x1xf32>
    %350 = arith.mulf %349, %306 : vector<12x1xf32>
    %351 = vector.shape_cast %350 : vector<12x1xf32> to vector<1x12x1xf32>
    %cst_142 = arith.constant dense<0.000000e+00> : vector<1xf32>
    %352 = vector.multi_reduction <add>, %351, %cst_142 [1, 2] : vector<1x12x1xf32> to vector<1xf32>
    %353 = vector.shape_cast %352 : vector<1xf32> to vector<1x1x1xf32>
    %354 = vector.extract %353[0, 0, 0] : f32 from vector<1x1x1xf32>
    %355 = vector.broadcast %354 : f32 to vector<1x1xf32>
    %cst_143 = arith.constant 1.000000e-15 : f32
    %356 = vector.broadcast %cst_143 : f32 to vector<1x1xf32>
    %357 = arith.maximumf %355, %356 : vector<1x1xf32>
    %358 = tpu.reciprocal %357 {approx = true} : vector<1x1xf32> -> vector<1x1xf32>
    %cst_144 = arith.constant dense<0.000000e+00> : vector<8x1xf32>
    %359 = tpu.matmul %327, %350, %cst_144 {dimension_numbers = #tpu.dot_dimension_numbers<[1], [0], [0], [1], [0, 0, 1, 1], [], []>} : vector<8x12xf32>, vector<12x1xf32>, vector<8x1xf32> -> vector<8x1xf32>
    %360 = arith.mulf %342, %347 : vector<8x8xf32>
    %361 = vector.shape_cast %360 : vector<8x8xf32> to vector<1x8x8xf32>
    %cst_145 = arith.constant dense<0.000000e+00> : vector<1xf32>
    %362 = vector.multi_reduction <add>, %361, %cst_145 [1, 2] : vector<1x8x8xf32> to vector<1xf32>
    %363 = vector.shape_cast %362 : vector<1xf32> to vector<1x1x1xf32>
    %364 = vector.extract %363[0, 0, 0] : f32 from vector<1x1x1xf32>
    %365 = vector.broadcast %364 : f32 to vector<1x1xf32>
    %366 = arith.mulf %359, %359 : vector<8x1xf32>
    %367 = vector.shape_cast %366 : vector<8x1xf32> to vector<1x8x1xf32>
    %cst_146 = arith.constant dense<0.000000e+00> : vector<1xf32>
    %368 = vector.multi_reduction <add>, %367, %cst_146 [1, 2] : vector<1x8x1xf32> to vector<1xf32>
    %369 = vector.shape_cast %368 : vector<1xf32> to vector<1x1x1xf32>
    %370 = vector.extract %369[0, 0, 0] : f32 from vector<1x1x1xf32>
    %371 = vector.broadcast %370 : f32 to vector<1x1xf32>
    %372 = arith.mulf %371, %358 : vector<1x1xf32>
    %373 = arith.subf %365, %372 : vector<1x1xf32>
    %cst_147 = arith.constant 0.000000e+00 : f32
    %374 = vector.broadcast %cst_147 : f32 to vector<1x1xf32>
    %375 = arith.subf %374, %373 : vector<1x1xf32>
    %376 = arith.mulf %375, %358 : vector<1x1xf32>
    %cst_148 = arith.constant dense<0.000000e+00> : vector<8x8xf32>
    %377 = tpu.matmul %327, %326, %cst_148 {dimension_numbers = #tpu.dot_dimension_numbers<[1], [0], [0], [1], [0, 0, 1, 1], [], []>} : vector<8x12xf32>, vector<12x8xf32>, vector<8x8xf32> -> vector<8x8xf32>
    %378 = arith.mulf %377, %377 : vector<8x8xf32>
    %379 = vector.shape_cast %378 : vector<8x8xf32> to vector<1x8x8xf32>
    %cst_149 = arith.constant dense<0.000000e+00> : vector<1xf32>
    %380 = vector.multi_reduction <add>, %379, %cst_149 [1, 2] : vector<1x8x8xf32> to vector<1xf32>
    %381 = vector.shape_cast %380 : vector<1xf32> to vector<1x1x1xf32>
    %382 = vector.extract %381[0, 0, 0] : f32 from vector<1x1x1xf32>
    %383 = vector.broadcast %382 : f32 to vector<1x1xf32>
    %cst_150 = arith.constant 1.000000e-15 : f32
    %384 = vector.broadcast %cst_150 : f32 to vector<1x1xf32>
    %385 = arith.maximumf %383, %384 : vector<1x1xf32>
    %386 = math.rsqrt %385 : vector<1x1xf32>
    %387 = vector.broadcast %386 : vector<1x1xf32> to vector<8x8xf32>
    %388 = arith.mulf %377, %387 : vector<8x8xf32>
    %cst_151 = arith.constant 0.353553385 : f32
    %389 = vector.broadcast %cst_151 : f32 to vector<8x8xf32>
    %390 = arith.mulf %347, %389 : vector<8x8xf32>
    %391 = arith.subf %388, %390 : vector<8x8xf32>
    %392 = arith.mulf %391, %391 : vector<8x8xf32>
    %393 = vector.shape_cast %392 : vector<8x8xf32> to vector<1x8x8xf32>
    %cst_152 = arith.constant dense<0.000000e+00> : vector<1xf32>
    %394 = vector.multi_reduction <add>, %393, %cst_152 [1, 2] : vector<1x8x8xf32> to vector<1xf32>
    %395 = vector.shape_cast %394 : vector<1xf32> to vector<1x1x1xf32>
    %396 = vector.extract %395[0, 0, 0] : f32 from vector<1x1x1xf32>
    %397 = vector.broadcast %396 : f32 to vector<1x1xf32>
    %398 = math.sqrt %397 : vector<1x1xf32>
    %cst_153 = arith.constant dense<0.000000e+00> : vector<8xf32>
    %399 = vector.multi_reduction <add>, %326, %cst_153 [0] : vector<12x8xf32> to vector<8xf32>
    %400 = vector.shape_cast %399 : vector<8xf32> to vector<1x8xf32>
    %401 = arith.mulf %400, %400 : vector<1x8xf32>
    %402 = vector.shape_cast %401 : vector<1x8xf32> to vector<1x1x8xf32>
    %cst_154 = arith.constant dense<0.000000e+00> : vector<1xf32>
    %403 = vector.multi_reduction <add>, %402, %cst_154 [1, 2] : vector<1x1x8xf32> to vector<1xf32>
    %404 = vector.shape_cast %403 : vector<1xf32> to vector<1x1x1xf32>
    %405 = vector.extract %404[0, 0, 0] : f32 from vector<1x1x1xf32>
    %406 = vector.broadcast %405 : f32 to vector<1x1xf32>
    %407 = math.sqrt %406 : vector<1x1xf32>
    %408 = vector.shape_cast %306 : vector<12x1xf32> to vector<1x12x1xf32>
    %cst_155 = arith.constant dense<0.000000e+00> : vector<1xf32>
    %409 = vector.multi_reduction <add>, %408, %cst_155 [1, 2] : vector<1x12x1xf32> to vector<1xf32>
    %410 = vector.shape_cast %409 : vector<1xf32> to vector<1x1x1xf32>
    %411 = vector.extract %410[0, 0, 0] : f32 from vector<1x1x1xf32>
    %412 = vector.broadcast %411 : f32 to vector<1x1xf32>
    %413 = tpu.reciprocal %412 {approx = true} : vector<1x1xf32> -> vector<1x1xf32>
    %cst_156 = arith.constant 1.000000e+00 : f32
    %414 = vector.broadcast %cst_156 : f32 to vector<8x8xf32>
    %415 = arith.subf %414, %347 : vector<8x8xf32>
    %416 = arith.mulf %342, %415 : vector<8x8xf32>
    %cst_157 = arith.constant dense<0.000000e+00> : vector<8xf32>
    %417 = vector.multi_reduction <add>, %416, %cst_157 [1] : vector<8x8xf32> to vector<8xf32>
    %418 = vector.shape_cast %417 : vector<8xf32> to vector<8x1xf32>
    %cst_158 = arith.constant dense<0.000000e+00> : vector<8xf32>
    %419 = vector.multi_reduction <add>, %416, %cst_158 [0] : vector<8x8xf32> to vector<8xf32>
    %420 = vector.shape_cast %419 : vector<8xf32> to vector<1x8xf32>
    %421 = math.sqrt %418 : vector<8x1xf32>
    %cst_159 = arith.constant 1.000000e-15 : f32
    %422 = vector.broadcast %cst_159 : f32 to vector<8x1xf32>
    %423 = arith.addf %421, %422 : vector<8x1xf32>
    %424 = tpu.reciprocal %423 {approx = true} : vector<8x1xf32> -> vector<8x1xf32>
    %425 = vector.broadcast %424 : vector<8x1xf32> to vector<8x8xf32>
    %426 = arith.mulf %416, %425 : vector<8x8xf32>
    %427 = math.sqrt %420 : vector<1x8xf32>
    %cst_160 = arith.constant 1.000000e-15 : f32
    %428 = vector.broadcast %cst_160 : f32 to vector<1x8xf32>
    %429 = arith.addf %427, %428 : vector<1x8xf32>
    %430 = tpu.reciprocal %429 {approx = true} : vector<1x8xf32> -> vector<1x8xf32>
    %431 = vector.broadcast %430 : vector<1x8xf32> to vector<8x8xf32>
    %432 = arith.mulf %426, %431 : vector<8x8xf32>
    %433 = arith.addf %156, %376 : vector<1x1xf32>
    %434 = arith.addf %158, %398 : vector<1x1xf32>
    %435 = arith.addf %160, %407 : vector<1x1xf32>
    %436 = arith.addf %162, %413 : vector<1x1xf32>
    %cst_161 = arith.constant dense<0.000000e+00> : vector<8x32xf32>
    %437 = tpu.matmul %432, %340, %cst_161 {dimension_numbers = #tpu.dot_dimension_numbers<[1], [0], [0], [1], [0, 0, 1, 1], [], []>} : vector<8x8xf32>, vector<8x32xf32>, vector<8x32xf32> -> vector<8x32xf32>
    %438 = tpu.concatenate %437, %340 in 1 : vector<8x32xf32>, vector<8x32xf32> -> vector<8x64xf32>
    %cst_162 = arith.constant dense<0.000000e+00> : vector<8x32xf32>
    %439 = tpu.matmul %438, %18, %cst_162 {dimension_numbers = #tpu.dot_dimension_numbers<[1], [0], [0], [1], [0, 0, 1, 1], [], []>} : vector<8x64xf32>, vector<64x32xf32>, vector<8x32xf32> -> vector<8x32xf32>
    %440 = vector.broadcast %19 : vector<1x32xf32> to vector<8x32xf32>
    %441 = arith.addf %439, %440 : vector<8x32xf32>
    %cst_163 = arith.constant 0.000000e+00 : f32
    %442 = vector.broadcast %cst_163 : f32 to vector<8x32xf32>
    %443 = arith.maximumf %441, %442 : vector<8x32xf32>
    %cst_164 = arith.constant dense<0.000000e+00> : vector<8x32xf32>
    %444 = tpu.matmul %443, %14, %cst_164 {dimension_numbers = #tpu.dot_dimension_numbers<[1], [0], [0], [1], [0, 0, 1, 1], [], []>} : vector<8x32xf32>, vector<32x32xf32>, vector<8x32xf32> -> vector<8x32xf32>
    %445 = vector.broadcast %15 : vector<1x32xf32> to vector<8x32xf32>
    %446 = arith.addf %444, %445 : vector<8x32xf32>
    %cst_165 = arith.constant dense<0.000000e+00> : vector<8x4xf32>
    %447 = tpu.matmul %446, %16, %cst_165 {dimension_numbers = #tpu.dot_dimension_numbers<[1], [0], [0], [1], [0, 0, 1, 1], [], []>} : vector<8x32xf32>, vector<32x4xf32>, vector<8x4xf32> -> vector<8x4xf32>
    %448 = vector.broadcast %17 : vector<1x4xf32> to vector<8x4xf32>
    %449 = arith.addf %447, %448 : vector<8x4xf32>
    %cst_166 = arith.constant dense<0xFF800000> : vector<8xf32>
    %450 = vector.multi_reduction <maximumf>, %449, %cst_166 [1] : vector<8x4xf32> to vector<8xf32>
    %451 = vector.shape_cast %450 : vector<8xf32> to vector<8x1xf32>
    %452 = vector.broadcast %451 : vector<8x1xf32> to vector<8x4xf32>
    %453 = arith.subf %449, %452 : vector<8x4xf32>
    %454 = math.exp %453 : vector<8x4xf32>
    %cst_167 = arith.constant dense<0.000000e+00> : vector<8xf32>
    %455 = vector.multi_reduction <add>, %454, %cst_167 [1] : vector<8x4xf32> to vector<8xf32>
    %456 = vector.shape_cast %455 : vector<8xf32> to vector<8x1xf32>
    %457 = tpu.reciprocal %456 {approx = true} : vector<8x1xf32> -> vector<8x1xf32>
    %458 = vector.broadcast %457 : vector<8x1xf32> to vector<8x4xf32>
    %459 = arith.mulf %454, %458 : vector<8x4xf32>
    %460 = tpu.transpose %459, [1, 0] : vector<8x4xf32> -> vector<4x8xf32>
    %cst_168 = arith.constant dense<0.000000e+00> : vector<4x32xf32>
    %461 = tpu.matmul %460, %443, %cst_168 {dimension_numbers = #tpu.dot_dimension_numbers<[1], [0], [0], [1], [0, 0, 1, 1], [], []>} : vector<4x8xf32>, vector<8x32xf32>, vector<4x32xf32> -> vector<4x32xf32>
    %cst_169 = arith.constant 0.000000e+00 : f32
    %462 = vector.broadcast %cst_169 : f32 to vector<4x32xf32>
    %463 = arith.cmpf ogt, %461, %462 : vector<4x32xf32>
    %cst_170 = arith.constant 0.000000e+00 : f32
    %464 = vector.broadcast %cst_170 : f32 to vector<4x32xf32>
    %465 = arith.minimumf %461, %464 : vector<4x32xf32>
    %466 = math.exp %465 : vector<4x32xf32>
    %cst_171 = arith.constant 1.000000e+00 : f32
    %467 = vector.broadcast %cst_171 : f32 to vector<4x32xf32>
    %468 = arith.subf %466, %467 : vector<4x32xf32>
    %cst_172 = arith.constant 1.67326319 : f32
    %469 = vector.broadcast %cst_172 : f32 to vector<4x32xf32>
    %470 = arith.mulf %469, %468 : vector<4x32xf32>
    %471 = arith.select %463, %461, %470 : vector<4x32xi1>, vector<4x32xf32>
    %cst_173 = arith.constant 1.05070102 : f32
    %472 = vector.broadcast %cst_173 : f32 to vector<4x32xf32>
    %473 = arith.mulf %472, %471 : vector<4x32xf32>
    %cst_174 = arith.constant dense<0.000000e+00> : vector<4x8xf32>
    %474 = tpu.matmul %460, %432, %cst_174 {dimension_numbers = #tpu.dot_dimension_numbers<[1], [0], [0], [1], [0, 0, 1, 1], [], []>} : vector<4x8xf32>, vector<8x8xf32>, vector<4x8xf32> -> vector<4x8xf32>
    %cst_175 = arith.constant dense<0.000000e+00> : vector<4x4xf32>
    %475 = tpu.matmul %474, %459, %cst_175 {dimension_numbers = #tpu.dot_dimension_numbers<[1], [0], [0], [1], [0, 0, 1, 1], [], []>} : vector<4x8xf32>, vector<8x4xf32>, vector<4x4xf32> -> vector<4x4xf32>
    %476 = tpu.iota {dimensions = array<i32: 0>} : vector<4x4xi32>
    %477 = tpu.iota {dimensions = array<i32: 1>} : vector<4x4xi32>
    %478 = arith.cmpi eq, %476, %477 : vector<4x4xi32>
    %479 = arith.extui %478 : vector<4x4xi1> to vector<4x4xi32>
    %480 = arith.sitofp %479 : vector<4x4xi32> to vector<4x4xf32>
    %cst_176 = arith.constant dense<0.000000e+00> : vector<8xf32>
    %481 = vector.multi_reduction <add>, %432, %cst_176 [1] : vector<8x8xf32> to vector<8xf32>
    %482 = vector.shape_cast %481 : vector<8xf32> to vector<8x1xf32>
    %483 = vector.shape_cast %482 : vector<8x1xf32> to vector<1x8x1xf32>
    %cst_177 = arith.constant dense<0.000000e+00> : vector<1xf32>
    %484 = vector.multi_reduction <add>, %483, %cst_177 [1, 2] : vector<1x8x1xf32> to vector<1xf32>
    %485 = vector.shape_cast %484 : vector<1xf32> to vector<1x1x1xf32>
    %486 = vector.extract %485[0, 0, 0] : f32 from vector<1x1x1xf32>
    %487 = vector.broadcast %486 : f32 to vector<1x1xf32>
    %cst_178 = arith.constant 1.000000e-15 : f32
    %488 = vector.broadcast %cst_178 : f32 to vector<1x1xf32>
    %489 = arith.maximumf %487, %488 : vector<1x1xf32>
    %490 = tpu.reciprocal %489 {approx = true} : vector<1x1xf32> -> vector<1x1xf32>
    %cst_179 = arith.constant dense<0.000000e+00> : vector<4x1xf32>
    %491 = tpu.matmul %460, %482, %cst_179 {dimension_numbers = #tpu.dot_dimension_numbers<[1], [0], [0], [1], [0, 0, 1, 1], [], []>} : vector<4x8xf32>, vector<8x1xf32>, vector<4x1xf32> -> vector<4x1xf32>
    %492 = arith.mulf %475, %480 : vector<4x4xf32>
    %493 = vector.shape_cast %492 : vector<4x4xf32> to vector<1x4x4xf32>
    %cst_180 = arith.constant dense<0.000000e+00> : vector<1xf32>
    %494 = vector.multi_reduction <add>, %493, %cst_180 [1, 2] : vector<1x4x4xf32> to vector<1xf32>
    %495 = vector.shape_cast %494 : vector<1xf32> to vector<1x1x1xf32>
    %496 = vector.extract %495[0, 0, 0] : f32 from vector<1x1x1xf32>
    %497 = vector.broadcast %496 : f32 to vector<1x1xf32>
    %498 = arith.mulf %491, %491 : vector<4x1xf32>
    %499 = vector.shape_cast %498 : vector<4x1xf32> to vector<1x4x1xf32>
    %cst_181 = arith.constant dense<0.000000e+00> : vector<1xf32>
    %500 = vector.multi_reduction <add>, %499, %cst_181 [1, 2] : vector<1x4x1xf32> to vector<1xf32>
    %501 = vector.shape_cast %500 : vector<1xf32> to vector<1x1x1xf32>
    %502 = vector.extract %501[0, 0, 0] : f32 from vector<1x1x1xf32>
    %503 = vector.broadcast %502 : f32 to vector<1x1xf32>
    %504 = arith.mulf %503, %490 : vector<1x1xf32>
    %505 = arith.subf %497, %504 : vector<1x1xf32>
    %cst_182 = arith.constant 0.000000e+00 : f32
    %506 = vector.broadcast %cst_182 : f32 to vector<1x1xf32>
    %507 = arith.subf %506, %505 : vector<1x1xf32>
    %508 = arith.mulf %507, %490 : vector<1x1xf32>
    %cst_183 = arith.constant dense<0.000000e+00> : vector<4x4xf32>
    %509 = tpu.matmul %460, %459, %cst_183 {dimension_numbers = #tpu.dot_dimension_numbers<[1], [0], [0], [1], [0, 0, 1, 1], [], []>} : vector<4x8xf32>, vector<8x4xf32>, vector<4x4xf32> -> vector<4x4xf32>
    %510 = arith.mulf %509, %509 : vector<4x4xf32>
    %511 = vector.shape_cast %510 : vector<4x4xf32> to vector<1x4x4xf32>
    %cst_184 = arith.constant dense<0.000000e+00> : vector<1xf32>
    %512 = vector.multi_reduction <add>, %511, %cst_184 [1, 2] : vector<1x4x4xf32> to vector<1xf32>
    %513 = vector.shape_cast %512 : vector<1xf32> to vector<1x1x1xf32>
    %514 = vector.extract %513[0, 0, 0] : f32 from vector<1x1x1xf32>
    %515 = vector.broadcast %514 : f32 to vector<1x1xf32>
    %cst_185 = arith.constant 1.000000e-15 : f32
    %516 = vector.broadcast %cst_185 : f32 to vector<1x1xf32>
    %517 = arith.maximumf %515, %516 : vector<1x1xf32>
    %518 = math.rsqrt %517 : vector<1x1xf32>
    %519 = vector.broadcast %518 : vector<1x1xf32> to vector<4x4xf32>
    %520 = arith.mulf %509, %519 : vector<4x4xf32>
    %cst_186 = arith.constant 5.000000e-01 : f32
    %521 = vector.broadcast %cst_186 : f32 to vector<4x4xf32>
    %522 = arith.mulf %480, %521 : vector<4x4xf32>
    %523 = arith.subf %520, %522 : vector<4x4xf32>
    %524 = arith.mulf %523, %523 : vector<4x4xf32>
    %525 = vector.shape_cast %524 : vector<4x4xf32> to vector<1x4x4xf32>
    %cst_187 = arith.constant dense<0.000000e+00> : vector<1xf32>
    %526 = vector.multi_reduction <add>, %525, %cst_187 [1, 2] : vector<1x4x4xf32> to vector<1xf32>
    %527 = vector.shape_cast %526 : vector<1xf32> to vector<1x1x1xf32>
    %528 = vector.extract %527[0, 0, 0] : f32 from vector<1x1x1xf32>
    %529 = vector.broadcast %528 : f32 to vector<1x1xf32>
    %530 = math.sqrt %529 : vector<1x1xf32>
    %cst_188 = arith.constant dense<0.000000e+00> : vector<4xf32>
    %531 = vector.multi_reduction <add>, %459, %cst_188 [0] : vector<8x4xf32> to vector<4xf32>
    %532 = vector.shape_cast %531 : vector<4xf32> to vector<1x4xf32>
    %533 = arith.mulf %532, %532 : vector<1x4xf32>
    %534 = vector.shape_cast %533 : vector<1x4xf32> to vector<1x1x4xf32>
    %cst_189 = arith.constant dense<0.000000e+00> : vector<1xf32>
    %535 = vector.multi_reduction <add>, %534, %cst_189 [1, 2] : vector<1x1x4xf32> to vector<1xf32>
    %536 = vector.shape_cast %535 : vector<1xf32> to vector<1x1x1xf32>
    %537 = vector.extract %536[0, 0, 0] : f32 from vector<1x1x1xf32>
    %538 = vector.broadcast %537 : f32 to vector<1x1xf32>
    %539 = math.sqrt %538 : vector<1x1xf32>
    %cst_190 = arith.constant 1.000000e+00 : f32
    %540 = vector.broadcast %cst_190 : f32 to vector<4x4xf32>
    %541 = arith.subf %540, %480 : vector<4x4xf32>
    %542 = arith.mulf %475, %541 : vector<4x4xf32>
    %cst_191 = arith.constant dense<0.000000e+00> : vector<4xf32>
    %543 = vector.multi_reduction <add>, %542, %cst_191 [1] : vector<4x4xf32> to vector<4xf32>
    %544 = vector.shape_cast %543 : vector<4xf32> to vector<4x1xf32>
    %cst_192 = arith.constant dense<0.000000e+00> : vector<4xf32>
    %545 = vector.multi_reduction <add>, %542, %cst_192 [0] : vector<4x4xf32> to vector<4xf32>
    %546 = vector.shape_cast %545 : vector<4xf32> to vector<1x4xf32>
    %547 = math.sqrt %544 : vector<4x1xf32>
    %cst_193 = arith.constant 1.000000e-15 : f32
    %548 = vector.broadcast %cst_193 : f32 to vector<4x1xf32>
    %549 = arith.addf %547, %548 : vector<4x1xf32>
    %550 = tpu.reciprocal %549 {approx = true} : vector<4x1xf32> -> vector<4x1xf32>
    %551 = vector.broadcast %550 : vector<4x1xf32> to vector<4x4xf32>
    %552 = arith.mulf %542, %551 : vector<4x4xf32>
    %553 = math.sqrt %546 : vector<1x4xf32>
    %cst_194 = arith.constant 1.000000e-15 : f32
    %554 = vector.broadcast %cst_194 : f32 to vector<1x4xf32>
    %555 = arith.addf %553, %554 : vector<1x4xf32>
    %556 = tpu.reciprocal %555 {approx = true} : vector<1x4xf32> -> vector<1x4xf32>
    %557 = vector.broadcast %556 : vector<1x4xf32> to vector<4x4xf32>
    %558 = arith.mulf %552, %557 : vector<4x4xf32>
    %559 = arith.addf %286, %508 : vector<1x1xf32>
    %560 = arith.addf %288, %530 : vector<1x1xf32>
    %561 = arith.addf %290, %539 : vector<1x1xf32>
    %cst_195 = arith.constant dense<0.000000e+00> : vector<4x32xf32>
    %562 = tpu.matmul %558, %473, %cst_195 {dimension_numbers = #tpu.dot_dimension_numbers<[1], [0], [0], [1], [0, 0, 1, 1], [], []>} : vector<4x4xf32>, vector<4x32xf32>, vector<4x32xf32> -> vector<4x32xf32>
    %563 = tpu.concatenate %562, %473 in 1 : vector<4x32xf32>, vector<4x32xf32> -> vector<4x64xf32>
    %cst_196 = arith.constant dense<0.000000e+00> : vector<4x32xf32>
    %564 = tpu.matmul %563, %20, %cst_196 {dimension_numbers = #tpu.dot_dimension_numbers<[1], [0], [0], [1], [0, 0, 1, 1], [], []>} : vector<4x64xf32>, vector<64x32xf32>, vector<4x32xf32> -> vector<4x32xf32>
    %565 = vector.broadcast %21 : vector<1x32xf32> to vector<4x32xf32>
    %566 = arith.addf %564, %565 : vector<4x32xf32>
    %cst_197 = arith.constant dense<0.000000e+00> : vector<32xf32>
    %567 = vector.multi_reduction <add>, %566, %cst_197 [0] : vector<4x32xf32> to vector<32xf32>
    %568 = vector.shape_cast %567 : vector<32xf32> to vector<1x32xf32>
    %cst_198 = arith.constant 2.500000e-01 : f32
    %569 = vector.broadcast %cst_198 : f32 to vector<1x32xf32>
    %570 = arith.mulf %568, %569 : vector<1x32xf32>
    %571 = tpu.concatenate %299, %570 in 0 : vector<1x32xf32>, vector<1x32xf32> -> vector<2x32xf32>
    %c0_199 = arith.constant 0 : index
    %c0_200 = arith.constant 0 : index
    %572 = vector.load %arg19[%c0_199, %c0_200] : memref<32x32xf32, #tpu.memory_space<vmem>>, vector<32x32xf32>
    %cst_201 = arith.constant dense<0.000000e+00> : vector<2x32xf32>
    %573 = tpu.matmul %571, %572, %cst_201 {dimension_numbers = #tpu.dot_dimension_numbers<[1], [0], [0], [1], [0, 0, 1, 1], [], []>} : vector<2x32xf32>, vector<32x32xf32>, vector<2x32xf32> -> vector<2x32xf32>
    %c0_202 = arith.constant 0 : index
    %c0_203 = arith.constant 0 : index
    %574 = vector.load %arg20[%c0_202, %c0_203] : memref<1x32xf32, #tpu.memory_space<vmem>>, vector<1x32xf32>
    %575 = vector.broadcast %574 : vector<1x32xf32> to vector<2x32xf32>
    %576 = arith.addf %573, %575 : vector<2x32xf32>
    %cst_204 = arith.constant 0.000000e+00 : f32
    %577 = vector.broadcast %cst_204 : f32 to vector<2x32xf32>
    %578 = arith.maximumf %576, %577 : vector<2x32xf32>
    %c0_205 = arith.constant 0 : index
    %c0_206 = arith.constant 0 : index
    %579 = vector.load %arg21[%c0_205, %c0_206] : memref<32x6xf32, #tpu.memory_space<vmem>>, vector<32x6xf32>
    %cst_207 = arith.constant dense<0.000000e+00> : vector<2x6xf32>
    %580 = tpu.matmul %578, %579, %cst_207 {dimension_numbers = #tpu.dot_dimension_numbers<[1], [0], [0], [1], [0, 0, 1, 1], [], []>} : vector<2x32xf32>, vector<32x6xf32>, vector<2x6xf32> -> vector<2x6xf32>
    %c0_208 = arith.constant 0 : index
    %c0_209 = arith.constant 0 : index
    %581 = vector.load %arg22[%c0_208, %c0_209] : memref<1x6xf32, #tpu.memory_space<vmem>>, vector<1x6xf32>
    %582 = vector.broadcast %581 : vector<1x6xf32> to vector<2x6xf32>
    %583 = arith.addf %580, %582 : vector<2x6xf32>
    %cst_210 = arith.constant dense<0xFF800000> : vector<2xf32>
    %584 = vector.multi_reduction <maximumf>, %583, %cst_210 [1] : vector<2x6xf32> to vector<2xf32>
    %585 = vector.shape_cast %584 : vector<2xf32> to vector<2x1xf32>
    %586 = vector.broadcast %585 : vector<2x1xf32> to vector<2x6xf32>
    %587 = arith.subf %583, %586 : vector<2x6xf32>
    %588 = math.exp %587 : vector<2x6xf32>
    %cst_211 = arith.constant dense<0.000000e+00> : vector<2xf32>
    %589 = vector.multi_reduction <add>, %588, %cst_211 [1] : vector<2x6xf32> to vector<2xf32>
    %590 = vector.shape_cast %589 : vector<2xf32> to vector<2x1xf32>
    %591 = math.log %590 : vector<2x1xf32>
    %592 = vector.broadcast %591 : vector<2x1xf32> to vector<2x6xf32>
    %593 = arith.subf %587, %592 : vector<2x6xf32>
    %c0_212 = arith.constant 0 : index
    %c0_213 = arith.constant 0 : index
    %594 = vector.load %arg23[%c0_212, %c0_213] : memref<2x6xf32, #tpu.memory_space<vmem>>, vector<2x6xf32>
    tpu.vector_store %arg23[%c0_212, %c0_213], %593 {strides = array<i32>} : memref<2x6xf32, #tpu.memory_space<vmem>>, vector<2x6xf32>,
    %595 = arith.addf %433, %559 : vector<1x1xf32>
    %cst_214 = arith.constant 5.000000e-01 : f32
    %596 = vector.broadcast %cst_214 : f32 to vector<1x1xf32>
    %597 = arith.mulf %595, %596 : vector<1x1xf32>
    %598 = arith.addf %434, %560 : vector<1x1xf32>
    %cst_215 = arith.constant 5.000000e-01 : f32
    %599 = vector.broadcast %cst_215 : f32 to vector<1x1xf32>
    %600 = arith.mulf %598, %599 : vector<1x1xf32>
    %601 = arith.mulf %435, %436 : vector<1x1xf32>
    %cst_216 = arith.constant 2.82842708 : f32
    %602 = vector.broadcast %cst_216 : f32 to vector<1x1xf32>
    %603 = arith.mulf %601, %602 : vector<1x1xf32>
    %cst_217 = arith.constant 2.500000e-01 : f32
    %604 = vector.broadcast %cst_217 : f32 to vector<1x1xf32>
    %605 = arith.mulf %561, %604 : vector<1x1xf32>
    %cst_218 = arith.constant 2.000000e+00 : f32
    %606 = vector.broadcast %cst_218 : f32 to vector<1x1xf32>
    %607 = arith.mulf %605, %606 : vector<1x1xf32>
    %608 = arith.addf %603, %607 : vector<1x1xf32>
    %cst_219 = arith.constant 2.500000e-01 : f32
    %609 = vector.broadcast %cst_219 : f32 to vector<1x1xf32>
    %610 = arith.mulf %608, %609 : vector<1x1xf32>
    %cst_220 = arith.constant 2.000000e+00 : f32
    %611 = vector.broadcast %cst_220 : f32 to vector<1x1xf32>
    %612 = arith.subf %610, %611 : vector<1x1xf32>
    %613 = arith.addf %597, %600 : vector<1x1xf32>
    %614 = arith.addf %613, %612 : vector<1x1xf32>
    %615 = vector.extract %614[0, 0] : f32 from vector<1x1xf32>
    %c0_221 = arith.constant 0 : index
    %616 = memref.load %arg24[%c0_221] : memref<1xf32, #tpu.memory_space<smem>>
    memref.store %615, %arg24[%c0_221] : memref<1xf32, #tpu.memory_space<smem>>
    return
  }
}

</mosaic_0001>

<llo_original>
// kernel: net_forward.1
$region0: #{net_forward.1}
  #allocation0 [shape = 'u32[]', space=smem, size = 0x4, offset = 0x4, fixed_abs, tag = 'smem constant byte address 0x4 - core index']
  #allocation1 [shape = 'u32[144,128]{1,0:T(1,128)}', space=vmem, size = 0x12000, scoped, tag = 'internal scratch']
  %s0 = inlined_call_operand.vmem [shape: f32[22,22], index: 0, kind: input, shape index: {}]
  %s1 = inlined_call_operand.vmem [shape: f32[22,4], index: 1, kind: input, shape index: {}]
  %s2 = inlined_call_operand.vmem [shape: f32[2,12,22], index: 2, kind: input, shape index: {}]
  %s3 = inlined_call_operand.vmem [shape: f32[2,12,12], index: 3, kind: input, shape index: {}]
  %s4 = inlined_call_operand.vmem [shape: f32[2,12,1], index: 4, kind: input, shape index: {}]
  %s5 = inlined_call_operand.vmem [shape: f32[4,32], index: 5, kind: input, shape index: {}]
  %s6 = inlined_call_operand.vmem [shape: f32[1,32], index: 6, kind: input, shape index: {}]
  %s7 = inlined_call_operand.vmem [shape: f32[32,32], index: 7, kind: input, shape index: {}]
  %s8 = inlined_call_operand.vmem [shape: f32[1,32], index: 8, kind: input, shape index: {}]
  %s9 = inlined_call_operand.vmem [shape: f32[32,8], index: 9, kind: input, shape index: {}]
  %s10 = inlined_call_operand.vmem [shape: f32[1,8], index: 10, kind: input, shape index: {}]
  %s11 = inlined_call_operand.vmem [shape: f32[64,32], index: 11, kind: input, shape index: {}]
  %s12 = inlined_call_operand.vmem [shape: f32[1,32], index: 12, kind: input, shape index: {}]
  %s13 = inlined_call_operand.vmem [shape: f32[32,32], index: 13, kind: input, shape index: {}]
  %s14 = inlined_call_operand.vmem [shape: f32[1,32], index: 14, kind: input, shape index: {}]
  %s15 = inlined_call_operand.vmem [shape: f32[32,4], index: 15, kind: input, shape index: {}]
  %s16 = inlined_call_operand.vmem [shape: f32[1,4], index: 16, kind: input, shape index: {}]
  %s17 = inlined_call_operand.vmem [shape: f32[64,32], index: 17, kind: input, shape index: {}]
  %s18 = inlined_call_operand.vmem [shape: f32[1,32], index: 18, kind: input, shape index: {}]
  %s19 = inlined_call_operand.vmem [shape: f32[32,32], index: 19, kind: input, shape index: {}]
  %s20 = inlined_call_operand.vmem [shape: f32[1,32], index: 20, kind: input, shape index: {}]
  %s21 = inlined_call_operand.vmem [shape: f32[32,6], index: 21, kind: input, shape index: {}]
  %s22 = inlined_call_operand.vmem [shape: f32[1,6], index: 22, kind: input, shape index: {}]
  %s23 = inlined_call_operand.hbm [shape: f32[2,6], index: 23, kind: output, shape index: {0}]
  %s24 = inlined_call_operand.hbm [shape: f32[1], index: 24, kind: output, shape index: {1}]
  %25 = xla_tuple %s23, %s24
  %s26 = sld [smem:[#allocation0]]
  $region110: #{net_forward.1} parent=0
    _
  %s28 = ssub.s32 1, %s26
  %s29 = scalar_select 0, %s28, %s26
  $region1: #{net_forward.1} parent=0
    #allocation2 [shape = 'u8[1024]{0}', space=vmem, size = 0x400, scoped, tag = 'output window, operand 0, single buffered']
    #allocation3 [shape = 's32[1]{0}', space=sflag, size = 0x4, scoped, tag = 'scoped memory for net_forward.1']
    #allocation4 [shape = 's32[1]{0}', space=sflag, size = 0x4, scoped, tag = 'scoped memory for net_forward.1']
    #allocation5 [shape = 'u8[512]{0}', space=smem, size = 0x200, scoped, tag = 'output window, operand 1, single buffered']
    %30 = vsyncpa [#allocation3], 0
    %31 = vsyncpa [#allocation4], 0
    // Predicated region
    $region2: #{net_forward.1} parent=1 // pred_check
      _
    $region3: #{net_forward.1} parent=1 // pred_check_branch
      %33 = sbr.rel (0) target = $region5
    $region4: #{net_forward.1} parent=1 // pred_region
      _
    $region5: #{net_forward.1} parent=1 // pred_fallthru
      _
    // Predicated region
    $region6: #{net_forward.1} parent=1 // pred_check
      _
    $region7: #{net_forward.1} parent=1 // pred_check_branch
      %35 = sbr.rel (0) target = $region9
    $region8: #{net_forward.1} parent=1 // pred_region
      _
    $region9: #{net_forward.1} parent=1 // pred_fallthru
      _
    // Predicated region
    $region10: #{net_forward.1} parent=1 // pred_check
      _
    $region11: #{net_forward.1} parent=1 // pred_check_branch
      %37 = sbr.rel (0) target = $region13
    $region12: #{net_forward.1} parent=1 // pred_region
      _
    $region13: #{net_forward.1} parent=1 // pred_fallthru
      _
    // Predicated region
    $region14: #{net_forward.1} parent=1 // pred_check
      _
    $region15: #{net_forward.1} parent=1 // pred_check_branch
      %39 = sbr.rel (0) target = $region17
    $region16: #{net_forward.1} parent=1 // pred_region
      _
    $region17: #{net_forward.1} parent=1 // pred_fallthru
      _
    // Predicated region
    $region18: #{net_forward.1} parent=1 // pred_check
      _
    $region19: #{net_forward.1} parent=1 // pred_check_branch
      %41 = sbr.rel (0) target = $region21
    $region20: #{net_forward.1} parent=1 // pred_region
      _
    $region21: #{net_forward.1} parent=1 // pred_fallthru
      _
    // Predicated region
    $region22: #{net_forward.1} parent=1 // pred_check
      _
    $region23: #{net_forward.1} parent=1 // pred_check_branch
      %43 = sbr.rel (0) target = $region25
    $region24: #{net_forward.1} parent=1 // pred_region
      _
    $region25: #{net_forward.1} parent=1 // pred_fallthru
      _
    // Predicated region
    $region26: #{net_forward.1} parent=1 // pred_check
      _
    $region27: #{net_forward.1} parent=1 // pred_check_branch
      %45 = sbr.rel (0) target = $region29
    $region28: #{net_forward.1} parent=1 // pred_region
      _
    $region29: #{net_forward.1} parent=1 // pred_fallthru
      _
    // Predicated region
    $region30: #{net_forward.1} parent=1 // pred_check
      _
    $region31: #{net_forward.1} parent=1 // pred_check_branch
      %47 = sbr.rel (0) target = $region33
    $region32: #{net_forward.1} parent=1 // pred_region
      _
    $region33: #{net_forward.1} parent=1 // pred_fallthru
      _
    // Predicated region
    $region34: #{net_forward.1} parent=1 // pred_check
      _
    $region35: #{net_forward.1} parent=1 // pred_check_branch
      %49 = sbr.rel (0) target = $region37
    $region36: #{net_forward.1} parent=1 // pred_region
      _
    $region37: #{net_forward.1} parent=1 // pred_fallthru
      _
    // Predicated region
    $region38: #{net_forward.1} parent=1 // pred_check
      _
    $region39: #{net_forward.1} parent=1 // pred_check_branch
      %51 = sbr.rel (0) target = $region41
    $region40: #{net_forward.1} parent=1 // pred_region
      _
    $region41: #{net_forward.1} parent=1 // pred_fallthru
      _
    // Predicated region
    $region42: #{net_forward.1} parent=1 // pred_check
      _
    $region43: #{net_forward.1} parent=1 // pred_check_branch
      %53 = sbr.rel (0) target = $region45
    $region44: #{net_forward.1} parent=1 // pred_region
      _
    $region45: #{net_forward.1} parent=1 // pred_fallthru
      _
    // Predicated region
    $region46: #{net_forward.1} parent=1 // pred_check
      _
    $region47: #{net_forward.1} parent=1 // pred_check_branch
      %55 = sbr.rel (0) target = $region49
    $region48: #{net_forward.1} parent=1 // pred_region
      _
    $region49: #{net_forward.1} parent=1 // pred_fallthru
      _
    // Predicated region
    $region50: #{net_forward.1} parent=1 // pred_check
      _
    $region51: #{net_forward.1} parent=1 // pred_check_branch
      %57 = sbr.rel (0) target = $region53
    $region52: #{net_forward.1} parent=1 // pred_region
      _
    $region53: #{net_forward.1} parent=1 // pred_fallthru
      _
    // Predicated region
    $region54: #{net_forward.1} parent=1 // pred_check
      _
    $region55: #{net_forward.1} parent=1 // pred_check_branch
      %59 = sbr.rel (0) target = $region57
    $region56: #{net_forward.1} parent=1 // pred_region
      _
    $region57: #{net_forward.1} parent=1 // pred_fallthru
      _
    // Predicated region
    $region58: #{net_forward.1} parent=1 // pred_check
      _
    $region59: #{net_forward.1} parent=1 // pred_check_branch
      %61 = sbr.rel (0) target = $region61
    $region60: #{net_forward.1} parent=1 // pred_region
      _
    $region61: #{net_forward.1} parent=1 // pred_fallthru
      _
    // Predicated region
    $region62: #{net_forward.1} parent=1 // pred_check
      _
    $region63: #{net_forward.1} parent=1 // pred_check_branch
      %63 = sbr.rel (0) target = $region65
    $region64: #{net_forward.1} parent=1 // pred_region
      _
    $region65: #{net_forward.1} parent=1 // pred_fallthru
      _
    // Predicated region
    $region66: #{net_forward.1} parent=1 // pred_check
      _
    $region67: #{net_forward.1} parent=1 // pred_check_branch
      %65 = sbr.rel (0) target = $region69
    $region68: #{net_forward.1} parent=1 // pred_region
      _
    $region69: #{net_forward.1} parent=1 // pred_fallthru
      _
    // Predicated region
    $region70: #{net_forward.1} parent=1 // pred_check
      _
    $region71: #{net_forward.1} parent=1 // pred_check_branch
      %67 = sbr.rel (0) target = $region73
    $region72: #{net_forward.1} parent=1 // pred_region
      _
    $region73: #{net_forward.1} parent=1 // pred_fallthru
      _
    // Predicated region
    $region74: #{net_forward.1} parent=1 // pred_check
      _
    $region75: #{net_forward.1} parent=1 // pred_check_branch
      %69 = sbr.rel (0) target = $region77
    $region76: #{net_forward.1} parent=1 // pred_region
      _
    $region77: #{net_forward.1} parent=1 // pred_fallthru
      _
    // Predicated region
    $region78: #{net_forward.1} parent=1 // pred_check
      _
    $region79: #{net_forward.1} parent=1 // pred_check_branch
      %71 = sbr.rel (0) target = $region81
    $region80: #{net_forward.1} parent=1 // pred_region
      _
    $region81: #{net_forward.1} parent=1 // pred_fallthru
      _
    // Predicated region
    $region82: #{net_forward.1} parent=1 // pred_check
      _
    $region83: #{net_forward.1} parent=1 // pred_check_branch
      %73 = sbr.rel (0) target = $region85
    $region84: #{net_forward.1} parent=1 // pred_region
      _
    $region85: #{net_forward.1} parent=1 // pred_fallthru
      _
    // Predicated region
    $region86: #{net_forward.1} parent=1 // pred_check
      _
    $region87: #{net_forward.1} parent=1 // pred_check_branch
      %75 = sbr.rel (0) target = $region89
    $region88: #{net_forward.1} parent=1 // pred_region
      _
    $region89: #{net_forward.1} parent=1 // pred_fallthru
      _
    // Predicated region
    $region90: #{net_forward.1} parent=1 // pred_check
      _
    $region91: #{net_forward.1} parent=1 // pred_check_branch
      %77 = sbr.rel (0) target = $region93
    $region92: #{net_forward.1} parent=1 // pred_region
      _
    $region93: #{net_forward.1} parent=1 // pred_fallthru
      _
    %v78 = vld [vmem:[%s0] sm:$0xff]
    %v79 = vld [vmem:[%s0 + $0x8] sm:$0xff]
    %v80 = vld [vmem:[%s0 + $0x10] sm:$0x3f]
    %v81 = vld [vmem:[%s1] sm:$0xff]
    %v82 = vld [vmem:[%s1 + $0x8] sm:$0xff]
    %v83 = vld [vmem:[%s1 + $0x10] sm:$0x3f]
    %vm84 = vcmask 179200
    %v86 = vsel %vm84, %v78, 0
    %v89 = vsel %vm84, %v79, 0
    %v92 = vsel %vm84, %v80, 0
    %vm94 = vcmask 1045504
    %v96 = vsel %vm94, %v83, 0
    %98 = vmatprep.subr.mxu0 0.0
    %99 = vmatpush1.msra.mxu0 0.0
    %100 = vmatprep.subr.mxu0 0.0
    %101 = vmatpush1.msra.mxu0 0.0
    %102 = vmatprep.subr.mxu0 0.0
    %103 = vmatpush1.msra.mxu0 0.0
    %104 = vmatprep.subr.mxu0 0.0
    %105 = vmatpush1.msra.mxu0 0.0
    %106 = vmatprep.subr.mxu0 0.0
    %107 = vmatpush1.msra.mxu0 0.0
    %108 = vmatprep.subr.mxu0 0.0
    %109 = vmatpush1.msra.mxu0 0.0
    %110 = vmatprep.subr.mxu0 0.0
    %111 = vmatpush1.msra.mxu0 0.0
    %112 = vmatprep.subr.mxu0 0.0
    %113 = vmatpush1.msra.mxu0 0.0
    %114 = vmatprep.subr.mxu0 0.0
    %115 = vmatpush1.msra.mxu0 0.0
    %116 = vmatprep.subr.mxu0 0.0
    %117 = vmatpush1.msra.mxu0 0.0
    %118 = vmatprep.subr.mxu0 0.0
    %119 = vmatpush1.msra.mxu0 0.0
    %120 = vmatprep.subr.mxu0 0.0
    %121 = vmatpush1.msra.mxu0 0.0
    %122 = vmatprep.subr.mxu0 0.0
    %123 = vmatpush1.msra.mxu0 0.0
    %124 = vmatprep.subr.mxu0 0.0
    %125 = vmatpush1.msra.mxu0 %v96
    %126 = vmatprep.subr.mxu0 0.0
    %127 = vmatpush1.msra.mxu0 %v82
    %128 = vmatprep.subr.mxu0 0.0
    %129 = vmatpush1.msra.mxu0 %v81
    %130 = vmatprep.subr.mxu0 0.0
    %131 = vmatpush2.msra.mxu0 0.0
    %132 = vmatprep.subr.mxu0 0.0
    %133 = vmatpush2.msra.mxu0 0.0
    %134 = vmatprep.subr.mxu0 0.0
    %135 = vmatpush2.msra.mxu0 0.0
    %136 = vmatprep.subr.mxu0 0.0
    %137 = vmatpush2.msra.mxu0 0.0
    %138 = vmatprep.subr.mxu0 0.0
    %139 = vmatpush2.msra.mxu0 0.0
    %140 = vmatprep.subr.mxu0 0.0
    %141 = vmatpush2.msra.mxu0 0.0
    %142 = vmatprep.subr.mxu0 0.0
    %143 = vmatpush2.msra.mxu0 0.0
    %144 = vmatprep.subr.mxu0 0.0
    %145 = vmatpush2.msra.mxu0 0.0
    %146 = vmatprep.subr.mxu0 0.0
    %147 = vmatpush2.msra.mxu0 0.0
    %148 = vmatprep.subr.mxu0 0.0
    %149 = vmatpush2.msra.mxu0 0.0
    %150 = vmatprep.subr.mxu0 0.0
    %151 = vmatpush2.msra.mxu0 0.0
    %152 = vmatprep.subr.mxu0 0.0
    %153 = vmatpush2.msra.mxu0 0.0
    %154 = vmatprep.subr.mxu0 0.0
    %155 = vmatpush2.msra.mxu0 0.0
    %156 = vmatprep.subr.mxu0 0.0
    %157 = vmatpush2.msra.mxu0 0.0
    %158 = vmatprep.subr.mxu0 0.0
    %159 = vmatpush2.msra.mxu0 0.0
    %160 = vmatprep.subr.mxu0 0.0
    %161 = vmatpush2.msra.mxu0 0.0
    %162 = vmatprep.mubr.f32.mxu0 0.0
    %163 = vmatmul.mubr.f32.gmra.mxu0 %v86
    %v164 = vpop.f32.mrf.mxu0
    %v165 = vadd.f32 0.0, %v164
    %v166 = vpop.f32.mrf.mxu0
    %167 = vmatprep.mubr.f32.mxu0 0.0
    %168 = vmatmul.mubr.f32.gmra.mxu0 %v89
    %v169 = vpop.f32.mrf.mxu0
    %v170 = vadd.f32 0.0, %v169
    %v171 = vpop.f32.mrf.mxu0
    %172 = vmatprep.mubr.f32.mxu0 0.0
    %173 = vmatmul.mubr.f32.gmra.mxu0 %v92
    %v174 = vpop.f32.mrf.mxu0
    %v175 = vadd.f32 0.0, %v174
    %v176 = vpop.f32.mrf.mxu0
    %177 = vdwg.mxu0
    %v178 = vld [vmem:[%s5] sm:$0xf]
    %v179 = vld [vmem:[%s6] sm:$0x1]
    %v181 = vlaneseq
    %v182 = vshrl.u32 %v181, 7
    %v183 = vsub.s32 0, %v182
    %v184 = vrot.slane %v179, %v183
    %vm186 = vcmask 31744
    %v188 = vsel %vm186, %v165, 0
    %v191 = vsel %vm186, %v170, 0
    %v194 = vsel %vm186, %v175, 0
    %vm196 = vcmask 1043456
    %v198 = vsel %vm196, %v178, 0
    %200 = vmatprep.subr.mxu0 0.0
    %201 = vmatpush1.msra.mxu0 0.0
    %202 = vmatprep.subr.mxu0 0.0
    %203 = vmatpush1.msra.mxu0 0.0
    %204 = vmatprep.subr.mxu0 0.0
    %205 = vmatpush1.msra.mxu0 0.0
    %206 = vmatprep.subr.mxu0 0.0
    %207 = vmatpush1.msra.mxu0 0.0
    %208 = vmatprep.subr.mxu0 0.0
    %209 = vmatpush1.msra.mxu0 0.0
    %210 = vmatprep.subr.mxu0 0.0
    %211 = vmatpush1.msra.mxu0 0.0
    %212 = vmatprep.subr.mxu0 0.0
    %213 = vmatpush1.msra.mxu0 0.0
    %214 = vmatprep.subr.mxu0 0.0
    %215 = vmatpush1.msra.mxu0 0.0
    %216 = vmatprep.subr.mxu0 0.0
    %217 = vmatpush1.msra.mxu0 0.0
    %218 = vmatprep.subr.mxu0 0.0
    %219 = vmatpush1.msra.mxu0 0.0
    %220 = vmatprep.subr.mxu0 0.0
    %221 = vmatpush1.msra.mxu0 0.0
    %222 = vmatprep.subr.mxu0 0.0
    %223 = vmatpush1.msra.mxu0 0.0
    %224 = vmatprep.subr.mxu0 0.0
    %225 = vmatpush1.msra.mxu0 0.0
    %226 = vmatprep.subr.mxu0 0.0
    %227 = vmatpush1.msra.mxu0 0.0
    %228 = vmatprep.subr.mxu0 0.0
    %229 = vmatpush1.msra.mxu0 0.0
    %230 = vmatprep.subr.mxu0 0.0
    %231 = vmatpush1.msra.mxu0 %v198
    %232 = vmatprep.subr.mxu0 0.0
    %233 = vmatpush2.msra.mxu0 0.0
    %234 = vmatprep.subr.mxu0 0.0
    %235 = vmatpush2.msra.mxu0 0.0
    %236 = vmatprep.subr.mxu0 0.0
    %237 = vmatpush2.msra.mxu0 0.0
    %238 = vmatprep.subr.mxu0 0.0
    %239 = vmatpush2.msra.mxu0 0.0
    %240 = vmatprep.subr.mxu0 0.0
    %241 = vmatpush2.msra.mxu0 0.0
    %242 = vmatprep.subr.mxu0 0.0
    %243 = vmatpush2.msra.mxu0 0.0
    %244 = vmatprep.subr.mxu0 0.0
    %245 = vmatpush2.msra.mxu0 0.0
    %246 = vmatprep.subr.mxu0 0.0
    %247 = vmatpush2.msra.mxu0 0.0
    %248 = vmatprep.subr.mxu0 0.0
    %249 = vmatpush2.msra.mxu0 0.0
    %250 = vmatprep.subr.mxu0 0.0
    %251 = vmatpush2.msra.mxu0 0.0
    %252 = vmatprep.subr.mxu0 0.0
    %253 = vmatpush2.msra.mxu0 0.0
    %254 = vmatprep.subr.mxu0 0.0
    %255 = vmatpush2.msra.mxu0 0.0
    %256 = vmatprep.subr.mxu0 0.0
    %257 = vmatpush2.msra.mxu0 0.0
    %258 = vmatprep.subr.mxu0 0.0
    %259 = vmatpush2.msra.mxu0 0.0
    %260 = vmatprep.subr.mxu0 0.0
    %261 = vmatpush2.msra.mxu0 0.0
    %262 = vmatprep.subr.mxu0 0.0
    %263 = vmatpush2.msra.mxu0 0.0
    %264 = vmatprep.mubr.f32.mxu0 0.0
    %265 = vmatmul.mubr.f32.gmra.mxu0 %v188
    %v266 = vpop.f32.mrf.mxu0
    %v267 = vadd.f32 %v184, %v266
    %v268 = vpop.f32.mrf.mxu0
    %269 = vmatprep.mubr.f32.mxu0 0.0
    %270 = vmatmul.mubr.f32.gmra.mxu0 %v191
    %v271 = vpop.f32.mrf.mxu0
    %v272 = vadd.f32 %v184, %v271
    %v273 = vpop.f32.mrf.mxu0
    %274 = vmatprep.mubr.f32.mxu0 0.0
    %275 = vmatmul.mubr.f32.gmra.mxu0 %v194
    %v276 = vpop.f32.mrf.mxu0
    %v277 = vadd.f32 %v184, %v276
    %v278 = vpop.f32.mrf.mxu0
    %279 = vdwg.mxu0
    %v280 = vmax.f32 %v267, 0.0
    %v281 = vmax.f32 %v272, 0.0
    %v282 = vmax.f32 %v277, 0.0
    %v283 = vld [vmem:[%s7] sm:$0xff]
    %v284 = vld [vmem:[%s7 + $0x8] sm:$0xff]
    %v285 = vld [vmem:[%s7 + $0x10] sm:$0xff]
    %v286 = vld [vmem:[%s7 + $0x18] sm:$0xff]
    %v287 = vld [vmem:[%s8] sm:$0x1]
    %v288 = vld [vmem:[%s9] sm:$0xff]
    %v289 = vld [vmem:[%s9 + $0x8] sm:$0xff]
    %v290 = vld [vmem:[%s9 + $0x10] sm:$0xff]
    %v291 = vld [vmem:[%s9 + $0x18] sm:$0xff]
    %v292 = vld [vmem:[%s10] sm:$0x1]
    %v293 = vld [vmem:[%s13] sm:$0xff]
    %v294 = vld [vmem:[%s13 + $0x8] sm:$0xff]
    %v295 = vld [vmem:[%s13 + $0x10] sm:$0xff]
    %v296 = vld [vmem:[%s13 + $0x18] sm:$0xff]
    %v297 = vld [vmem:[%s14] sm:$0x1]
    %v298 = vld [vmem:[%s15] sm:$0xff]
    %v299 = vld [vmem:[%s15 + $0x8] sm:$0xff]
    %v300 = vld [vmem:[%s15 + $0x10] sm:$0xff]
    %v301 = vld [vmem:[%s15 + $0x18] sm:$0xff]
    %v302 = vld [vmem:[%s16] sm:$0x1]
    %v303 = vld [vmem:[%s11] sm:$0xff]
    %v304 = vld [vmem:[%s11 + $0x8] sm:$0xff]
    %v305 = vld [vmem:[%s11 + $0x10] sm:$0xff]
    %v306 = vld [vmem:[%s11 + $0x18] sm:$0xff]
    %v307 = vld [vmem:[%s11 + $0x20] sm:$0xff]
    %v308 = vld [vmem:[%s11 + $0x28] sm:$0xff]
    %v309 = vld [vmem:[%s11 + $0x30] sm:$0xff]
    %v310 = vld [vmem:[%s11 + $0x38] sm:$0xff]
    %v311 = vld [vmem:[%s12] sm:$0x1]
    %v312 = vld [vmem:[%s17] sm:$0xff]
    %v313 = vld [vmem:[%s17 + $0x8] sm:$0xff]
    %v314 = vld [vmem:[%s17 + $0x10] sm:$0xff]
    %v315 = vld [vmem:[%s17 + $0x18] sm:$0xff]
    %v316 = vld [vmem:[%s17 + $0x20] sm:$0xff]
    %v317 = vld [vmem:[%s17 + $0x28] sm:$0xff]
    %v318 = vld [vmem:[%s17 + $0x30] sm:$0xff]
    %v319 = vld [vmem:[%s17 + $0x38] sm:$0xff]
    %v320 = vld [vmem:[%s18] sm:$0x1]
    %v321 = vld [vmem:[%s2] sm:$0xff]
    %v322 = vld [vmem:[%s2 + $0x8] sm:$0xf]
    %v324 = vsel %vm84, %v321, 0
    %v327 = vsel %vm84, %v322, 0
    %v330 = vsel %vm94, %v282, 0
    %332 = vmatprep.subr.mxu0 0.0
    %333 = vmatpush1.msra.mxu0 0.0
    %334 = vmatprep.subr.mxu0 0.0
    %335 = vmatpush1.msra.mxu0 0.0
    %336 = vmatprep.subr.mxu0 0.0
    %337 = vmatpush1.msra.mxu0 0.0
    %338 = vmatprep.subr.mxu0 0.0
    %339 = vmatpush1.msra.mxu0 0.0
    %340 = vmatprep.subr.mxu0 0.0
    %341 = vmatpush1.msra.mxu0 0.0
    %342 = vmatprep.subr.mxu0 0.0
    %343 = vmatpush1.msra.mxu0 0.0
    %344 = vmatprep.subr.mxu0 0.0
    %345 = vmatpush1.msra.mxu0 0.0
    %346 = vmatprep.subr.mxu0 0.0
    %347 = vmatpush1.msra.mxu0 0.0
    %348 = vmatprep.subr.mxu0 0.0
    %349 = vmatpush1.msra.mxu0 0.0
    %350 = vmatprep.subr.mxu0 0.0
    %351 = vmatpush1.msra.mxu0 0.0
    %352 = vmatprep.subr.mxu0 0.0
    %353 = vmatpush1.msra.mxu0 0.0
    %354 = vmatprep.subr.mxu0 0.0
    %355 = vmatpush1.msra.mxu0 0.0
    %356 = vmatprep.subr.mxu0 0.0
    %357 = vmatpush1.msra.mxu0 0.0
    %358 = vmatprep.subr.mxu0 0.0
    %359 = vmatpush1.msra.mxu0 %v330
    %360 = vmatprep.subr.mxu0 0.0
    %361 = vmatpush1.msra.mxu0 %v281
    %362 = vmatprep.subr.mxu0 0.0
    %363 = vmatpush1.msra.mxu0 %v280
    %364 = vmatprep.subr.mxu0 0.0
    %365 = vmatpush2.msra.mxu0 0.0
    %366 = vmatprep.subr.mxu0 0.0
    %367 = vmatpush2.msra.mxu0 0.0
    %368 = vmatprep.subr.mxu0 0.0
    %369 = vmatpush2.msra.mxu0 0.0
    %370 = vmatprep.subr.mxu0 0.0
    %371 = vmatpush2.msra.mxu0 0.0
    %372 = vmatprep.subr.mxu0 0.0
    %373 = vmatpush2.msra.mxu0 0.0
    %374 = vmatprep.subr.mxu0 0.0
    %375 = vmatpush2.msra.mxu0 0.0
    %376 = vmatprep.subr.mxu0 0.0
    %377 = vmatpush2.msra.mxu0 0.0
    %378 = vmatprep.subr.mxu0 0.0
    %379 = vmatpush2.msra.mxu0 0.0
    %380 = vmatprep.subr.mxu0 0.0
    %381 = vmatpush2.msra.mxu0 0.0
    %382 = vmatprep.subr.mxu0 0.0
    %383 = vmatpush2.msra.mxu0 0.0
    %384 = vmatprep.subr.mxu0 0.0
    %385 = vmatpush2.msra.mxu0 0.0
    %386 = vmatprep.subr.mxu0 0.0
    %387 = vmatpush2.msra.mxu0 0.0
    %388 = vmatprep.subr.mxu0 0.0
    %389 = vmatpush2.msra.mxu0 0.0
    %390 = vmatprep.subr.mxu0 0.0
    %391 = vmatpush2.msra.mxu0 0.0
    %392 = vmatprep.subr.mxu0 0.0
    %393 = vmatpush2.msra.mxu0 0.0
    %394 = vmatprep.subr.mxu0 0.0
    %395 = vmatpush2.msra.mxu0 0.0
    %396 = vmatprep.mubr.f32.mxu0 0.0
    %397 = vmatmul.mubr.f32.gmra.mxu0 %v324
    %v398 = vpop.f32.mrf.mxu0
    %v399 = vadd.f32 0.0, %v398
    %v400 = vpop.f32.mrf.mxu0
    %401 = vmatprep.mubr.f32.mxu0 0.0
    %402 = vmatmul.mubr.f32.gmra.mxu0 %v327
    %v403 = vpop.f32.mrf.mxu0
    %v404 = vadd.f32 0.0, %v403
    %v405 = vpop.f32.mrf.mxu0
    %406 = vdwg.mxu0
    %v407 = vld [vmem:[%s3] sm:$0xff]
    %v408 = vld [vmem:[%s3 + $0x8] sm:$0xf]
    %v409 = vld [vmem:[%s4] sm:$0xff]
    %v410 = vld [vmem:[%s4 + $0x8] sm:$0xf]
    %v412 = vlaneseq
    %v413 = vshrl.u32 %v412, 7
    %v414 = vsub.s32 0, %v413
    %v415 = vrot.slane %v287, %v414
    %vm417 = vcmask 261120
    %v419 = vsel %vm417, %v399, 0
    %v422 = vsel %vm417, %v404, 0
    %424 = vmatprep.subr.mxu0 0.0
    %425 = vmatpush1.msra.mxu0 0.0
    %426 = vmatprep.subr.mxu0 0.0
    %427 = vmatpush1.msra.mxu0 0.0
    %428 = vmatprep.subr.mxu0 0.0
    %429 = vmatpush1.msra.mxu0 0.0
    %430 = vmatprep.subr.mxu0 0.0
    %431 = vmatpush1.msra.mxu0 0.0
    %432 = vmatprep.subr.mxu0 0.0
    %433 = vmatpush1.msra.mxu0 0.0
    %434 = vmatprep.subr.mxu0 0.0
    %435 = vmatpush1.msra.mxu0 0.0
    %436 = vmatprep.subr.mxu0 0.0
    %437 = vmatpush1.msra.mxu0 0.0
    %438 = vmatprep.subr.mxu0 0.0
    %439 = vmatpush1.msra.mxu0 0.0
    %440 = vmatprep.subr.mxu0 0.0
    %441 = vmatpush1.msra.mxu0 0.0
    %442 = vmatprep.subr.mxu0 0.0
    %443 = vmatpush1.msra.mxu0 0.0
    %444 = vmatprep.subr.mxu0 0.0
    %445 = vmatpush1.msra.mxu0 0.0
    %446 = vmatprep.subr.mxu0 0.0
    %447 = vmatpush1.msra.mxu0 0.0
    %448 = vmatprep.subr.mxu0 0.0
    %449 = vmatpush1.msra.mxu0 %v286
    %450 = vmatprep.subr.mxu0 0.0
    %451 = vmatpush1.msra.mxu0 %v285
    %452 = vmatprep.subr.mxu0 0.0
    %453 = vmatpush1.msra.mxu0 %v284
    %454 = vmatprep.subr.mxu0 0.0
    %455 = vmatpush1.msra.mxu0 %v283
    %456 = vmatprep.subr.mxu0 0.0
    %457 = vmatpush2.msra.mxu0 0.0
    %458 = vmatprep.subr.mxu0 0.0
    %459 = vmatpush2.msra.mxu0 0.0
    %460 = vmatprep.subr.mxu0 0.0
    %461 = vmatpush2.msra.mxu0 0.0
    %462 = vmatprep.subr.mxu0 0.0
    %463 = vmatpush2.msra.mxu0 0.0
    %464 = vmatprep.subr.mxu0 0.0
    %465 = vmatpush2.msra.mxu0 0.0
    %466 = vmatprep.subr.mxu0 0.0
    %467 = vmatpush2.msra.mxu0 0.0
    %468 = vmatprep.subr.mxu0 0.0
    %469 = vmatpush2.msra.mxu0 0.0
    %470 = vmatprep.subr.mxu0 0.0
    %471 = vmatpush2.msra.mxu0 0.0
    %472 = vmatprep.subr.mxu0 0.0
    %473 = vmatpush2.msra.mxu0 0.0
    %474 = vmatprep.subr.mxu0 0.0
    %475 = vmatpush2.msra.mxu0 0.0
    %476 = vmatprep.subr.mxu0 0.0
    %477 = vmatpush2.msra.mxu0 0.0
    %478 = vmatprep.subr.mxu0 0.0
    %479 = vmatpush2.msra.mxu0 0.0
    %480 = vmatprep.subr.mxu0 0.0
    %481 = vmatpush2.msra.mxu0 0.0
    %482 = vmatprep.subr.mxu0 0.0
    %483 = vmatpush2.msra.mxu0 0.0
    %484 = vmatprep.subr.mxu0 0.0
    %485 = vmatpush2.msra.mxu0 0.0
    %486 = vmatprep.subr.mxu0 0.0
    %487 = vmatpush2.msra.mxu0 0.0
    %488 = vmatprep.mubr.f32.mxu0 0.0
    %489 = vmatmul.mubr.f32.gmra.mxu0 %v419
    %v490 = vpop.f32.mrf.mxu0
    %v491 = vadd.f32 %v415, %v490
    %v492 = vpop.f32.mrf.mxu0
    %493 = vmatprep.mubr.f32.mxu0 0.0
    %494 = vmatmul.mubr.f32.gmra.mxu0 %v422
    %v495 = vpop.f32.mrf.mxu0
    %v496 = vadd.f32 %v415, %v495
    %v497 = vpop.f32.mrf.mxu0
    %498 = vdwg.mxu0
    %v500 = vlaneseq
    %v501 = vshrl.u32 %v500, 7
    %v502 = vsub.s32 0, %v501
    %v503 = vrot.slane %v292, %v502
    %v506 = vsel %vm417, %v491, 0
    %v509 = vsel %vm417, %v496, 0
    %511 = vmatprep.subr.mxu0 0.0
    %512 = vmatpush1.msra.mxu0 0.0
    %513 = vmatprep.subr.mxu0 0.0
    %514 = vmatpush1.msra.mxu0 0.0
    %515 = vmatprep.subr.mxu0 0.0
    %516 = vmatpush1.msra.mxu0 0.0
    %517 = vmatprep.subr.mxu0 0.0
    %518 = vmatpush1.msra.mxu0 0.0
    %519 = vmatprep.subr.mxu0 0.0
    %520 = vmatpush1.msra.mxu0 0.0
    %521 = vmatprep.subr.mxu0 0.0
    %522 = vmatpush1.msra.mxu0 0.0
    %523 = vmatprep.subr.mxu0 0.0
    %524 = vmatpush1.msra.mxu0 0.0
    %525 = vmatprep.subr.mxu0 0.0
    %526 = vmatpush1.msra.mxu0 0.0
    %527 = vmatprep.subr.mxu0 0.0
    %528 = vmatpush1.msra.mxu0 0.0
    %529 = vmatprep.subr.mxu0 0.0
    %530 = vmatpush1.msra.mxu0 0.0
    %531 = vmatprep.subr.mxu0 0.0
    %532 = vmatpush1.msra.mxu0 0.0
    %533 = vmatprep.subr.mxu0 0.0
    %534 = vmatpush1.msra.mxu0 0.0
    %535 = vmatprep.subr.mxu0 0.0
    %536 = vmatpush1.msra.mxu0 %v291
    %537 = vmatprep.subr.mxu0 0.0
    %538 = vmatpush1.msra.mxu0 %v290
    %539 = vmatprep.subr.mxu0 0.0
    %540 = vmatpush1.msra.mxu0 %v289
    %541 = vmatprep.subr.mxu0 0.0
    %542 = vmatpush1.msra.mxu0 %v288
    %543 = vmatprep.subr.mxu0 0.0
    %544 = vmatpush2.msra.mxu0 0.0
    %545 = vmatprep.subr.mxu0 0.0
    %546 = vmatpush2.msra.mxu0 0.0
    %547 = vmatprep.subr.mxu0 0.0
    %548 = vmatpush2.msra.mxu0 0.0
    %549 = vmatprep.subr.mxu0 0.0
    %550 = vmatpush2.msra.mxu0 0.0
    %551 = vmatprep.subr.mxu0 0.0
    %552 = vmatpush2.msra.mxu0 0.0
    %553 = vmatprep.subr.mxu0 0.0
    %554 = vmatpush2.msra.mxu0 0.0
    %555 = vmatprep.subr.mxu0 0.0
    %556 = vmatpush2.msra.mxu0 0.0
    %557 = vmatprep.subr.mxu0 0.0
    %558 = vmatpush2.msra.mxu0 0.0
    %559 = vmatprep.subr.mxu0 0.0
    %560 = vmatpush2.msra.mxu0 0.0
    %561 = vmatprep.subr.mxu0 0.0
    %562 = vmatpush2.msra.mxu0 0.0
    %563 = vmatprep.subr.mxu0 0.0
    %564 = vmatpush2.msra.mxu0 0.0
    %565 = vmatprep.subr.mxu0 0.0
    %566 = vmatpush2.msra.mxu0 0.0
    %567 = vmatprep.subr.mxu0 0.0
    %568 = vmatpush2.msra.mxu0 0.0
    %569 = vmatprep.subr.mxu0 0.0
    %570 = vmatpush2.msra.mxu0 0.0
    %571 = vmatprep.subr.mxu0 0.0
    %572 = vmatpush2.msra.mxu0 0.0
    %573 = vmatprep.subr.mxu0 0.0
    %574 = vmatpush2.msra.mxu0 0.0
    %575 = vmatprep.mubr.f32.mxu0 0.0
    %576 = vmatmul.mubr.f32.gmra.mxu0 %v506
    %v577 = vpop.f32.mrf.mxu0
    %v578 = vadd.f32 %v503, %v577
    %v579 = vpop.f32.mrf.mxu0
    %580 = vmatprep.mubr.f32.mxu0 0.0
    %581 = vmatmul.mubr.f32.gmra.mxu0 %v509
    %v582 = vpop.f32.mrf.mxu0
    %v583 = vadd.f32 %v503, %v582
    %v584 = vpop.f32.mrf.mxu0
    %585 = vdwg.mxu0
    %vm586 = vcmask 64512
    %v587 = vsel %vm586, %v578, -inf
    %588 = vmax.xlane.f32.xlu0 %v587
    %v589 = vpop.xlane.xlu0 %588
    %vm590 = vcmask 60416
    %v591 = vsel %vm590, %v583, -inf
    %592 = vmax.xlane.f32.xlu0 %v591
    %v593 = vpop.xlane.xlu0 %592
    %v594 = vsub.f32 %v578, %v589
    %v595 = vsub.f32 %v583, %v593
    %v596 = vmul.f32 %v594, 1.442695
    %v597 = vpow.pop %v596
    %v598 = vmul.f32 %v595, 1.442695
    %v599 = vpow.pop %v598
    %v600 = vsel %vm586, %v597, 0.0
    %601 = vadd.xlane.f32.xlu0 %v600
    %v602 = vpop.xlane.xlu0 %601
    %v603 = vsel %vm590, %v599, 0.0
    %604 = vadd.xlane.f32.xlu0 %v603
    %v605 = vpop.xlane.xlu0 %604
    %v606 = vrcp.pop %v602
    %v607 = vrcp.pop %v605
    %v608 = vmul.f32 %v597, %v606
    %v609 = vmul.f32 %v599, %v607
    %611 = vset.pattern.permute.xlu0 0
    %612 = vperm.xlu0 %611, %v409
    %v613 = vpop.permute.xlu0 %612
    %616 = vset.pattern.permute.xlu0 0
    %617 = vperm.xlu0 %616, %v410
    %v618 = vpop.permute.xlu0 %617
    %v620 = vmul.f32 %v399, %v613
    %v621 = vmul.f32 %v404, %v618
    %v622 = vmul.f32 %v608, %v613
    %v623 = vmul.f32 %v609, %v618
    %624 = vxpose.xlu0.b32.start [1/16] %v622, 128
    %625 = vxpose.xlu0.b32.cont [2/16] %v623, 128
    %626 = vxpose.xlu0.b32.cont [3/16] 0.0, 128
    %627 = vxpose.xlu0.b32.cont [4/16] 0.0, 128
    %628 = vxpose.xlu0.b32.cont [5/16] 0.0, 128
    %629 = vxpose.xlu0.b32.cont [6/16] 0.0, 128
    %630 = vxpose.xlu0.b32.cont [7/16] 0.0, 128
    %631 = vxpose.xlu0.b32.cont [8/16] 0.0, 128
    %632 = vxpose.xlu0.b32.cont [9/16] 0.0, 128
    %633 = vxpose.xlu0.b32.cont [10/16] 0.0, 128
    %634 = vxpose.xlu0.b32.cont [11/16] 0.0, 128
    %635 = vxpose.xlu0.b32.cont [12/16] 0.0, 128
    %636 = vxpose.xlu0.b32.cont [13/16] 0.0, 128
    %637 = vxpose.xlu0.b32.cont [14/16] 0.0, 128
    %638 = vxpose.xlu0.b32.cont [15/16] 0.0, 128
    %639 = vxpose.xlu0.b32.end [16/16] 0.0, 128
    %v640 = vpop.trf.xlu0
    %v641 = vpop.trf.xlu0
    %v642 = vpop.trf.xlu0
    %v643 = vpop.trf.xlu0
    %v644 = vpop.trf.xlu0
    %v645 = vpop.trf.xlu0
    %v646 = vpop.trf.xlu0
    %v647 = vpop.trf.xlu0
    %v648 = vpop.trf.xlu0
    %v649 = vpop.trf.xlu0
    %v650 = vpop.trf.xlu0
    %v651 = vpop.trf.xlu0
    %v652 = vpop.trf.xlu0
    %v653 = vpop.trf.xlu0
    %v654 = vpop.trf.xlu0
    %v655 = vpop.trf.xlu0
    %vm656 = vcmask 97280
    %v658 = vsel %vm656, %v640, 0
    %v661 = vsel %vm196, %v621, 0
    %663 = vmatprep.subr.mxu0 0.0
    %664 = vmatpush1.msra.mxu0 0.0
    %665 = vmatprep.subr.mxu0 0.0
    %666 = vmatpush1.msra.mxu0 0.0
    %667 = vmatprep.subr.mxu0 0.0
    %668 = vmatpush1.msra.mxu0 0.0
    %669 = vmatprep.subr.mxu0 0.0
    %670 = vmatpush1.msra.mxu0 0.0
    %671 = vmatprep.subr.mxu0 0.0
    %672 = vmatpush1.msra.mxu0 0.0
    %673 = vmatprep.subr.mxu0 0.0
    %674 = vmatpush1.msra.mxu0 0.0
    %675 = vmatprep.subr.mxu0 0.0
    %676 = vmatpush1.msra.mxu0 0.0
    %677 = vmatprep.subr.mxu0 0.0
    %678 = vmatpush1.msra.mxu0 0.0
    %679 = vmatprep.subr.mxu0 0.0
    %680 = vmatpush1.msra.mxu0 0.0
    %681 = vmatprep.subr.mxu0 0.0
    %682 = vmatpush1.msra.mxu0 0.0
    %683 = vmatprep.subr.mxu0 0.0
    %684 = vmatpush1.msra.mxu0 0.0
    %685 = vmatprep.subr.mxu0 0.0
    %686 = vmatpush1.msra.mxu0 0.0
    %687 = vmatprep.subr.mxu0 0.0
    %688 = vmatpush1.msra.mxu0 0.0
    %689 = vmatprep.subr.mxu0 0.0
    %690 = vmatpush1.msra.mxu0 0.0
    %691 = vmatprep.subr.mxu0 0.0
    %692 = vmatpush1.msra.mxu0 %v661
    %693 = vmatprep.subr.mxu0 0.0
    %694 = vmatpush1.msra.mxu0 %v620
    %695 = vmatprep.subr.mxu0 0.0
    %696 = vmatpush2.msra.mxu0 0.0
    %697 = vmatprep.subr.mxu0 0.0
    %698 = vmatpush2.msra.mxu0 0.0
    %699 = vmatprep.subr.mxu0 0.0
    %700 = vmatpush2.msra.mxu0 0.0
    %701 = vmatprep.subr.mxu0 0.0
    %702 = vmatpush2.msra.mxu0 0.0
    %703 = vmatprep.subr.mxu0 0.0
    %704 = vmatpush2.msra.mxu0 0.0
    %705 = vmatprep.subr.mxu0 0.0
    %706 = vmatpush2.msra.mxu0 0.0
    %707 = vmatprep.subr.mxu0 0.0
    %708 = vmatpush2.msra.mxu0 0.0
    %709 = vmatprep.subr.mxu0 0.0
    %710 = vmatpush2.msra.mxu0 0.0
    %711 = vmatprep.subr.mxu0 0.0
    %712 = vmatpush2.msra.mxu0 0.0
    %713 = vmatprep.subr.mxu0 0.0
    %714 = vmatpush2.msra.mxu0 0.0
    %715 = vmatprep.subr.mxu0 0.0
    %716 = vmatpush2.msra.mxu0 0.0
    %717 = vmatprep.subr.mxu0 0.0
    %718 = vmatpush2.msra.mxu0 0.0
    %719 = vmatprep.subr.mxu0 0.0
    %720 = vmatpush2.msra.mxu0 0.0
    %721 = vmatprep.subr.mxu0 0.0
    %722 = vmatpush2.msra.mxu0 0.0
    %723 = vmatprep.subr.mxu0 0.0
    %724 = vmatpush2.msra.mxu0 0.0
    %725 = vmatprep.subr.mxu0 0.0
    %726 = vmatpush2.msra.mxu0 0.0
    %727 = vmatprep.mubr.f32.mxu0 0.0
    %728 = vmatmul.mubr.f32.gmra.mxu0 %v658
    %v729 = vpop.f32.mrf.mxu0
    %v730 = vadd.f32 0.0, %v729
    %v731 = vpop.f32.mrf.mxu0
    %732 = vdwg.mxu0
    %vm733 = vcmp.gt.f32.partialorder %v730, 0.0
    %v734 = vmin.f32 %v730, 0.0
    %v735 = vmul.f32 %v734, 1.442695
    %v736 = vpow.pop %v735
    %v737 = vsub.f32 %v736, 1.0
    %v738 = vmul.f32 %v737, 1.6732632
    %v739 = vsel %vm733, %v730, %v738
    %v740 = vmul.f32 %v739, 1.050701
    %v742 = vsel %vm196, %v408, 0
    %744 = vmatprep.subr.mxu0 0.0
    %745 = vmatpush1.msra.mxu0 0.0
    %746 = vmatprep.subr.mxu0 0.0
    %747 = vmatpush1.msra.mxu0 0.0
    %748 = vmatprep.subr.mxu0 0.0
    %749 = vmatpush1.msra.mxu0 0.0
    %750 = vmatprep.subr.mxu0 0.0
    %751 = vmatpush1.msra.mxu0 0.0
    %752 = vmatprep.subr.mxu0 0.0
    %753 = vmatpush1.msra.mxu0 0.0
    %754 = vmatprep.subr.mxu0 0.0
    %755 = vmatpush1.msra.mxu0 0.0
    %756 = vmatprep.subr.mxu0 0.0
    %757 = vmatpush1.msra.mxu0 0.0
    %758 = vmatprep.subr.mxu0 0.0
    %759 = vmatpush1.msra.mxu0 0.0
    %760 = vmatprep.subr.mxu0 0.0
    %761 = vmatpush1.msra.mxu0 0.0
    %762 = vmatprep.subr.mxu0 0.0
    %763 = vmatpush1.msra.mxu0 0.0
    %764 = vmatprep.subr.mxu0 0.0
    %765 = vmatpush1.msra.mxu0 0.0
    %766 = vmatprep.subr.mxu0 0.0
    %767 = vmatpush1.msra.mxu0 0.0
    %768 = vmatprep.subr.mxu0 0.0
    %769 = vmatpush1.msra.mxu0 0.0
    %770 = vmatprep.subr.mxu0 0.0
    %771 = vmatpush1.msra.mxu0 0.0
    %772 = vmatprep.subr.mxu0 0.0
    %773 = vmatpush1.msra.mxu0 %v742
    %774 = vmatprep.subr.mxu0 0.0
    %775 = vmatpush1.msra.mxu0 %v407
    %776 = vmatprep.subr.mxu0 0.0
    %777 = vmatpush2.msra.mxu0 0.0
    %778 = vmatprep.subr.mxu0 0.0
    %779 = vmatpush2.msra.mxu0 0.0
    %780 = vmatprep.subr.mxu0 0.0
    %781 = vmatpush2.msra.mxu0 0.0
    %782 = vmatprep.subr.mxu0 0.0
    %783 = vmatpush2.msra.mxu0 0.0
    %784 = vmatprep.subr.mxu0 0.0
    %785 = vmatpush2.msra.mxu0 0.0
    %786 = vmatprep.subr.mxu0 0.0
    %787 = vmatpush2.msra.mxu0 0.0
    %788 = vmatprep.subr.mxu0 0.0
    %789 = vmatpush2.msra.mxu0 0.0
    %790 = vmatprep.subr.mxu0 0.0
    %791 = vmatpush2.msra.mxu0 0.0
    %792 = vmatprep.subr.mxu0 0.0
    %793 = vmatpush2.msra.mxu0 0.0
    %794 = vmatprep.subr.mxu0 0.0
    %795 = vmatpush2.msra.mxu0 0.0
    %796 = vmatprep.subr.mxu0 0.0
    %797 = vmatpush2.msra.mxu0 0.0
    %798 = vmatprep.subr.mxu0 0.0
    %799 = vmatpush2.msra.mxu0 0.0
    %800 = vmatprep.subr.mxu0 0.0
    %801 = vmatpush2.msra.mxu0 0.0
    %802 = vmatprep.subr.mxu0 0.0
    %803 = vmatpush2.msra.mxu0 0.0
    %804 = vmatprep.subr.mxu0 0.0
    %805 = vmatpush2.msra.mxu0 0.0
    %806 = vmatprep.subr.mxu0 0.0
    %807 = vmatpush2.msra.mxu0 0.0
    %808 = vmatprep.mubr.f32.mxu0 0.0
    %809 = vmatmul.mubr.f32.gmra.mxu0 %v658
    %v810 = vpop.f32.mrf.mxu0
    %v811 = vadd.f32 0.0, %v810
    %v812 = vpop.f32.mrf.mxu0
    %813 = vdwg.mxu0
    %v815 = vsel %vm656, %v811, 0
    %v818 = vsel %vm196, %v623, 0
    %820 = vmatprep.subr.mxu0 0.0
    %821 = vmatpush1.msra.mxu0 0.0
    %822 = vmatprep.subr.mxu0 0.0
    %823 = vmatpush1.msra.mxu0 0.0
    %824 = vmatprep.subr.mxu0 0.0
    %825 = vmatpush1.msra.mxu0 0.0
    %826 = vmatprep.subr.mxu0 0.0
    %827 = vmatpush1.msra.mxu0 0.0
    %828 = vmatprep.subr.mxu0 0.0
    %829 = vmatpush1.msra.mxu0 0.0
    %830 = vmatprep.subr.mxu0 0.0
    %831 = vmatpush1.msra.mxu0 0.0
    %832 = vmatprep.subr.mxu0 0.0
    %833 = vmatpush1.msra.mxu0 0.0
    %834 = vmatprep.subr.mxu0 0.0
    %835 = vmatpush1.msra.mxu0 0.0
    %836 = vmatprep.subr.mxu0 0.0
    %837 = vmatpush1.msra.mxu0 0.0
    %838 = vmatprep.subr.mxu0 0.0
    %839 = vmatpush1.msra.mxu0 0.0
    %840 = vmatprep.subr.mxu0 0.0
    %841 = vmatpush1.msra.mxu0 0.0
    %842 = vmatprep.subr.mxu0 0.0
    %843 = vmatpush1.msra.mxu0 0.0
    %844 = vmatprep.subr.mxu0 0.0
    %845 = vmatpush1.msra.mxu0 0.0
    %846 = vmatprep.subr.mxu0 0.0
    %847 = vmatpush1.msra.mxu0 0.0
    %848 = vmatprep.subr.mxu0 0.0
    %849 = vmatpush1.msra.mxu0 %v818
    %850 = vmatprep.subr.mxu0 0.0
    %851 = vmatpush1.msra.mxu0 %v622
    %852 = vmatprep.subr.mxu0 0.0
    %853 = vmatpush2.msra.mxu0 0.0
    %854 = vmatprep.subr.mxu0 0.0
    %855 = vmatpush2.msra.mxu0 0.0
    %856 = vmatprep.subr.mxu0 0.0
    %857 = vmatpush2.msra.mxu0 0.0
    %858 = vmatprep.subr.mxu0 0.0
    %859 = vmatpush2.msra.mxu0 0.0
    %860 = vmatprep.subr.mxu0 0.0
    %861 = vmatpush2.msra.mxu0 0.0
    %862 = vmatprep.subr.mxu0 0.0
    %863 = vmatpush2.msra.mxu0 0.0
    %864 = vmatprep.subr.mxu0 0.0
    %865 = vmatpush2.msra.mxu0 0.0
    %866 = vmatprep.subr.mxu0 0.0
    %867 = vmatpush2.msra.mxu0 0.0
    %868 = vmatprep.subr.mxu0 0.0
    %869 = vmatpush2.msra.mxu0 0.0
    %870 = vmatprep.subr.mxu0 0.0
    %871 = vmatpush2.msra.mxu0 0.0
    %872 = vmatprep.subr.mxu0 0.0
    %873 = vmatpush2.msra.mxu0 0.0
    %874 = vmatprep.subr.mxu0 0.0
    %875 = vmatpush2.msra.mxu0 0.0
    %876 = vmatprep.subr.mxu0 0.0
    %877 = vmatpush2.msra.mxu0 0.0
    %878 = vmatprep.subr.mxu0 0.0
    %879 = vmatpush2.msra.mxu0 0.0
    %880 = vmatprep.subr.mxu0 0.0
    %881 = vmatpush2.msra.mxu0 0.0
    %882 = vmatprep.subr.mxu0 0.0
    %883 = vmatpush2.msra.mxu0 0.0
    %884 = vmatprep.mubr.f32.mxu0 0.0
    %885 = vmatmul.mubr.f32.gmra.mxu0 %v815
    %v886 = vpop.f32.mrf.mxu0
    %v887 = vadd.f32 0.0, %v886
    %v888 = vpop.f32.mrf.mxu0
    %889 = vdwg.mxu0
    %v890 = vlaneseq
    %v891 = vshrl.u32 %v890, 7
    %v892 = vlaneseq
    %v893 = vand.u32 %v892, 127
    %vm894 = vcmp.eq.s32.totalorder %v891, %v893
    %v895 = vsel %vm894, 1, 0
    %v896 = vcvt.s32.f32 %v895
    %v897 = vsel %vm656, %v407, 0.0
    %898 = vadd.xlane.f32.xlu0 %v897
    %v899 = vpop.xlane.xlu0 %898
    %vm900 = vcmask 93184
    %v901 = vsel %vm900, %v408, 0.0
    %902 = vadd.xlane.f32.xlu0 %v901
    %v903 = vpop.xlane.xlu0 %902
    %v904 = vmul.f32 %v899, %v409
    %v905 = vmul.f32 %v903, %v410
    %vm906 = vcmask 7168
    %v907 = vsel %vm906, %v904, 0.0
    %vm908 = vcmask 3072
    %v909 = vsel %vm908, %v905, 0.0
    %v910 = vadd.f32 %v907, %v909
    %911 = vadd.xlane.f32.xlu0 %v910
    %v912 = vpop.xlane.xlu0 %911
    %v913 = vrot.slane %v912, 4
    %v914 = vadd.f32 %v912, %v913
    %v915 = vrot.slane %v914, 2
    %v916 = vadd.f32 %v914, %v915
    %v917 = vrot.slane %v916, 1
    %v918 = vadd.f32 %v916, %v917
    %s919 = vtos %v918
    %v920 = vstv %s919
    %v921 = vmax.f32 %v920, 1e-15
    %v922 = vrcp.pop %v921
    %v924 = vsel %vm196, %v905, 0
    %926 = vmatprep.subr.mxu0 0.0
    %927 = vmatpush1.msra.mxu0 0.0
    %928 = vmatprep.subr.mxu0 0.0
    %929 = vmatpush1.msra.mxu0 0.0
    %930 = vmatprep.subr.mxu0 0.0
    %931 = vmatpush1.msra.mxu0 0.0
    %932 = vmatprep.subr.mxu0 0.0
    %933 = vmatpush1.msra.mxu0 0.0
    %934 = vmatprep.subr.mxu0 0.0
    %935 = vmatpush1.msra.mxu0 0.0
    %936 = vmatprep.subr.mxu0 0.0
    %937 = vmatpush1.msra.mxu0 0.0
    %938 = vmatprep.subr.mxu0 0.0
    %939 = vmatpush1.msra.mxu0 0.0
    %940 = vmatprep.subr.mxu0 0.0
    %941 = vmatpush1.msra.mxu0 0.0
    %942 = vmatprep.subr.mxu0 0.0
    %943 = vmatpush1.msra.mxu0 0.0
    %944 = vmatprep.subr.mxu0 0.0
    %945 = vmatpush1.msra.mxu0 0.0
    %946 = vmatprep.subr.mxu0 0.0
    %947 = vmatpush1.msra.mxu0 0.0
    %948 = vmatprep.subr.mxu0 0.0
    %949 = vmatpush1.msra.mxu0 0.0
    %950 = vmatprep.subr.mxu0 0.0
    %951 = vmatpush1.msra.mxu0 0.0
    %952 = vmatprep.subr.mxu0 0.0
    %953 = vmatpush1.msra.mxu0 0.0
    %954 = vmatprep.subr.mxu0 0.0
    %955 = vmatpush1.msra.mxu0 %v924
    %956 = vmatprep.subr.mxu0 0.0
    %957 = vmatpush1.msra.mxu0 %v904
    %958 = vmatprep.subr.mxu0 0.0
    %959 = vmatpush2.msra.mxu0 0.0
    %960 = vmatprep.subr.mxu0 0.0
    %961 = vmatpush2.msra.mxu0 0.0
    %962 = vmatprep.subr.mxu0 0.0
    %963 = vmatpush2.msra.mxu0 0.0
    %964 = vmatprep.subr.mxu0 0.0
    %965 = vmatpush2.msra.mxu0 0.0
    %966 = vmatprep.subr.mxu0 0.0
    %967 = vmatpush2.msra.mxu0 0.0
    %968 = vmatprep.subr.mxu0 0.0
    %969 = vmatpush2.msra.mxu0 0.0
    %970 = vmatprep.subr.mxu0 0.0
    %971 = vmatpush2.msra.mxu0 0.0
    %972 = vmatprep.subr.mxu0 0.0
    %973 = vmatpush2.msra.mxu0 0.0
    %974 = vmatprep.subr.mxu0 0.0
    %975 = vmatpush2.msra.mxu0 0.0
    %976 = vmatprep.subr.mxu0 0.0
    %977 = vmatpush2.msra.mxu0 0.0
    %978 = vmatprep.subr.mxu0 0.0
    %979 = vmatpush2.msra.mxu0 0.0
    %980 = vmatprep.subr.mxu0 0.0
    %981 = vmatpush2.msra.mxu0 0.0
    %982 = vmatprep.subr.mxu0 0.0
    %983 = vmatpush2.msra.mxu0 0.0
    %984 = vmatprep.subr.mxu0 0.0
    %985 = vmatpush2.msra.mxu0 0.0
    %986 = vmatprep.subr.mxu0 0.0
    %987 = vmatpush2.msra.mxu0 0.0
    %988 = vmatprep.subr.mxu0 0.0
    %989 = vmatpush2.msra.mxu0 0.0
    %990 = vmatprep.mubr.f32.mxu0 0.0
    %991 = vmatmul.mubr.f32.gmra.mxu0 %v658
    %v992 = vpop.f32.mrf.mxu0
    %v993 = vadd.f32 0.0, %v992
    %v994 = vpop.f32.mrf.mxu0
    %995 = vdwg.mxu0
    %v996 = vmul.f32 %v887, %v896
    %v997 = vsel %vm586, %v996, 0.0
    %998 = vadd.xlane.f32.xlu0 %v997
    %v999 = vpop.xlane.xlu0 %998
    %v1000 = vrot.slane %v999, 4
    %v1001 = vadd.f32 %v999, %v1000
    %v1002 = vrot.slane %v1001, 2
    %v1003 = vadd.f32 %v1001, %v1002
    %v1004 = vrot.slane %v1003, 1
    %v1005 = vadd.f32 %v1003, %v1004
    %s1006 = vtos %v1005
    %v1007 = vstv %s1006
    %v1008 = vmul.f32 %v993, %v993
    %v1009 = vsel %vm906, %v1008, 0.0
    %1010 = vadd.xlane.f32.xlu0 %v1009
    %v1011 = vpop.xlane.xlu0 %1010
    %v1012 = vrot.slane %v1011, 4
    %v1013 = vadd.f32 %v1011, %v1012
    %v1014 = vrot.slane %v1013, 2
    %v1015 = vadd.f32 %v1013, %v1014
    %v1016 = vrot.slane %v1015, 1
    %v1017 = vadd.f32 %v1015, %v1016
    %s1018 = vtos %v1017
    %v1019 = vstv %s1018
    %v1020 = vmul.f32 %v1019, %v922
    %v1021 = vsub.f32 %v1007, %v1020
    %v1022 = vsub.f32 0.0, %v1021
    %v1023 = vmul.f32 %v1022, %v922
    %1024 = vmatprep.subr.mxu0 0.0
    %1025 = vmatpush1.msra.mxu0 0.0
    %1026 = vmatprep.subr.mxu0 0.0
    %1027 = vmatpush1.msra.mxu0 0.0
    %1028 = vmatprep.subr.mxu0 0.0
    %1029 = vmatpush1.msra.mxu0 0.0
    %1030 = vmatprep.subr.mxu0 0.0
    %1031 = vmatpush1.msra.mxu0 0.0
    %1032 = vmatprep.subr.mxu0 0.0
    %1033 = vmatpush1.msra.mxu0 0.0
    %1034 = vmatprep.subr.mxu0 0.0
    %1035 = vmatpush1.msra.mxu0 0.0
    %1036 = vmatprep.subr.mxu0 0.0
    %1037 = vmatpush1.msra.mxu0 0.0
    %1038 = vmatprep.subr.mxu0 0.0
    %1039 = vmatpush1.msra.mxu0 0.0
    %1040 = vmatprep.subr.mxu0 0.0
    %1041 = vmatpush1.msra.mxu0 0.0
    %1042 = vmatprep.subr.mxu0 0.0
    %1043 = vmatpush1.msra.mxu0 0.0
    %1044 = vmatprep.subr.mxu0 0.0
    %1045 = vmatpush1.msra.mxu0 0.0
    %1046 = vmatprep.subr.mxu0 0.0
    %1047 = vmatpush1.msra.mxu0 0.0
    %1048 = vmatprep.subr.mxu0 0.0
    %1049 = vmatpush1.msra.mxu0 0.0
    %1050 = vmatprep.subr.mxu0 0.0
    %1051 = vmatpush1.msra.mxu0 0.0
    %1052 = vmatprep.subr.mxu0 0.0
    %1053 = vmatpush1.msra.mxu0 %v818
    %1054 = vmatprep.subr.mxu0 0.0
    %1055 = vmatpush1.msra.mxu0 %v622
    %1056 = vmatprep.subr.mxu0 0.0
    %1057 = vmatpush2.msra.mxu0 0.0
    %1058 = vmatprep.subr.mxu0 0.0
    %1059 = vmatpush2.msra.mxu0 0.0
    %1060 = vmatprep.subr.mxu0 0.0
    %1061 = vmatpush2.msra.mxu0 0.0
    %1062 = vmatprep.subr.mxu0 0.0
    %1063 = vmatpush2.msra.mxu0 0.0
    %1064 = vmatprep.subr.mxu0 0.0
    %1065 = vmatpush2.msra.mxu0 0.0
    %1066 = vmatprep.subr.mxu0 0.0
    %1067 = vmatpush2.msra.mxu0 0.0
    %1068 = vmatprep.subr.mxu0 0.0
    %1069 = vmatpush2.msra.mxu0 0.0
    %1070 = vmatprep.subr.mxu0 0.0
    %1071 = vmatpush2.msra.mxu0 0.0
    %1072 = vmatprep.subr.mxu0 0.0
    %1073 = vmatpush2.msra.mxu0 0.0
    %1074 = vmatprep.subr.mxu0 0.0
    %1075 = vmatpush2.msra.mxu0 0.0
    %1076 = vmatprep.subr.mxu0 0.0
    %1077 = vmatpush2.msra.mxu0 0.0
    %1078 = vmatprep.subr.mxu0 0.0
    %1079 = vmatpush2.msra.mxu0 0.0
    %1080 = vmatprep.subr.mxu0 0.0
    %1081 = vmatpush2.msra.mxu0 0.0
    %1082 = vmatprep.subr.mxu0 0.0
    %1083 = vmatpush2.msra.mxu0 0.0
    %1084 = vmatprep.subr.mxu0 0.0
    %1085 = vmatpush2.msra.mxu0 0.0
    %1086 = vmatprep.subr.mxu0 0.0
    %1087 = vmatpush2.msra.mxu0 0.0
    %1088 = vmatprep.mubr.f32.mxu0 0.0
    %1089 = vmatmul.mubr.f32.gmra.mxu0 %v658
    %v1090 = vpop.f32.mrf.mxu0
    %v1091 = vadd.f32 0.0, %v1090
    %v1092 = vpop.f32.mrf.mxu0
    %1093 = vdwg.mxu0
    %v1094 = vmul.f32 %v1091, %v1091
    %v1095 = vsel %vm586, %v1094, 0.0
    %1096 = vadd.xlane.f32.xlu0 %v1095
    %v1097 = vpop.xlane.xlu0 %1096
    %v1098 = vrot.slane %v1097, 4
    %v1099 = vadd.f32 %v1097, %v1098
    %v1100 = vrot.slane %v1099, 2
    %v1101 = vadd.f32 %v1099, %v1100
    %v1102 = vrot.slane %v1101, 1
    %v1103 = vadd.f32 %v1101, %v1102
    %s1104 = vtos %v1103
    %v1105 = vstv %s1104
    %v1106 = vmax.f32 %v1105, 1e-15
    %v1107 = vrsqrt.pop %v1106
    %v1108 = vmul.f32 %v1091, %v1107
    %v1109 = vmul.f32 %v896, 0.35355338
    %v1110 = vsub.f32 %v1108, %v1109
    %v1111 = vmul.f32 %v1110, %v1110
    %v1112 = vsel %vm586, %v1111, 0.0
    %1113 = vadd.xlane.f32.xlu0 %v1112
    %v1114 = vpop.xlane.xlu0 %1113
    %v1115 = vrot.slane %v1114, 4
    %v1116 = vadd.f32 %v1114, %v1115
    %v1117 = vrot.slane %v1116, 2
    %v1118 = vadd.f32 %v1116, %v1117
    %v1119 = vrot.slane %v1118, 1
    %v1120 = vadd.f32 %v1118, %v1119
    %s1121 = vtos %v1120
    %v1122 = vstv %s1121
    %v1123 = vrsqrt.pop %v1122
    %v1124 = vmul.f32 %v1122, %v1123
    %vm1125 = vcmp.eq.f32.partialorder %v1122, inf
    %v1126 = vsel %vm1125, %v1122, %v1124
    %vm1127 = vcmp.eq.f32.partialorder %v1122, 0.0
    %v1128 = vand.u32 %v1122, 2147483648
    %v1129 = vsel %vm1127, %v1128, %v1126
    %v1130 = vsel %vm586, %v622, 0.0
    %v1131 = vsel %vm590, %v623, 0.0
    %v1132 = vadd.f32 %v1130, %v1131
    %v1133 = vrot.slane %v1132, 4
    %v1134 = vadd.f32 %v1132, %v1133
    %v1135 = vrot.slane %v1134, 2
    %v1136 = vadd.f32 %v1134, %v1135
    %v1137 = vrot.slane %v1136, 1
    %v1138 = vadd.f32 %v1136, %v1137
    %v1139 = vmul.f32 %v1138, %v1138
    %vm1140 = vcmask 57344
    %v1141 = vsel %vm1140, %v1139, 0.0
    %1142 = vadd.xlane.f32.xlu0 %v1141
    %v1143 = vpop.xlane.xlu0 %1142
    %v1144 = vrot.slane %v1143, 4
    %v1145 = vadd.f32 %v1143, %v1144
    %v1146 = vrot.slane %v1145, 2
    %v1147 = vadd.f32 %v1145, %v1146
    %v1148 = vrot.slane %v1147, 1
    %v1149 = vadd.f32 %v1147, %v1148
    %s1150 = vtos %v1149
    %v1151 = vstv %s1150
    %v1152 = vrsqrt.pop %v1151
    %v1153 = vmul.f32 %v1151, %v1152
    %vm1154 = vcmp.eq.f32.partialorder %v1151, inf
    %v1155 = vsel %vm1154, %v1151, %v1153
    %vm1156 = vcmp.eq.f32.partialorder %v1151, 0.0
    %v1157 = vand.u32 %v1151, 2147483648
    %v1158 = vsel %vm1156, %v1157, %v1155
    %v1159 = vsel %vm906, %v409, 0.0
    %v1160 = vsel %vm908, %v410, 0.0
    %v1161 = vadd.f32 %v1159, %v1160
    %1162 = vadd.xlane.f32.xlu0 %v1161
    %v1163 = vpop.xlane.xlu0 %1162
    %v1164 = vrot.slane %v1163, 4
    %v1165 = vadd.f32 %v1163, %v1164
    %v1166 = vrot.slane %v1165, 2
    %v1167 = vadd.f32 %v1165, %v1166
    %v1168 = vrot.slane %v1167, 1
    %v1169 = vadd.f32 %v1167, %v1168
    %s1170 = vtos %v1169
    %v1171 = vstv %s1170
    %v1172 = vrcp.pop %v1171
    %v1173 = vsub.f32 1.0, %v896
    %v1174 = vmul.f32 %v887, %v1173
    %v1175 = vsel %vm586, %v1174, 0.0
    %1176 = vadd.xlane.f32.xlu0 %v1175
    %v1177 = vpop.xlane.xlu0 %1176
    %v1178 = vrot.slane %v1175, 4
    %v1179 = vadd.f32 %v1175, %v1178
    %v1180 = vrot.slane %v1179, 2
    %v1181 = vadd.f32 %v1179, %v1180
    %v1182 = vrot.slane %v1181, 1
    %v1183 = vadd.f32 %v1181, %v1182
    %v1184 = vrsqrt.pop %v1177
    %v1185 = vmul.f32 %v1177, %v1184
    %vm1186 = vcmp.eq.f32.partialorder %v1177, inf
    %v1187 = vsel %vm1186, %v1177, %v1185
    %vm1188 = vcmp.eq.f32.partialorder %v1177, 0.0
    %v1189 = vand.u32 %v1177, 2147483648
    %v1190 = vsel %vm1188, %v1189, %v1187
    %v1191 = vadd.f32 %v1190, 1e-15
    %v1192 = vrcp.pop %v1191
    %v1193 = vmul.f32 %v1174, %v1192
    %v1194 = vrsqrt.pop %v1183
    %v1195 = vmul.f32 %v1183, %v1194
    %vm1196 = vcmp.eq.f32.partialorder %v1183, inf
    %v1197 = vsel %vm1196, %v1183, %v1195
    %vm1198 = vcmp.eq.f32.partialorder %v1183, 0.0
    %v1199 = vand.u32 %v1183, 2147483648
    %v1200 = vsel %vm1198, %v1199, %v1197
    %v1201 = vadd.f32 %v1200, 1e-15
    %v1202 = vrcp.pop %v1201
    %v1203 = vmul.f32 %v1193, %v1202
    %v1204 = vadd.f32 %v1023, 0.0
    %v1205 = vadd.f32 %v1129, 0.0
    %v1206 = vadd.f32 %v1158, 0.0
    %v1207 = vadd.f32 %v1172, 0.0
    %v1209 = vsel %vm586, %v1203, 0
    %1211 = vmatprep.subr.mxu0 0.0
    %1212 = vmatpush1.msra.mxu0 0.0
    %1213 = vmatprep.subr.mxu0 0.0
    %1214 = vmatpush1.msra.mxu0 0.0
    %1215 = vmatprep.subr.mxu0 0.0
    %1216 = vmatpush1.msra.mxu0 0.0
    %1217 = vmatprep.subr.mxu0 0.0
    %1218 = vmatpush1.msra.mxu0 0.0
    %1219 = vmatprep.subr.mxu0 0.0
    %1220 = vmatpush1.msra.mxu0 0.0
    %1221 = vmatprep.subr.mxu0 0.0
    %1222 = vmatpush1.msra.mxu0 0.0
    %1223 = vmatprep.subr.mxu0 0.0
    %1224 = vmatpush1.msra.mxu0 0.0
    %1225 = vmatprep.subr.mxu0 0.0
    %1226 = vmatpush1.msra.mxu0 0.0
    %1227 = vmatprep.subr.mxu0 0.0
    %1228 = vmatpush1.msra.mxu0 0.0
    %1229 = vmatprep.subr.mxu0 0.0
    %1230 = vmatpush1.msra.mxu0 0.0
    %1231 = vmatprep.subr.mxu0 0.0
    %1232 = vmatpush1.msra.mxu0 0.0
    %1233 = vmatprep.subr.mxu0 0.0
    %1234 = vmatpush1.msra.mxu0 0.0
    %1235 = vmatprep.subr.mxu0 0.0
    %1236 = vmatpush1.msra.mxu0 0.0
    %1237 = vmatprep.subr.mxu0 0.0
    %1238 = vmatpush1.msra.mxu0 0.0
    %1239 = vmatprep.subr.mxu0 0.0
    %1240 = vmatpush1.msra.mxu0 0.0
    %1241 = vmatprep.subr.mxu0 0.0
    %1242 = vmatpush1.msra.mxu0 %v740
    %1243 = vmatprep.subr.mxu0 0.0
    %1244 = vmatpush2.msra.mxu0 0.0
    %1245 = vmatprep.subr.mxu0 0.0
    %1246 = vmatpush2.msra.mxu0 0.0
    %1247 = vmatprep.subr.mxu0 0.0
    %1248 = vmatpush2.msra.mxu0 0.0
    %1249 = vmatprep.subr.mxu0 0.0
    %1250 = vmatpush2.msra.mxu0 0.0
    %1251 = vmatprep.subr.mxu0 0.0
    %1252 = vmatpush2.msra.mxu0 0.0
    %1253 = vmatprep.subr.mxu0 0.0
    %1254 = vmatpush2.msra.mxu0 0.0
    %1255 = vmatprep.subr.mxu0 0.0
    %1256 = vmatpush2.msra.mxu0 0.0
    %1257 = vmatprep.subr.mxu0 0.0
    %1258 = vmatpush2.msra.mxu0 0.0
    %1259 = vmatprep.subr.mxu0 0.0
    %1260 = vmatpush2.msra.mxu0 0.0
    %1261 = vmatprep.subr.mxu0 0.0
    %1262 = vmatpush2.msra.mxu0 0.0
    %1263 = vmatprep.subr.mxu0 0.0
    %1264 = vmatpush2.msra.mxu0 0.0
    %1265 = vmatprep.subr.mxu0 0.0
    %1266 = vmatpush2.msra.mxu0 0.0
    %1267 = vmatprep.subr.mxu0 0.0
    %1268 = vmatpush2.msra.mxu0 0.0
    %1269 = vmatprep.subr.mxu0 0.0
    %1270 = vmatpush2.msra.mxu0 0.0
    %1271 = vmatprep.subr.mxu0 0.0
    %1272 = vmatpush2.msra.mxu0 0.0
    %1273 = vmatprep.subr.mxu0 0.0
    %1274 = vmatpush2.msra.mxu0 0.0
    %1275 = vmatprep.mubr.f32.mxu0 0.0
    %1276 = vmatmul.mubr.f32.gmra.mxu0 %v1209
    %v1277 = vpop.f32.mrf.mxu0
    %v1278 = vadd.f32 0.0, %v1277
    %v1279 = vpop.f32.mrf.mxu0
    %1280 = vdwg.mxu0
    %1282 = vrot.lane.b32.xlu0 %v740, 32
    %v1283 = vpop.permute.xlu0 %1282
    %v1285 = vsel %vm417, %v1278, %v1283
    %v1287 = vlaneseq
    %v1288 = vshrl.u32 %v1287, 7
    %v1289 = vsub.s32 0, %v1288
    %v1290 = vrot.slane %v311, %v1289
    %vm1292 = vcmask 523264
    %v1294 = vsel %vm1292, %v1285, 0
    %1296 = vmatprep.subr.mxu0 0.0
    %1297 = vmatpush1.msra.mxu0 0.0
    %1298 = vmatprep.subr.mxu0 0.0
    %1299 = vmatpush1.msra.mxu0 0.0
    %1300 = vmatprep.subr.mxu0 0.0
    %1301 = vmatpush1.msra.mxu0 0.0
    %1302 = vmatprep.subr.mxu0 0.0
    %1303 = vmatpush1.msra.mxu0 0.0
    %1304 = vmatprep.subr.mxu0 0.0
    %1305 = vmatpush1.msra.mxu0 0.0
    %1306 = vmatprep.subr.mxu0 0.0
    %1307 = vmatpush1.msra.mxu0 0.0
    %1308 = vmatprep.subr.mxu0 0.0
    %1309 = vmatpush1.msra.mxu0 0.0
    %1310 = vmatprep.subr.mxu0 0.0
    %1311 = vmatpush1.msra.mxu0 0.0
    %1312 = vmatprep.subr.mxu0 0.0
    %1313 = vmatpush1.msra.mxu0 %v310
    %1314 = vmatprep.subr.mxu0 0.0
    %1315 = vmatpush1.msra.mxu0 %v309
    %1316 = vmatprep.subr.mxu0 0.0
    %1317 = vmatpush1.msra.mxu0 %v308
    %1318 = vmatprep.subr.mxu0 0.0
    %1319 = vmatpush1.msra.mxu0 %v307
    %1320 = vmatprep.subr.mxu0 0.0
    %1321 = vmatpush1.msra.mxu0 %v306
    %1322 = vmatprep.subr.mxu0 0.0
    %1323 = vmatpush1.msra.mxu0 %v305
    %1324 = vmatprep.subr.mxu0 0.0
    %1325 = vmatpush1.msra.mxu0 %v304
    %1326 = vmatprep.subr.mxu0 0.0
    %1327 = vmatpush1.msra.mxu0 %v303
    %1328 = vmatprep.subr.mxu0 0.0
    %1329 = vmatpush2.msra.mxu0 0.0
    %1330 = vmatprep.subr.mxu0 0.0
    %1331 = vmatpush2.msra.mxu0 0.0
    %1332 = vmatprep.subr.mxu0 0.0
    %1333 = vmatpush2.msra.mxu0 0.0
    %1334 = vmatprep.subr.mxu0 0.0
    %1335 = vmatpush2.msra.mxu0 0.0
    %1336 = vmatprep.subr.mxu0 0.0
    %1337 = vmatpush2.msra.mxu0 0.0
    %1338 = vmatprep.subr.mxu0 0.0
    %1339 = vmatpush2.msra.mxu0 0.0
    %1340 = vmatprep.subr.mxu0 0.0
    %1341 = vmatpush2.msra.mxu0 0.0
    %1342 = vmatprep.subr.mxu0 0.0
    %1343 = vmatpush2.msra.mxu0 0.0
    %1344 = vmatprep.subr.mxu0 0.0
    %1345 = vmatpush2.msra.mxu0 0.0
    %1346 = vmatprep.subr.mxu0 0.0
    %1347 = vmatpush2.msra.mxu0 0.0
    %1348 = vmatprep.subr.mxu0 0.0
    %1349 = vmatpush2.msra.mxu0 0.0
    %1350 = vmatprep.subr.mxu0 0.0
    %1351 = vmatpush2.msra.mxu0 0.0
    %1352 = vmatprep.subr.mxu0 0.0
    %1353 = vmatpush2.msra.mxu0 0.0
    %1354 = vmatprep.subr.mxu0 0.0
    %1355 = vmatpush2.msra.mxu0 0.0
    %1356 = vmatprep.subr.mxu0 0.0
    %1357 = vmatpush2.msra.mxu0 0.0
    %1358 = vmatprep.subr.mxu0 0.0
    %1359 = vmatpush2.msra.mxu0 0.0
    %1360 = vmatprep.mubr.f32.mxu0 0.0
    %1361 = vmatmul.mubr.f32.gmra.mxu0 %v1294
    %v1362 = vpop.f32.mrf.mxu0
    %v1363 = vadd.f32 %v1290, %v1362
    %v1364 = vpop.f32.mrf.mxu0
    %1365 = vdwg.mxu0
    %v1366 = vmax.f32 %v1363, 0.0
    %v1368 = vlaneseq
    %v1369 = vshrl.u32 %v1368, 7
    %v1370 = vsub.s32 0, %v1369
    %v1371 = vrot.slane %v297, %v1370
    %v1374 = vsel %vm417, %v1366, 0
    %1376 = vmatprep.subr.mxu0 0.0
    %1377 = vmatpush1.msra.mxu0 0.0
    %1378 = vmatprep.subr.mxu0 0.0
    %1379 = vmatpush1.msra.mxu0 0.0
    %1380 = vmatprep.subr.mxu0 0.0
    %1381 = vmatpush1.msra.mxu0 0.0
    %1382 = vmatprep.subr.mxu0 0.0
    %1383 = vmatpush1.msra.mxu0 0.0
    %1384 = vmatprep.subr.mxu0 0.0
    %1385 = vmatpush1.msra.mxu0 0.0
    %1386 = vmatprep.subr.mxu0 0.0
    %1387 = vmatpush1.msra.mxu0 0.0
    %1388 = vmatprep.subr.mxu0 0.0
    %1389 = vmatpush1.msra.mxu0 0.0
    %1390 = vmatprep.subr.mxu0 0.0
    %1391 = vmatpush1.msra.mxu0 0.0
    %1392 = vmatprep.subr.mxu0 0.0
    %1393 = vmatpush1.msra.mxu0 0.0
    %1394 = vmatprep.subr.mxu0 0.0
    %1395 = vmatpush1.msra.mxu0 0.0
    %1396 = vmatprep.subr.mxu0 0.0
    %1397 = vmatpush1.msra.mxu0 0.0
    %1398 = vmatprep.subr.mxu0 0.0
    %1399 = vmatpush1.msra.mxu0 0.0
    %1400 = vmatprep.subr.mxu0 0.0
    %1401 = vmatpush1.msra.mxu0 %v296
    %1402 = vmatprep.subr.mxu0 0.0
    %1403 = vmatpush1.msra.mxu0 %v295
    %1404 = vmatprep.subr.mxu0 0.0
    %1405 = vmatpush1.msra.mxu0 %v294
    %1406 = vmatprep.subr.mxu0 0.0
    %1407 = vmatpush1.msra.mxu0 %v293
    %1408 = vmatprep.subr.mxu0 0.0
    %1409 = vmatpush2.msra.mxu0 0.0
    %1410 = vmatprep.subr.mxu0 0.0
    %1411 = vmatpush2.msra.mxu0 0.0
    %1412 = vmatprep.subr.mxu0 0.0
    %1413 = vmatpush2.msra.mxu0 0.0
    %1414 = vmatprep.subr.mxu0 0.0
    %1415 = vmatpush2.msra.mxu0 0.0
    %1416 = vmatprep.subr.mxu0 0.0
    %1417 = vmatpush2.msra.mxu0 0.0
    %1418 = vmatprep.subr.mxu0 0.0
    %1419 = vmatpush2.msra.mxu0 0.0
    %1420 = vmatprep.subr.mxu0 0.0
    %1421 = vmatpush2.msra.mxu0 0.0
    %1422 = vmatprep.subr.mxu0 0.0
    %1423 = vmatpush2.msra.mxu0 0.0
    %1424 = vmatprep.subr.mxu0 0.0
    %1425 = vmatpush2.msra.mxu0 0.0
    %1426 = vmatprep.subr.mxu0 0.0
    %1427 = vmatpush2.msra.mxu0 0.0
    %1428 = vmatprep.subr.mxu0 0.0
    %1429 = vmatpush2.msra.mxu0 0.0
    %1430 = vmatprep.subr.mxu0 0.0
    %1431 = vmatpush2.msra.mxu0 0.0
    %1432 = vmatprep.subr.mxu0 0.0
    %1433 = vmatpush2.msra.mxu0 0.0
    %1434 = vmatprep.subr.mxu0 0.0
    %1435 = vmatpush2.msra.mxu0 0.0
    %1436 = vmatprep.subr.mxu0 0.0
    %1437 = vmatpush2.msra.mxu0 0.0
    %1438 = vmatprep.subr.mxu0 0.0
    %1439 = vmatpush2.msra.mxu0 0.0
    %1440 = vmatprep.mubr.f32.mxu0 0.0
    %1441 = vmatmul.mubr.f32.gmra.mxu0 %v1374
    %v1442 = vpop.f32.mrf.mxu0
    %v1443 = vadd.f32 %v1371, %v1442
    %v1444 = vpop.f32.mrf.mxu0
    %1445 = vdwg.mxu0
    %v1447 = vlaneseq
    %v1448 = vshrl.u32 %v1447, 7
    %v1449 = vsub.s32 0, %v1448
    %v1450 = vrot.slane %v302, %v1449
    %v1453 = vsel %vm417, %v1443, 0
    %1455 = vmatprep.subr.mxu0 0.0
    %1456 = vmatpush1.msra.mxu0 0.0
    %1457 = vmatprep.subr.mxu0 0.0
    %1458 = vmatpush1.msra.mxu0 0.0
    %1459 = vmatprep.subr.mxu0 0.0
    %1460 = vmatpush1.msra.mxu0 0.0
    %1461 = vmatprep.subr.mxu0 0.0
    %1462 = vmatpush1.msra.mxu0 0.0
    %1463 = vmatprep.subr.mxu0 0.0
    %1464 = vmatpush1.msra.mxu0 0.0
    %1465 = vmatprep.subr.mxu0 0.0
    %1466 = vmatpush1.msra.mxu0 0.0
    %1467 = vmatprep.subr.mxu0 0.0
    %1468 = vmatpush1.msra.mxu0 0.0
    %1469 = vmatprep.subr.mxu0 0.0
    %1470 = vmatpush1.msra.mxu0 0.0
    %1471 = vmatprep.subr.mxu0 0.0
    %1472 = vmatpush1.msra.mxu0 0.0
    %1473 = vmatprep.subr.mxu0 0.0
    %1474 = vmatpush1.msra.mxu0 0.0
    %1475 = vmatprep.subr.mxu0 0.0
    %1476 = vmatpush1.msra.mxu0 0.0
    %1477 = vmatprep.subr.mxu0 0.0
    %1478 = vmatpush1.msra.mxu0 0.0
    %1479 = vmatprep.subr.mxu0 0.0
    %1480 = vmatpush1.msra.mxu0 %v301
    %1481 = vmatprep.subr.mxu0 0.0
    %1482 = vmatpush1.msra.mxu0 %v300
    %1483 = vmatprep.subr.mxu0 0.0
    %1484 = vmatpush1.msra.mxu0 %v299
    %1485 = vmatprep.subr.mxu0 0.0
    %1486 = vmatpush1.msra.mxu0 %v298
    %1487 = vmatprep.subr.mxu0 0.0
    %1488 = vmatpush2.msra.mxu0 0.0
    %1489 = vmatprep.subr.mxu0 0.0
    %1490 = vmatpush2.msra.mxu0 0.0
    %1491 = vmatprep.subr.mxu0 0.0
    %1492 = vmatpush2.msra.mxu0 0.0
    %1493 = vmatprep.subr.mxu0 0.0
    %1494 = vmatpush2.msra.mxu0 0.0
    %1495 = vmatprep.subr.mxu0 0.0
    %1496 = vmatpush2.msra.mxu0 0.0
    %1497 = vmatprep.subr.mxu0 0.0
    %1498 = vmatpush2.msra.mxu0 0.0
    %1499 = vmatprep.subr.mxu0 0.0
    %1500 = vmatpush2.msra.mxu0 0.0
    %1501 = vmatprep.subr.mxu0 0.0
    %1502 = vmatpush2.msra.mxu0 0.0
    %1503 = vmatprep.subr.mxu0 0.0
    %1504 = vmatpush2.msra.mxu0 0.0
    %1505 = vmatprep.subr.mxu0 0.0
    %1506 = vmatpush2.msra.mxu0 0.0
    %1507 = vmatprep.subr.mxu0 0.0
    %1508 = vmatpush2.msra.mxu0 0.0
    %1509 = vmatprep.subr.mxu0 0.0
    %1510 = vmatpush2.msra.mxu0 0.0
    %1511 = vmatprep.subr.mxu0 0.0
    %1512 = vmatpush2.msra.mxu0 0.0
    %1513 = vmatprep.subr.mxu0 0.0
    %1514 = vmatpush2.msra.mxu0 0.0
    %1515 = vmatprep.subr.mxu0 0.0
    %1516 = vmatpush2.msra.mxu0 0.0
    %1517 = vmatprep.subr.mxu0 0.0
    %1518 = vmatpush2.msra.mxu0 0.0
    %1519 = vmatprep.mubr.f32.mxu0 0.0
    %1520 = vmatmul.mubr.f32.gmra.mxu0 %v1453
    %v1521 = vpop.f32.mrf.mxu0
    %v1522 = vadd.f32 %v1450, %v1521
    %v1523 = vpop.f32.mrf.mxu0
    %1524 = vdwg.mxu0
    %v1525 = vsel %vm186, %v1522, -inf
    %1526 = vmax.xlane.f32.xlu0 %v1525
    %v1527 = vpop.xlane.xlu0 %1526
    %v1528 = vsub.f32 %v1522, %v1527
    %v1529 = vmul.f32 %v1528, 1.442695
    %v1530 = vpow.pop %v1529
    %v1531 = vsel %vm186, %v1530, 0.0
    %1532 = vadd.xlane.f32.xlu0 %v1531
    %v1533 = vpop.xlane.xlu0 %1532
    %v1534 = vrcp.pop %v1533
    %v1535 = vmul.f32 %v1530, %v1534
    %1536 = vxpose.xlu0.b32.start [1/16] %v1535, 128
    %1537 = vxpose.xlu0.b32.cont [2/16] 0.0, 128
    %1538 = vxpose.xlu0.b32.cont [3/16] 0.0, 128
    %1539 = vxpose.xlu0.b32.cont [4/16] 0.0, 128
    %1540 = vxpose.xlu0.b32.cont [5/16] 0.0, 128
    %1541 = vxpose.xlu0.b32.cont [6/16] 0.0, 128
    %1542 = vxpose.xlu0.b32.cont [7/16] 0.0, 128
    %1543 = vxpose.xlu0.b32.cont [8/16] 0.0, 128
    %1544 = vxpose.xlu0.b32.cont [9/16] 0.0, 128
    %1545 = vxpose.xlu0.b32.cont [10/16] 0.0, 128
    %1546 = vxpose.xlu0.b32.cont [11/16] 0.0, 128
    %1547 = vxpose.xlu0.b32.cont [12/16] 0.0, 128
    %1548 = vxpose.xlu0.b32.cont [13/16] 0.0, 128
    %1549 = vxpose.xlu0.b32.cont [14/16] 0.0, 128
    %1550 = vxpose.xlu0.b32.cont [15/16] 0.0, 128
    %1551 = vxpose.xlu0.b32.end [16/16] 0.0, 128
    %v1552 = vpop.trf.xlu0
    %v1553 = vpop.trf.xlu0
    %v1554 = vpop.trf.xlu0
    %v1555 = vpop.trf.xlu0
    %v1556 = vpop.trf.xlu0
    %v1557 = vpop.trf.xlu0
    %v1558 = vpop.trf.xlu0
    %v1559 = vpop.trf.xlu0
    %v1560 = vpop.trf.xlu0
    %v1561 = vpop.trf.xlu0
    %v1562 = vpop.trf.xlu0
    %v1563 = vpop.trf.xlu0
    %v1564 = vpop.trf.xlu0
    %v1565 = vpop.trf.xlu0
    %v1566 = vpop.trf.xlu0
    %v1567 = vpop.trf.xlu0
    %v1569 = vsel %vm586, %v1552, 0
    %1571 = vmatprep.subr.mxu0 0.0
    %1572 = vmatpush1.msra.mxu0 0.0
    %1573 = vmatprep.subr.mxu0 0.0
    %1574 = vmatpush1.msra.mxu0 0.0
    %1575 = vmatprep.subr.mxu0 0.0
    %1576 = vmatpush1.msra.mxu0 0.0
    %1577 = vmatprep.subr.mxu0 0.0
    %1578 = vmatpush1.msra.mxu0 0.0
    %1579 = vmatprep.subr.mxu0 0.0
    %1580 = vmatpush1.msra.mxu0 0.0
    %1581 = vmatprep.subr.mxu0 0.0
    %1582 = vmatpush1.msra.mxu0 0.0
    %1583 = vmatprep.subr.mxu0 0.0
    %1584 = vmatpush1.msra.mxu0 0.0
    %1585 = vmatprep.subr.mxu0 0.0
    %1586 = vmatpush1.msra.mxu0 0.0
    %1587 = vmatprep.subr.mxu0 0.0
    %1588 = vmatpush1.msra.mxu0 0.0
    %1589 = vmatprep.subr.mxu0 0.0
    %1590 = vmatpush1.msra.mxu0 0.0
    %1591 = vmatprep.subr.mxu0 0.0
    %1592 = vmatpush1.msra.mxu0 0.0
    %1593 = vmatprep.subr.mxu0 0.0
    %1594 = vmatpush1.msra.mxu0 0.0
    %1595 = vmatprep.subr.mxu0 0.0
    %1596 = vmatpush1.msra.mxu0 0.0
    %1597 = vmatprep.subr.mxu0 0.0
    %1598 = vmatpush1.msra.mxu0 0.0
    %1599 = vmatprep.subr.mxu0 0.0
    %1600 = vmatpush1.msra.mxu0 0.0
    %1601 = vmatprep.subr.mxu0 0.0
    %1602 = vmatpush1.msra.mxu0 %v1366
    %1603 = vmatprep.subr.mxu0 0.0
    %1604 = vmatpush2.msra.mxu0 0.0
    %1605 = vmatprep.subr.mxu0 0.0
    %1606 = vmatpush2.msra.mxu0 0.0
    %1607 = vmatprep.subr.mxu0 0.0
    %1608 = vmatpush2.msra.mxu0 0.0
    %1609 = vmatprep.subr.mxu0 0.0
    %1610 = vmatpush2.msra.mxu0 0.0
    %1611 = vmatprep.subr.mxu0 0.0
    %1612 = vmatpush2.msra.mxu0 0.0
    %1613 = vmatprep.subr.mxu0 0.0
    %1614 = vmatpush2.msra.mxu0 0.0
    %1615 = vmatprep.subr.mxu0 0.0
    %1616 = vmatpush2.msra.mxu0 0.0
    %1617 = vmatprep.subr.mxu0 0.0
    %1618 = vmatpush2.msra.mxu0 0.0
    %1619 = vmatprep.subr.mxu0 0.0
    %1620 = vmatpush2.msra.mxu0 0.0
    %1621 = vmatprep.subr.mxu0 0.0
    %1622 = vmatpush2.msra.mxu0 0.0
    %1623 = vmatprep.subr.mxu0 0.0
    %1624 = vmatpush2.msra.mxu0 0.0
    %1625 = vmatprep.subr.mxu0 0.0
    %1626 = vmatpush2.msra.mxu0 0.0
    %1627 = vmatprep.subr.mxu0 0.0
    %1628 = vmatpush2.msra.mxu0 0.0
    %1629 = vmatprep.subr.mxu0 0.0
    %1630 = vmatpush2.msra.mxu0 0.0
    %1631 = vmatprep.subr.mxu0 0.0
    %1632 = vmatpush2.msra.mxu0 0.0
    %1633 = vmatprep.subr.mxu0 0.0
    %1634 = vmatpush2.msra.mxu0 0.0
    %1635 = vmatprep.mubr.f32.mxu0 0.0
    %1636 = vmatmul.mubr.f32.gmra.mxu0 %v1569
    %v1637 = vpop.f32.mrf.mxu0
    %v1638 = vadd.f32 0.0, %v1637
    %v1639 = vpop.f32.mrf.mxu0
    %1640 = vdwg.mxu0
    %vm1641 = vcmp.gt.f32.partialorder %v1638, 0.0
    %v1642 = vmin.f32 %v1638, 0.0
    %v1643 = vmul.f32 %v1642, 1.442695
    %v1644 = vpow.pop %v1643
    %v1645 = vsub.f32 %v1644, 1.0
    %v1646 = vmul.f32 %v1645, 1.6732632
    %v1647 = vsel %vm1641, %v1638, %v1646
    %v1648 = vmul.f32 %v1647, 1.050701
    %1649 = vmatprep.subr.mxu0 0.0
    %1650 = vmatpush1.msra.mxu0 0.0
    %1651 = vmatprep.subr.mxu0 0.0
    %1652 = vmatpush1.msra.mxu0 0.0
    %1653 = vmatprep.subr.mxu0 0.0
    %1654 = vmatpush1.msra.mxu0 0.0
    %1655 = vmatprep.subr.mxu0 0.0
    %1656 = vmatpush1.msra.mxu0 0.0
    %1657 = vmatprep.subr.mxu0 0.0
    %1658 = vmatpush1.msra.mxu0 0.0
    %1659 = vmatprep.subr.mxu0 0.0
    %1660 = vmatpush1.msra.mxu0 0.0
    %1661 = vmatprep.subr.mxu0 0.0
    %1662 = vmatpush1.msra.mxu0 0.0
    %1663 = vmatprep.subr.mxu0 0.0
    %1664 = vmatpush1.msra.mxu0 0.0
    %1665 = vmatprep.subr.mxu0 0.0
    %1666 = vmatpush1.msra.mxu0 0.0
    %1667 = vmatprep.subr.mxu0 0.0
    %1668 = vmatpush1.msra.mxu0 0.0
    %1669 = vmatprep.subr.mxu0 0.0
    %1670 = vmatpush1.msra.mxu0 0.0
    %1671 = vmatprep.subr.mxu0 0.0
    %1672 = vmatpush1.msra.mxu0 0.0
    %1673 = vmatprep.subr.mxu0 0.0
    %1674 = vmatpush1.msra.mxu0 0.0
    %1675 = vmatprep.subr.mxu0 0.0
    %1676 = vmatpush1.msra.mxu0 0.0
    %1677 = vmatprep.subr.mxu0 0.0
    %1678 = vmatpush1.msra.mxu0 0.0
    %1679 = vmatprep.subr.mxu0 0.0
    %1680 = vmatpush1.msra.mxu0 %v1203
    %1681 = vmatprep.subr.mxu0 0.0
    %1682 = vmatpush2.msra.mxu0 0.0
    %1683 = vmatprep.subr.mxu0 0.0
    %1684 = vmatpush2.msra.mxu0 0.0
    %1685 = vmatprep.subr.mxu0 0.0
    %1686 = vmatpush2.msra.mxu0 0.0
    %1687 = vmatprep.subr.mxu0 0.0
    %1688 = vmatpush2.msra.mxu0 0.0
    %1689 = vmatprep.subr.mxu0 0.0
    %1690 = vmatpush2.msra.mxu0 0.0
    %1691 = vmatprep.subr.mxu0 0.0
    %1692 = vmatpush2.msra.mxu0 0.0
    %1693 = vmatprep.subr.mxu0 0.0
    %1694 = vmatpush2.msra.mxu0 0.0
    %1695 = vmatprep.subr.mxu0 0.0
    %1696 = vmatpush2.msra.mxu0 0.0
    %1697 = vmatprep.subr.mxu0 0.0
    %1698 = vmatpush2.msra.mxu0 0.0
    %1699 = vmatprep.subr.mxu0 0.0
    %1700 = vmatpush2.msra.mxu0 0.0
    %1701 = vmatprep.subr.mxu0 0.0
    %1702 = vmatpush2.msra.mxu0 0.0
    %1703 = vmatprep.subr.mxu0 0.0
    %1704 = vmatpush2.msra.mxu0 0.0
    %1705 = vmatprep.subr.mxu0 0.0
    %1706 = vmatpush2.msra.mxu0 0.0
    %1707 = vmatprep.subr.mxu0 0.0
    %1708 = vmatpush2.msra.mxu0 0.0
    %1709 = vmatprep.subr.mxu0 0.0
    %1710 = vmatpush2.msra.mxu0 0.0
    %1711 = vmatprep.subr.mxu0 0.0
    %1712 = vmatpush2.msra.mxu0 0.0
    %1713 = vmatprep.mubr.f32.mxu0 0.0
    %1714 = vmatmul.mubr.f32.gmra.mxu0 %v1569
    %v1715 = vpop.f32.mrf.mxu0
    %v1716 = vadd.f32 0.0, %v1715
    %v1717 = vpop.f32.mrf.mxu0
    %1718 = vdwg.mxu0
    %v1720 = vsel %vm586, %v1716, 0
    %1722 = vmatprep.subr.mxu0 0.0
    %1723 = vmatpush1.msra.mxu0 0.0
    %1724 = vmatprep.subr.mxu0 0.0
    %1725 = vmatpush1.msra.mxu0 0.0
    %1726 = vmatprep.subr.mxu0 0.0
    %1727 = vmatpush1.msra.mxu0 0.0
    %1728 = vmatprep.subr.mxu0 0.0
    %1729 = vmatpush1.msra.mxu0 0.0
    %1730 = vmatprep.subr.mxu0 0.0
    %1731 = vmatpush1.msra.mxu0 0.0
    %1732 = vmatprep.subr.mxu0 0.0
    %1733 = vmatpush1.msra.mxu0 0.0
    %1734 = vmatprep.subr.mxu0 0.0
    %1735 = vmatpush1.msra.mxu0 0.0
    %1736 = vmatprep.subr.mxu0 0.0
    %1737 = vmatpush1.msra.mxu0 0.0
    %1738 = vmatprep.subr.mxu0 0.0
    %1739 = vmatpush1.msra.mxu0 0.0
    %1740 = vmatprep.subr.mxu0 0.0
    %1741 = vmatpush1.msra.mxu0 0.0
    %1742 = vmatprep.subr.mxu0 0.0
    %1743 = vmatpush1.msra.mxu0 0.0
    %1744 = vmatprep.subr.mxu0 0.0
    %1745 = vmatpush1.msra.mxu0 0.0
    %1746 = vmatprep.subr.mxu0 0.0
    %1747 = vmatpush1.msra.mxu0 0.0
    %1748 = vmatprep.subr.mxu0 0.0
    %1749 = vmatpush1.msra.mxu0 0.0
    %1750 = vmatprep.subr.mxu0 0.0
    %1751 = vmatpush1.msra.mxu0 0.0
    %1752 = vmatprep.subr.mxu0 0.0
    %1753 = vmatpush1.msra.mxu0 %v1535
    %1754 = vmatprep.subr.mxu0 0.0
    %1755 = vmatpush2.msra.mxu0 0.0
    %1756 = vmatprep.subr.mxu0 0.0
    %1757 = vmatpush2.msra.mxu0 0.0
    %1758 = vmatprep.subr.mxu0 0.0
    %1759 = vmatpush2.msra.mxu0 0.0
    %1760 = vmatprep.subr.mxu0 0.0
    %1761 = vmatpush2.msra.mxu0 0.0
    %1762 = vmatprep.subr.mxu0 0.0
    %1763 = vmatpush2.msra.mxu0 0.0
    %1764 = vmatprep.subr.mxu0 0.0
    %1765 = vmatpush2.msra.mxu0 0.0
    %1766 = vmatprep.subr.mxu0 0.0
    %1767 = vmatpush2.msra.mxu0 0.0
    %1768 = vmatprep.subr.mxu0 0.0
    %1769 = vmatpush2.msra.mxu0 0.0
    %1770 = vmatprep.subr.mxu0 0.0
    %1771 = vmatpush2.msra.mxu0 0.0
    %1772 = vmatprep.subr.mxu0 0.0
    %1773 = vmatpush2.msra.mxu0 0.0
    %1774 = vmatprep.subr.mxu0 0.0
    %1775 = vmatpush2.msra.mxu0 0.0
    %1776 = vmatprep.subr.mxu0 0.0
    %1777 = vmatpush2.msra.mxu0 0.0
    %1778 = vmatprep.subr.mxu0 0.0
    %1779 = vmatpush2.msra.mxu0 0.0
    %1780 = vmatprep.subr.mxu0 0.0
    %1781 = vmatpush2.msra.mxu0 0.0
    %1782 = vmatprep.subr.mxu0 0.0
    %1783 = vmatpush2.msra.mxu0 0.0
    %1784 = vmatprep.subr.mxu0 0.0
    %1785 = vmatpush2.msra.mxu0 0.0
    %1786 = vmatprep.mubr.f32.mxu0 0.0
    %1787 = vmatmul.mubr.f32.gmra.mxu0 %v1720
    %v1788 = vpop.f32.mrf.mxu0
    %v1789 = vadd.f32 0.0, %v1788
    %v1790 = vpop.f32.mrf.mxu0
    %1791 = vdwg.mxu0
    %v1792 = vsel %vm586, %v1203, 0.0
    %1793 = vadd.xlane.f32.xlu0 %v1792
    %v1794 = vpop.xlane.xlu0 %1793
    %v1795 = vsel %vm906, %v1794, 0.0
    %1796 = vadd.xlane.f32.xlu0 %v1795
    %v1797 = vpop.xlane.xlu0 %1796
    %v1798 = vrot.slane %v1797, 4
    %v1799 = vadd.f32 %v1797, %v1798
    %v1800 = vrot.slane %v1799, 2
    %v1801 = vadd.f32 %v1799, %v1800
    %v1802 = vrot.slane %v1801, 1
    %v1803 = vadd.f32 %v1801, %v1802
    %s1804 = vtos %v1803
    %v1805 = vstv %s1804
    %v1806 = vmax.f32 %v1805, 1e-15
    %v1807 = vrcp.pop %v1806
    %1808 = vmatprep.subr.mxu0 0.0
    %1809 = vmatpush1.msra.mxu0 0.0
    %1810 = vmatprep.subr.mxu0 0.0
    %1811 = vmatpush1.msra.mxu0 0.0
    %1812 = vmatprep.subr.mxu0 0.0
    %1813 = vmatpush1.msra.mxu0 0.0
    %1814 = vmatprep.subr.mxu0 0.0
    %1815 = vmatpush1.msra.mxu0 0.0
    %1816 = vmatprep.subr.mxu0 0.0
    %1817 = vmatpush1.msra.mxu0 0.0
    %1818 = vmatprep.subr.mxu0 0.0
    %1819 = vmatpush1.msra.mxu0 0.0
    %1820 = vmatprep.subr.mxu0 0.0
    %1821 = vmatpush1.msra.mxu0 0.0
    %1822 = vmatprep.subr.mxu0 0.0
    %1823 = vmatpush1.msra.mxu0 0.0
    %1824 = vmatprep.subr.mxu0 0.0
    %1825 = vmatpush1.msra.mxu0 0.0
    %1826 = vmatprep.subr.mxu0 0.0
    %1827 = vmatpush1.msra.mxu0 0.0
    %1828 = vmatprep.subr.mxu0 0.0
    %1829 = vmatpush1.msra.mxu0 0.0
    %1830 = vmatprep.subr.mxu0 0.0
    %1831 = vmatpush1.msra.mxu0 0.0
    %1832 = vmatprep.subr.mxu0 0.0
    %1833 = vmatpush1.msra.mxu0 0.0
    %1834 = vmatprep.subr.mxu0 0.0
    %1835 = vmatpush1.msra.mxu0 0.0
    %1836 = vmatprep.subr.mxu0 0.0
    %1837 = vmatpush1.msra.mxu0 0.0
    %1838 = vmatprep.subr.mxu0 0.0
    %1839 = vmatpush1.msra.mxu0 %v1794
    %1840 = vmatprep.subr.mxu0 0.0
    %1841 = vmatpush2.msra.mxu0 0.0
    %1842 = vmatprep.subr.mxu0 0.0
    %1843 = vmatpush2.msra.mxu0 0.0
    %1844 = vmatprep.subr.mxu0 0.0
    %1845 = vmatpush2.msra.mxu0 0.0
    %1846 = vmatprep.subr.mxu0 0.0
    %1847 = vmatpush2.msra.mxu0 0.0
    %1848 = vmatprep.subr.mxu0 0.0
    %1849 = vmatpush2.msra.mxu0 0.0
    %1850 = vmatprep.subr.mxu0 0.0
    %1851 = vmatpush2.msra.mxu0 0.0
    %1852 = vmatprep.subr.mxu0 0.0
    %1853 = vmatpush2.msra.mxu0 0.0
    %1854 = vmatprep.subr.mxu0 0.0
    %1855 = vmatpush2.msra.mxu0 0.0
    %1856 = vmatprep.subr.mxu0 0.0
    %1857 = vmatpush2.msra.mxu0 0.0
    %1858 = vmatprep.subr.mxu0 0.0
    %1859 = vmatpush2.msra.mxu0 0.0
    %1860 = vmatprep.subr.mxu0 0.0
    %1861 = vmatpush2.msra.mxu0 0.0
    %1862 = vmatprep.subr.mxu0 0.0
    %1863 = vmatpush2.msra.mxu0 0.0
    %1864 = vmatprep.subr.mxu0 0.0
    %1865 = vmatpush2.msra.mxu0 0.0
    %1866 = vmatprep.subr.mxu0 0.0
    %1867 = vmatpush2.msra.mxu0 0.0
    %1868 = vmatprep.subr.mxu0 0.0
    %1869 = vmatpush2.msra.mxu0 0.0
    %1870 = vmatprep.subr.mxu0 0.0
    %1871 = vmatpush2.msra.mxu0 0.0
    %1872 = vmatprep.mubr.f32.mxu0 0.0
    %1873 = vmatmul.mubr.f32.gmra.mxu0 %v1569
    %v1874 = vpop.f32.mrf.mxu0
    %v1875 = vadd.f32 0.0, %v1874
    %v1876 = vpop.f32.mrf.mxu0
    %1877 = vdwg.mxu0
    %v1878 = vmul.f32 %v1789, %v896
    %vm1879 = vcmask 27648
    %v1880 = vsel %vm1879, %v1878, 0.0
    %1881 = vadd.xlane.f32.xlu0 %v1880
    %v1882 = vpop.xlane.xlu0 %1881
    %v1883 = vrot.slane %v1882, 4
    %v1884 = vadd.f32 %v1882, %v1883
    %v1885 = vrot.slane %v1884, 2
    %v1886 = vadd.f32 %v1884, %v1885
    %v1887 = vrot.slane %v1886, 1
    %v1888 = vadd.f32 %v1886, %v1887
    %s1889 = vtos %v1888
    %v1890 = vstv %s1889
    %v1891 = vmul.f32 %v1875, %v1875
    %v1892 = vsel %vm908, %v1891, 0.0
    %1893 = vadd.xlane.f32.xlu0 %v1892
    %v1894 = vpop.xlane.xlu0 %1893
    %v1895 = vrot.slane %v1894, 4
    %v1896 = vadd.f32 %v1894, %v1895
    %v1897 = vrot.slane %v1896, 2
    %v1898 = vadd.f32 %v1896, %v1897
    %v1899 = vrot.slane %v1898, 1
    %v1900 = vadd.f32 %v1898, %v1899
    %s1901 = vtos %v1900
    %v1902 = vstv %s1901
    %v1903 = vmul.f32 %v1902, %v1807
    %v1904 = vsub.f32 %v1890, %v1903
    %v1905 = vsub.f32 0.0, %v1904
    %v1906 = vmul.f32 %v1905, %v1807
    %1907 = vmatprep.subr.mxu0 0.0
    %1908 = vmatpush1.msra.mxu0 0.0
    %1909 = vmatprep.subr.mxu0 0.0
    %1910 = vmatpush1.msra.mxu0 0.0
    %1911 = vmatprep.subr.mxu0 0.0
    %1912 = vmatpush1.msra.mxu0 0.0
    %1913 = vmatprep.subr.mxu0 0.0
    %1914 = vmatpush1.msra.mxu0 0.0
    %1915 = vmatprep.subr.mxu0 0.0
    %1916 = vmatpush1.msra.mxu0 0.0
    %1917 = vmatprep.subr.mxu0 0.0
    %1918 = vmatpush1.msra.mxu0 0.0
    %1919 = vmatprep.subr.mxu0 0.0
    %1920 = vmatpush1.msra.mxu0 0.0
    %1921 = vmatprep.subr.mxu0 0.0
    %1922 = vmatpush1.msra.mxu0 0.0
    %1923 = vmatprep.subr.mxu0 0.0
    %1924 = vmatpush1.msra.mxu0 0.0
    %1925 = vmatprep.subr.mxu0 0.0
    %1926 = vmatpush1.msra.mxu0 0.0
    %1927 = vmatprep.subr.mxu0 0.0
    %1928 = vmatpush1.msra.mxu0 0.0
    %1929 = vmatprep.subr.mxu0 0.0
    %1930 = vmatpush1.msra.mxu0 0.0
    %1931 = vmatprep.subr.mxu0 0.0
    %1932 = vmatpush1.msra.mxu0 0.0
    %1933 = vmatprep.subr.mxu0 0.0
    %1934 = vmatpush1.msra.mxu0 0.0
    %1935 = vmatprep.subr.mxu0 0.0
    %1936 = vmatpush1.msra.mxu0 0.0
    %1937 = vmatprep.subr.mxu0 0.0
    %1938 = vmatpush1.msra.mxu0 %v1535
    %1939 = vmatprep.subr.mxu0 0.0
    %1940 = vmatpush2.msra.mxu0 0.0
    %1941 = vmatprep.subr.mxu0 0.0
    %1942 = vmatpush2.msra.mxu0 0.0
    %1943 = vmatprep.subr.mxu0 0.0
    %1944 = vmatpush2.msra.mxu0 0.0
    %1945 = vmatprep.subr.mxu0 0.0
    %1946 = vmatpush2.msra.mxu0 0.0
    %1947 = vmatprep.subr.mxu0 0.0
    %1948 = vmatpush2.msra.mxu0 0.0
    %1949 = vmatprep.subr.mxu0 0.0
    %1950 = vmatpush2.msra.mxu0 0.0
    %1951 = vmatprep.subr.mxu0 0.0
    %1952 = vmatpush2.msra.mxu0 0.0
    %1953 = vmatprep.subr.mxu0 0.0
    %1954 = vmatpush2.msra.mxu0 0.0
    %1955 = vmatprep.subr.mxu0 0.0
    %1956 = vmatpush2.msra.mxu0 0.0
    %1957 = vmatprep.subr.mxu0 0.0
    %1958 = vmatpush2.msra.mxu0 0.0
    %1959 = vmatprep.subr.mxu0 0.0
    %1960 = vmatpush2.msra.mxu0 0.0
    %1961 = vmatprep.subr.mxu0 0.0
    %1962 = vmatpush2.msra.mxu0 0.0
    %1963 = vmatprep.subr.mxu0 0.0
    %1964 = vmatpush2.msra.mxu0 0.0
    %1965 = vmatprep.subr.mxu0 0.0
    %1966 = vmatpush2.msra.mxu0 0.0
    %1967 = vmatprep.subr.mxu0 0.0
    %1968 = vmatpush2.msra.mxu0 0.0
    %1969 = vmatprep.subr.mxu0 0.0
    %1970 = vmatpush2.msra.mxu0 0.0
    %1971 = vmatprep.mubr.f32.mxu0 0.0
    %1972 = vmatmul.mubr.f32.gmra.mxu0 %v1569
    %v1973 = vpop.f32.mrf.mxu0
    %v1974 = vadd.f32 0.0, %v1973
    %v1975 = vpop.f32.mrf.mxu0
    %1976 = vdwg.mxu0
    %v1977 = vmul.f32 %v1974, %v1974
    %v1978 = vsel %vm1879, %v1977, 0.0
    %1979 = vadd.xlane.f32.xlu0 %v1978
    %v1980 = vpop.xlane.xlu0 %1979
    %v1981 = vrot.slane %v1980, 4
    %v1982 = vadd.f32 %v1980, %v1981
    %v1983 = vrot.slane %v1982, 2
    %v1984 = vadd.f32 %v1982, %v1983
    %v1985 = vrot.slane %v1984, 1
    %v1986 = vadd.f32 %v1984, %v1985
    %s1987 = vtos %v1986
    %v1988 = vstv %s1987
    %v1989 = vmax.f32 %v1988, 1e-15
    %v1990 = vrsqrt.pop %v1989
    %v1991 = vmul.f32 %v1974, %v1990
    %v1992 = vmul.f32 %v896, 0.5
    %v1993 = vsub.f32 %v1991, %v1992
    %v1994 = vmul.f32 %v1993, %v1993
    %v1995 = vsel %vm1879, %v1994, 0.0
    %1996 = vadd.xlane.f32.xlu0 %v1995
    %v1997 = vpop.xlane.xlu0 %1996
    %v1998 = vrot.slane %v1997, 4
    %v1999 = vadd.f32 %v1997, %v1998
    %v2000 = vrot.slane %v1999, 2
    %v2001 = vadd.f32 %v1999, %v2000
    %v2002 = vrot.slane %v2001, 1
    %v2003 = vadd.f32 %v2001, %v2002
    %s2004 = vtos %v2003
    %v2005 = vstv %s2004
    %v2006 = vrsqrt.pop %v2005
    %v2007 = vmul.f32 %v2005, %v2006
    %vm2008 = vcmp.eq.f32.partialorder %v2005, inf
    %v2009 = vsel %vm2008, %v2005, %v2007
    %vm2010 = vcmp.eq.f32.partialorder %v2005, 0.0
    %v2011 = vand.u32 %v2005, 2147483648
    %v2012 = vsel %vm2010, %v2011, %v2009
    %v2013 = vsel %vm186, %v1535, 0.0
    %v2014 = vrot.slane %v2013, 4
    %v2015 = vadd.f32 %v2013, %v2014
    %v2016 = vrot.slane %v2015, 2
    %v2017 = vadd.f32 %v2015, %v2016
    %v2018 = vrot.slane %v2017, 1
    %v2019 = vadd.f32 %v2017, %v2018
    %v2020 = vmul.f32 %v2019, %v2019
    %vm2021 = vcmask 24576
    %v2022 = vsel %vm2021, %v2020, 0.0
    %2023 = vadd.xlane.f32.xlu0 %v2022
    %v2024 = vpop.xlane.xlu0 %2023
    %v2025 = vrot.slane %v2024, 4
    %v2026 = vadd.f32 %v2024, %v2025
    %v2027 = vrot.slane %v2026, 2
    %v2028 = vadd.f32 %v2026, %v2027
    %v2029 = vrot.slane %v2028, 1
    %v2030 = vadd.f32 %v2028, %v2029
    %s2031 = vtos %v2030
    %v2032 = vstv %s2031
    %v2033 = vrsqrt.pop %v2032
    %v2034 = vmul.f32 %v2032, %v2033
    %vm2035 = vcmp.eq.f32.partialorder %v2032, inf
    %v2036 = vsel %vm2035, %v2032, %v2034
    %vm2037 = vcmp.eq.f32.partialorder %v2032, 0.0
    %v2038 = vand.u32 %v2032, 2147483648
    %v2039 = vsel %vm2037, %v2038, %v2036
    %v2040 = vmul.f32 %v1789, %v1173
    %v2041 = vsel %vm1879, %v2040, 0.0
    %2042 = vadd.xlane.f32.xlu0 %v2041
    %v2043 = vpop.xlane.xlu0 %2042
    %v2044 = vrot.slane %v2041, 4
    %v2045 = vadd.f32 %v2041, %v2044
    %v2046 = vrot.slane %v2045, 2
    %v2047 = vadd.f32 %v2045, %v2046
    %v2048 = vrot.slane %v2047, 1
    %v2049 = vadd.f32 %v2047, %v2048
    %v2050 = vrsqrt.pop %v2043
    %v2051 = vmul.f32 %v2043, %v2050
    %vm2052 = vcmp.eq.f32.partialorder %v2043, inf
    %v2053 = vsel %vm2052, %v2043, %v2051
    %vm2054 = vcmp.eq.f32.partialorder %v2043, 0.0
    %v2055 = vand.u32 %v2043, 2147483648
    %v2056 = vsel %vm2054, %v2055, %v2053
    %v2057 = vadd.f32 %v2056, 1e-15
    %v2058 = vrcp.pop %v2057
    %v2059 = vmul.f32 %v2040, %v2058
    %v2060 = vrsqrt.pop %v2049
    %v2061 = vmul.f32 %v2049, %v2060
    %vm2062 = vcmp.eq.f32.partialorder %v2049, inf
    %v2063 = vsel %vm2062, %v2049, %v2061
    %vm2064 = vcmp.eq.f32.partialorder %v2049, 0.0
    %v2065 = vand.u32 %v2049, 2147483648
    %v2066 = vsel %vm2064, %v2065, %v2063
    %v2067 = vadd.f32 %v2066, 1e-15
    %v2068 = vrcp.pop %v2067
    %v2069 = vmul.f32 %v2059, %v2068
    %v2070 = vadd.f32 %v1906, 0.0
    %v2071 = vadd.f32 %v2012, 0.0
    %v2072 = vadd.f32 %v2039, 0.0
    %v2074 = vsel %vm186, %v2069, 0
    %v2077 = vsel %vm196, %v1648, 0
    %2079 = vmatprep.subr.mxu0 0.0
    %2080 = vmatpush1.msra.mxu0 0.0
    %2081 = vmatprep.subr.mxu0 0.0
    %2082 = vmatpush1.msra.mxu0 0.0
    %2083 = vmatprep.subr.mxu0 0.0
    %2084 = vmatpush1.msra.mxu0 0.0
    %2085 = vmatprep.subr.mxu0 0.0
    %2086 = vmatpush1.msra.mxu0 0.0
    %2087 = vmatprep.subr.mxu0 0.0
    %2088 = vmatpush1.msra.mxu0 0.0
    %2089 = vmatprep.subr.mxu0 0.0
    %2090 = vmatpush1.msra.mxu0 0.0
    %2091 = vmatprep.subr.mxu0 0.0
    %2092 = vmatpush1.msra.mxu0 0.0
    %2093 = vmatprep.subr.mxu0 0.0
    %2094 = vmatpush1.msra.mxu0 0.0
    %2095 = vmatprep.subr.mxu0 0.0
    %2096 = vmatpush1.msra.mxu0 0.0
    %2097 = vmatprep.subr.mxu0 0.0
    %2098 = vmatpush1.msra.mxu0 0.0
    %2099 = vmatprep.subr.mxu0 0.0
    %2100 = vmatpush1.msra.mxu0 0.0
    %2101 = vmatprep.subr.mxu0 0.0
    %2102 = vmatpush1.msra.mxu0 0.0
    %2103 = vmatprep.subr.mxu0 0.0
    %2104 = vmatpush1.msra.mxu0 0.0
    %2105 = vmatprep.subr.mxu0 0.0
    %2106 = vmatpush1.msra.mxu0 0.0
    %2107 = vmatprep.subr.mxu0 0.0
    %2108 = vmatpush1.msra.mxu0 0.0
    %2109 = vmatprep.subr.mxu0 0.0
    %2110 = vmatpush1.msra.mxu0 %v2077
    %2111 = vmatprep.subr.mxu0 0.0
    %2112 = vmatpush2.msra.mxu0 0.0
    %2113 = vmatprep.subr.mxu0 0.0
    %2114 = vmatpush2.msra.mxu0 0.0
    %2115 = vmatprep.subr.mxu0 0.0
    %2116 = vmatpush2.msra.mxu0 0.0
    %2117 = vmatprep.subr.mxu0 0.0
    %2118 = vmatpush2.msra.mxu0 0.0
    %2119 = vmatprep.subr.mxu0 0.0
    %2120 = vmatpush2.msra.mxu0 0.0
    %2121 = vmatprep.subr.mxu0 0.0
    %2122 = vmatpush2.msra.mxu0 0.0
    %2123 = vmatprep.subr.mxu0 0.0
    %2124 = vmatpush2.msra.mxu0 0.0
    %2125 = vmatprep.subr.mxu0 0.0
    %2126 = vmatpush2.msra.mxu0 0.0
    %2127 = vmatprep.subr.mxu0 0.0
    %2128 = vmatpush2.msra.mxu0 0.0
    %2129 = vmatprep.subr.mxu0 0.0
    %2130 = vmatpush2.msra.mxu0 0.0
    %2131 = vmatprep.subr.mxu0 0.0
    %2132 = vmatpush2.msra.mxu0 0.0
    %2133 = vmatprep.subr.mxu0 0.0
    %2134 = vmatpush2.msra.mxu0 0.0
    %2135 = vmatprep.subr.mxu0 0.0
    %2136 = vmatpush2.msra.mxu0 0.0
    %2137 = vmatprep.subr.mxu0 0.0
    %2138 = vmatpush2.msra.mxu0 0.0
    %2139 = vmatprep.subr.mxu0 0.0
    %2140 = vmatpush2.msra.mxu0 0.0
    %2141 = vmatprep.subr.mxu0 0.0
    %2142 = vmatpush2.msra.mxu0 0.0
    %2143 = vmatprep.mubr.f32.mxu0 0.0
    %2144 = vmatmul.mubr.f32.gmra.mxu0 %v2074
    %v2145 = vpop.f32.mrf.mxu0
    %v2146 = vadd.f32 0.0, %v2145
    %v2147 = vpop.f32.mrf.mxu0
    %2148 = vdwg.mxu0
    %2149 = vrot.lane.b32.xlu0 %v1648, 32
    %v2150 = vpop.permute.xlu0 %2149
    %v2152 = vsel %vm417, %v2146, %v2150
    %v2154 = vlaneseq
    %v2155 = vshrl.u32 %v2154, 7
    %v2156 = vsub.s32 0, %v2155
    %v2157 = vrot.slane %v320, %v2156
    %v2160 = vsel %vm1292, %v2152, 0
    %2162 = vmatprep.subr.mxu0 0.0
    %2163 = vmatpush1.msra.mxu0 0.0
    %2164 = vmatprep.subr.mxu0 0.0
    %2165 = vmatpush1.msra.mxu0 0.0
    %2166 = vmatprep.subr.mxu0 0.0
    %2167 = vmatpush1.msra.mxu0 0.0
    %2168 = vmatprep.subr.mxu0 0.0
    %2169 = vmatpush1.msra.mxu0 0.0
    %2170 = vmatprep.subr.mxu0 0.0
    %2171 = vmatpush1.msra.mxu0 0.0
    %2172 = vmatprep.subr.mxu0 0.0
    %2173 = vmatpush1.msra.mxu0 0.0
    %2174 = vmatprep.subr.mxu0 0.0
    %2175 = vmatpush1.msra.mxu0 0.0
    %2176 = vmatprep.subr.mxu0 0.0
    %2177 = vmatpush1.msra.mxu0 0.0
    %2178 = vmatprep.subr.mxu0 0.0
    %2179 = vmatpush1.msra.mxu0 %v319
    %2180 = vmatprep.subr.mxu0 0.0
    %2181 = vmatpush1.msra.mxu0 %v318
    %2182 = vmatprep.subr.mxu0 0.0
    %2183 = vmatpush1.msra.mxu0 %v317
    %2184 = vmatprep.subr.mxu0 0.0
    %2185 = vmatpush1.msra.mxu0 %v316
    %2186 = vmatprep.subr.mxu0 0.0
    %2187 = vmatpush1.msra.mxu0 %v315
    %2188 = vmatprep.subr.mxu0 0.0
    %2189 = vmatpush1.msra.mxu0 %v314
    %2190 = vmatprep.subr.mxu0 0.0
    %2191 = vmatpush1.msra.mxu0 %v313
    %2192 = vmatprep.subr.mxu0 0.0
    %2193 = vmatpush1.msra.mxu0 %v312
    %2194 = vmatprep.subr.mxu0 0.0
    %2195 = vmatpush2.msra.mxu0 0.0
    %2196 = vmatprep.subr.mxu0 0.0
    %2197 = vmatpush2.msra.mxu0 0.0
    %2198 = vmatprep.subr.mxu0 0.0
    %2199 = vmatpush2.msra.mxu0 0.0
    %2200 = vmatprep.subr.mxu0 0.0
    %2201 = vmatpush2.msra.mxu0 0.0
    %2202 = vmatprep.subr.mxu0 0.0
    %2203 = vmatpush2.msra.mxu0 0.0
    %2204 = vmatprep.subr.mxu0 0.0
    %2205 = vmatpush2.msra.mxu0 0.0
    %2206 = vmatprep.subr.mxu0 0.0
    %2207 = vmatpush2.msra.mxu0 0.0
    %2208 = vmatprep.subr.mxu0 0.0
    %2209 = vmatpush2.msra.mxu0 0.0
    %2210 = vmatprep.subr.mxu0 0.0
    %2211 = vmatpush2.msra.mxu0 0.0
    %2212 = vmatprep.subr.mxu0 0.0
    %2213 = vmatpush2.msra.mxu0 0.0
    %2214 = vmatprep.subr.mxu0 0.0
    %2215 = vmatpush2.msra.mxu0 0.0
    %2216 = vmatprep.subr.mxu0 0.0
    %2217 = vmatpush2.msra.mxu0 0.0
    %2218 = vmatprep.subr.mxu0 0.0
    %2219 = vmatpush2.msra.mxu0 0.0
    %2220 = vmatprep.subr.mxu0 0.0
    %2221 = vmatpush2.msra.mxu0 0.0
    %2222 = vmatprep.subr.mxu0 0.0
    %2223 = vmatpush2.msra.mxu0 0.0
    %2224 = vmatprep.subr.mxu0 0.0
    %2225 = vmatpush2.msra.mxu0 0.0
    %2226 = vmatprep.mubr.f32.mxu0 0.0
    %2227 = vmatmul.mubr.f32.gmra.mxu0 %v2160
    %v2228 = vpop.f32.mrf.mxu0
    %v2229 = vadd.f32 %v2157, %v2228
    %v2230 = vpop.f32.mrf.mxu0
    %2231 = vdwg.mxu0
    %vm2232 = vcmask 257024
    %v2233 = vsel %vm2232, %v2229, 0.0
    %v2234 = vrot.slane %v2233, 4
    %v2235 = vadd.f32 %v2233, %v2234
    %v2236 = vrot.slane %v2235, 2
    %v2237 = vadd.f32 %v2235, %v2236
    %v2238 = vrot.slane %v2237, 1
    %v2239 = vadd.f32 %v2237, %v2238
    %v2240 = vmul.f32 %v2239, 0.25
    %s2241 = scalar_lea.vmem %s2, 16
    %v2242 = vld [vmem:[%s2241] sm:$0xff]
    %v2243 = vld [vmem:[%s2241 + $0x8] sm:$0xf]
    %v2245 = vsel %vm84, %v2242, 0
    %v2248 = vsel %vm84, %v2243, 0
    %2250 = vmatprep.subr.mxu0 0.0
    %2251 = vmatpush1.msra.mxu0 0.0
    %2252 = vmatprep.subr.mxu0 0.0
    %2253 = vmatpush1.msra.mxu0 0.0
    %2254 = vmatprep.subr.mxu0 0.0
    %2255 = vmatpush1.msra.mxu0 0.0
    %2256 = vmatprep.subr.mxu0 0.0
    %2257 = vmatpush1.msra.mxu0 0.0
    %2258 = vmatprep.subr.mxu0 0.0
    %2259 = vmatpush1.msra.mxu0 0.0
    %2260 = vmatprep.subr.mxu0 0.0
    %2261 = vmatpush1.msra.mxu0 0.0
    %2262 = vmatprep.subr.mxu0 0.0
    %2263 = vmatpush1.msra.mxu0 0.0
    %2264 = vmatprep.subr.mxu0 0.0
    %2265 = vmatpush1.msra.mxu0 0.0
    %2266 = vmatprep.subr.mxu0 0.0
    %2267 = vmatpush1.msra.mxu0 0.0
    %2268 = vmatprep.subr.mxu0 0.0
    %2269 = vmatpush1.msra.mxu0 0.0
    %2270 = vmatprep.subr.mxu0 0.0
    %2271 = vmatpush1.msra.mxu0 0.0
    %2272 = vmatprep.subr.mxu0 0.0
    %2273 = vmatpush1.msra.mxu0 0.0
    %2274 = vmatprep.subr.mxu0 0.0
    %2275 = vmatpush1.msra.mxu0 0.0
    %2276 = vmatprep.subr.mxu0 0.0
    %2277 = vmatpush1.msra.mxu0 %v330
    %2278 = vmatprep.subr.mxu0 0.0
    %2279 = vmatpush1.msra.mxu0 %v281
    %2280 = vmatprep.subr.mxu0 0.0
    %2281 = vmatpush1.msra.mxu0 %v280
    %2282 = vmatprep.subr.mxu0 0.0
    %2283 = vmatpush2.msra.mxu0 0.0
    %2284 = vmatprep.subr.mxu0 0.0
    %2285 = vmatpush2.msra.mxu0 0.0
    %2286 = vmatprep.subr.mxu0 0.0
    %2287 = vmatpush2.msra.mxu0 0.0
    %2288 = vmatprep.subr.mxu0 0.0
    %2289 = vmatpush2.msra.mxu0 0.0
    %2290 = vmatprep.subr.mxu0 0.0
    %2291 = vmatpush2.msra.mxu0 0.0
    %2292 = vmatprep.subr.mxu0 0.0
    %2293 = vmatpush2.msra.mxu0 0.0
    %2294 = vmatprep.subr.mxu0 0.0
    %2295 = vmatpush2.msra.mxu0 0.0
    %2296 = vmatprep.subr.mxu0 0.0
    %2297 = vmatpush2.msra.mxu0 0.0
    %2298 = vmatprep.subr.mxu0 0.0
    %2299 = vmatpush2.msra.mxu0 0.0
    %2300 = vmatprep.subr.mxu0 0.0
    %2301 = vmatpush2.msra.mxu0 0.0
    %2302 = vmatprep.subr.mxu0 0.0
    %2303 = vmatpush2.msra.mxu0 0.0
    %2304 = vmatprep.subr.mxu0 0.0
    %2305 = vmatpush2.msra.mxu0 0.0
    %2306 = vmatprep.subr.mxu0 0.0
    %2307 = vmatpush2.msra.mxu0 0.0
    %2308 = vmatprep.subr.mxu0 0.0
    %2309 = vmatpush2.msra.mxu0 0.0
    %2310 = vmatprep.subr.mxu0 0.0
    %2311 = vmatpush2.msra.mxu0 0.0
    %2312 = vmatprep.subr.mxu0 0.0
    %2313 = vmatpush2.msra.mxu0 0.0
    %2314 = vmatprep.mubr.f32.mxu0 0.0
    %2315 = vmatmul.mubr.f32.gmra.mxu0 %v2245
    %v2316 = vpop.f32.mrf.mxu0
    %v2317 = vadd.f32 0.0, %v2316
    %v2318 = vpop.f32.mrf.mxu0
    %2319 = vmatprep.mubr.f32.mxu0 0.0
    %2320 = vmatmul.mubr.f32.gmra.mxu0 %v2248
    %v2321 = vpop.f32.mrf.mxu0
    %v2322 = vadd.f32 0.0, %v2321
    %v2323 = vpop.f32.mrf.mxu0
    %2324 = vdwg.mxu0
    %s2325 = scalar_lea.vmem %s3, 16
    %v2326 = vld [vmem:[%s2325] sm:$0xff]
    %v2327 = vld [vmem:[%s2325 + $0x8] sm:$0xf]
    %s2328 = scalar_lea.vmem %s4, 16
    %v2329 = vld [vmem:[%s2328] sm:$0xff]
    %v2330 = vld [vmem:[%s2328 + $0x8] sm:$0xf]
    %v2332 = vsel %vm417, %v2317, 0
    %v2335 = vsel %vm417, %v2322, 0
    %2337 = vmatprep.subr.mxu0 0.0
    %2338 = vmatpush1.msra.mxu0 0.0
    %2339 = vmatprep.subr.mxu0 0.0
    %2340 = vmatpush1.msra.mxu0 0.0
    %2341 = vmatprep.subr.mxu0 0.0
    %2342 = vmatpush1.msra.mxu0 0.0
    %2343 = vmatprep.subr.mxu0 0.0
    %2344 = vmatpush1.msra.mxu0 0.0
    %2345 = vmatprep.subr.mxu0 0.0
    %2346 = vmatpush1.msra.mxu0 0.0
    %2347 = vmatprep.subr.mxu0 0.0
    %2348 = vmatpush1.msra.mxu0 0.0
    %2349 = vmatprep.subr.mxu0 0.0
    %2350 = vmatpush1.msra.mxu0 0.0
    %2351 = vmatprep.subr.mxu0 0.0
    %2352 = vmatpush1.msra.mxu0 0.0
    %2353 = vmatprep.subr.mxu0 0.0
    %2354 = vmatpush1.msra.mxu0 0.0
    %2355 = vmatprep.subr.mxu0 0.0
    %2356 = vmatpush1.msra.mxu0 0.0
    %2357 = vmatprep.subr.mxu0 0.0
    %2358 = vmatpush1.msra.mxu0 0.0
    %2359 = vmatprep.subr.mxu0 0.0
    %2360 = vmatpush1.msra.mxu0 0.0
    %2361 = vmatprep.subr.mxu0 0.0
    %2362 = vmatpush1.msra.mxu0 %v286
    %2363 = vmatprep.subr.mxu0 0.0
    %2364 = vmatpush1.msra.mxu0 %v285
    %2365 = vmatprep.subr.mxu0 0.0
    %2366 = vmatpush1.msra.mxu0 %v284
    %2367 = vmatprep.subr.mxu0 0.0
    %2368 = vmatpush1.msra.mxu0 %v283
    %2369 = vmatprep.subr.mxu0 0.0
    %2370 = vmatpush2.msra.mxu0 0.0
    %2371 = vmatprep.subr.mxu0 0.0
    %2372 = vmatpush2.msra.mxu0 0.0
    %2373 = vmatprep.subr.mxu0 0.0
    %2374 = vmatpush2.msra.mxu0 0.0
    %2375 = vmatprep.subr.mxu0 0.0
    %2376 = vmatpush2.msra.mxu0 0.0
    %2377 = vmatprep.subr.mxu0 0.0
    %2378 = vmatpush2.msra.mxu0 0.0
    %2379 = vmatprep.subr.mxu0 0.0
    %2380 = vmatpush2.msra.mxu0 0.0
    %2381 = vmatprep.subr.mxu0 0.0
    %2382 = vmatpush2.msra.mxu0 0.0
    %2383 = vmatprep.subr.mxu0 0.0
    %2384 = vmatpush2.msra.mxu0 0.0
    %2385 = vmatprep.subr.mxu0 0.0
    %2386 = vmatpush2.msra.mxu0 0.0
    %2387 = vmatprep.subr.mxu0 0.0
    %2388 = vmatpush2.msra.mxu0 0.0
    %2389 = vmatprep.subr.mxu0 0.0
    %2390 = vmatpush2.msra.mxu0 0.0
    %2391 = vmatprep.subr.mxu0 0.0
    %2392 = vmatpush2.msra.mxu0 0.0
    %2393 = vmatprep.subr.mxu0 0.0
    %2394 = vmatpush2.msra.mxu0 0.0
    %2395 = vmatprep.subr.mxu0 0.0
    %2396 = vmatpush2.msra.mxu0 0.0
    %2397 = vmatprep.subr.mxu0 0.0
    %2398 = vmatpush2.msra.mxu0 0.0
    %2399 = vmatprep.subr.mxu0 0.0
    %2400 = vmatpush2.msra.mxu0 0.0
    %2401 = vmatprep.mubr.f32.mxu0 0.0
    %2402 = vmatmul.mubr.f32.gmra.mxu0 %v2332
    %v2403 = vpop.f32.mrf.mxu0
    %v2404 = vadd.f32 %v415, %v2403
    %v2405 = vpop.f32.mrf.mxu0
    %2406 = vmatprep.mubr.f32.mxu0 0.0
    %2407 = vmatmul.mubr.f32.gmra.mxu0 %v2335
    %v2408 = vpop.f32.mrf.mxu0
    %v2409 = vadd.f32 %v415, %v2408
    %v2410 = vpop.f32.mrf.mxu0
    %2411 = vdwg.mxu0
    %v2413 = vsel %vm417, %v2404, 0
    %v2416 = vsel %vm417, %v2409, 0
    %2418 = vmatprep.subr.mxu0 0.0
    %2419 = vmatpush1.msra.mxu0 0.0
    %2420 = vmatprep.subr.mxu0 0.0
    %2421 = vmatpush1.msra.mxu0 0.0
    %2422 = vmatprep.subr.mxu0 0.0
    %2423 = vmatpush1.msra.mxu0 0.0
    %2424 = vmatprep.subr.mxu0 0.0
    %2425 = vmatpush1.msra.mxu0 0.0
    %2426 = vmatprep.subr.mxu0 0.0
    %2427 = vmatpush1.msra.mxu0 0.0
    %2428 = vmatprep.subr.mxu0 0.0
    %2429 = vmatpush1.msra.mxu0 0.0
    %2430 = vmatprep.subr.mxu0 0.0
    %2431 = vmatpush1.msra.mxu0 0.0
    %2432 = vmatprep.subr.mxu0 0.0
    %2433 = vmatpush1.msra.mxu0 0.0
    %2434 = vmatprep.subr.mxu0 0.0
    %2435 = vmatpush1.msra.mxu0 0.0
    %2436 = vmatprep.subr.mxu0 0.0
    %2437 = vmatpush1.msra.mxu0 0.0
    %2438 = vmatprep.subr.mxu0 0.0
    %2439 = vmatpush1.msra.mxu0 0.0
    %2440 = vmatprep.subr.mxu0 0.0
    %2441 = vmatpush1.msra.mxu0 0.0
    %2442 = vmatprep.subr.mxu0 0.0
    %2443 = vmatpush1.msra.mxu0 %v291
    %2444 = vmatprep.subr.mxu0 0.0
    %2445 = vmatpush1.msra.mxu0 %v290
    %2446 = vmatprep.subr.mxu0 0.0
    %2447 = vmatpush1.msra.mxu0 %v289
    %2448 = vmatprep.subr.mxu0 0.0
    %2449 = vmatpush1.msra.mxu0 %v288
    %2450 = vmatprep.subr.mxu0 0.0
    %2451 = vmatpush2.msra.mxu0 0.0
    %2452 = vmatprep.subr.mxu0 0.0
    %2453 = vmatpush2.msra.mxu0 0.0
    %2454 = vmatprep.subr.mxu0 0.0
    %2455 = vmatpush2.msra.mxu0 0.0
    %2456 = vmatprep.subr.mxu0 0.0
    %2457 = vmatpush2.msra.mxu0 0.0
    %2458 = vmatprep.subr.mxu0 0.0
    %2459 = vmatpush2.msra.mxu0 0.0
    %2460 = vmatprep.subr.mxu0 0.0
    %2461 = vmatpush2.msra.mxu0 0.0
    %2462 = vmatprep.subr.mxu0 0.0
    %2463 = vmatpush2.msra.mxu0 0.0
    %2464 = vmatprep.subr.mxu0 0.0
    %2465 = vmatpush2.msra.mxu0 0.0
    %2466 = vmatprep.subr.mxu0 0.0
    %2467 = vmatpush2.msra.mxu0 0.0
    %2468 = vmatprep.subr.mxu0 0.0
    %2469 = vmatpush2.msra.mxu0 0.0
    %2470 = vmatprep.subr.mxu0 0.0
    %2471 = vmatpush2.msra.mxu0 0.0
    %2472 = vmatprep.subr.mxu0 0.0
    %2473 = vmatpush2.msra.mxu0 0.0
    %2474 = vmatprep.subr.mxu0 0.0
    %2475 = vmatpush2.msra.mxu0 0.0
    %2476 = vmatprep.subr.mxu0 0.0
    %2477 = vmatpush2.msra.mxu0 0.0
    %2478 = vmatprep.subr.mxu0 0.0
    %2479 = vmatpush2.msra.mxu0 0.0
    %2480 = vmatprep.subr.mxu0 0.0
    %2481 = vmatpush2.msra.mxu0 0.0
    %2482 = vmatprep.mubr.f32.mxu0 0.0
    %2483 = vmatmul.mubr.f32.gmra.mxu0 %v2413
    %v2484 = vpop.f32.mrf.mxu0
    %v2485 = vadd.f32 %v503, %v2484
    %v2486 = vpop.f32.mrf.mxu0
    %2487 = vmatprep.mubr.f32.mxu0 0.0
    %2488 = vmatmul.mubr.f32.gmra.mxu0 %v2416
    %v2489 = vpop.f32.mrf.mxu0
    %v2490 = vadd.f32 %v503, %v2489
    %v2491 = vpop.f32.mrf.mxu0
    %2492 = vdwg.mxu0
    %v2493 = vsel %vm586, %v2485, -inf
    %2494 = vmax.xlane.f32.xlu0 %v2493
    %v2495 = vpop.xlane.xlu0 %2494
    %v2496 = vsel %vm590, %v2490, -inf
    %2497 = vmax.xlane.f32.xlu0 %v2496
    %v2498 = vpop.xlane.xlu0 %2497
    %v2499 = vsub.f32 %v2485, %v2495
    %v2500 = vsub.f32 %v2490, %v2498
    %v2501 = vmul.f32 %v2499, 1.442695
    %v2502 = vpow.pop %v2501
    %v2503 = vmul.f32 %v2500, 1.442695
    %v2504 = vpow.pop %v2503
    %v2505 = vsel %vm586, %v2502, 0.0
    %2506 = vadd.xlane.f32.xlu0 %v2505
    %v2507 = vpop.xlane.xlu0 %2506
    %v2508 = vsel %vm590, %v2504, 0.0
    %2509 = vadd.xlane.f32.xlu0 %v2508
    %v2510 = vpop.xlane.xlu0 %2509
    %v2511 = vrcp.pop %v2507
    %v2512 = vrcp.pop %v2510
    %v2513 = vmul.f32 %v2502, %v2511
    %v2514 = vmul.f32 %v2504, %v2512
    %2516 = vset.pattern.permute.xlu0 0
    %2517 = vperm.xlu0 %2516, %v2329
    %v2518 = vpop.permute.xlu0 %2517
    %2521 = vset.pattern.permute.xlu0 0
    %2522 = vperm.xlu0 %2521, %v2330
    %v2523 = vpop.permute.xlu0 %2522
    %v2525 = vmul.f32 %v2317, %v2518
    %v2526 = vmul.f32 %v2322, %v2523
    %v2527 = vmul.f32 %v2513, %v2518
    %v2528 = vmul.f32 %v2514, %v2523
    %2529 = vxpose.xlu0.b32.start [1/16] %v2527, 128
    %2530 = vxpose.xlu0.b32.cont [2/16] %v2528, 128
    %2531 = vxpose.xlu0.b32.cont [3/16] 0.0, 128
    %2532 = vxpose.xlu0.b32.cont [4/16] 0.0, 128
    %2533 = vxpose.xlu0.b32.cont [5/16] 0.0, 128
    %2534 = vxpose.xlu0.b32.cont [6/16] 0.0, 128
    %2535 = vxpose.xlu0.b32.cont [7/16] 0.0, 128
    %2536 = vxpose.xlu0.b32.cont [8/16] 0.0, 128
    %2537 = vxpose.xlu0.b32.cont [9/16] 0.0, 128
    %2538 = vxpose.xlu0.b32.cont [10/16] 0.0, 128
    %2539 = vxpose.xlu0.b32.cont [11/16] 0.0, 128
    %2540 = vxpose.xlu0.b32.cont [12/16] 0.0, 128
    %2541 = vxpose.xlu0.b32.cont [13/16] 0.0, 128
    %2542 = vxpose.xlu0.b32.cont [14/16] 0.0, 128
    %2543 = vxpose.xlu0.b32.cont [15/16] 0.0, 128
    %2544 = vxpose.xlu0.b32.end [16/16] 0.0, 128
    %v2545 = vpop.trf.xlu0
    %v2546 = vpop.trf.xlu0
    %v2547 = vpop.trf.xlu0
    %v2548 = vpop.trf.xlu0
    %v2549 = vpop.trf.xlu0
    %v2550 = vpop.trf.xlu0
    %v2551 = vpop.trf.xlu0
    %v2552 = vpop.trf.xlu0
    %v2553 = vpop.trf.xlu0
    %v2554 = vpop.trf.xlu0
    %v2555 = vpop.trf.xlu0
    %v2556 = vpop.trf.xlu0
    %v2557 = vpop.trf.xlu0
    %v2558 = vpop.trf.xlu0
    %v2559 = vpop.trf.xlu0
    %v2560 = vpop.trf.xlu0
    %v2562 = vsel %vm656, %v2545, 0
    %v2565 = vsel %vm196, %v2526, 0
    %2567 = vmatprep.subr.mxu0 0.0
    %2568 = vmatpush1.msra.mxu0 0.0
    %2569 = vmatprep.subr.mxu0 0.0
    %2570 = vmatpush1.msra.mxu0 0.0
    %2571 = vmatprep.subr.mxu0 0.0
    %2572 = vmatpush1.msra.mxu0 0.0
    %2573 = vmatprep.subr.mxu0 0.0
    %2574 = vmatpush1.msra.mxu0 0.0
    %2575 = vmatprep.subr.mxu0 0.0
    %2576 = vmatpush1.msra.mxu0 0.0
    %2577 = vmatprep.subr.mxu0 0.0
    %2578 = vmatpush1.msra.mxu0 0.0
    %2579 = vmatprep.subr.mxu0 0.0
    %2580 = vmatpush1.msra.mxu0 0.0
    %2581 = vmatprep.subr.mxu0 0.0
    %2582 = vmatpush1.msra.mxu0 0.0
    %2583 = vmatprep.subr.mxu0 0.0
    %2584 = vmatpush1.msra.mxu0 0.0
    %2585 = vmatprep.subr.mxu0 0.0
    %2586 = vmatpush1.msra.mxu0 0.0
    %2587 = vmatprep.subr.mxu0 0.0
    %2588 = vmatpush1.msra.mxu0 0.0
    %2589 = vmatprep.subr.mxu0 0.0
    %2590 = vmatpush1.msra.mxu0 0.0
    %2591 = vmatprep.subr.mxu0 0.0
    %2592 = vmatpush1.msra.mxu0 0.0
    %2593 = vmatprep.subr.mxu0 0.0
    %2594 = vmatpush1.msra.mxu0 0.0
    %2595 = vmatprep.subr.mxu0 0.0
    %2596 = vmatpush1.msra.mxu0 %v2565
    %2597 = vmatprep.subr.mxu0 0.0
    %2598 = vmatpush1.msra.mxu0 %v2525
    %2599 = vmatprep.subr.mxu0 0.0
    %2600 = vmatpush2.msra.mxu0 0.0
    %2601 = vmatprep.subr.mxu0 0.0
    %2602 = vmatpush2.msra.mxu0 0.0
    %2603 = vmatprep.subr.mxu0 0.0
    %2604 = vmatpush2.msra.mxu0 0.0
    %2605 = vmatprep.subr.mxu0 0.0
    %2606 = vmatpush2.msra.mxu0 0.0
    %2607 = vmatprep.subr.mxu0 0.0
    %2608 = vmatpush2.msra.mxu0 0.0
    %2609 = vmatprep.subr.mxu0 0.0
    %2610 = vmatpush2.msra.mxu0 0.0
    %2611 = vmatprep.subr.mxu0 0.0
    %2612 = vmatpush2.msra.mxu0 0.0
    %2613 = vmatprep.subr.mxu0 0.0
    %2614 = vmatpush2.msra.mxu0 0.0
    %2615 = vmatprep.subr.mxu0 0.0
    %2616 = vmatpush2.msra.mxu0 0.0
    %2617 = vmatprep.subr.mxu0 0.0
    %2618 = vmatpush2.msra.mxu0 0.0
    %2619 = vmatprep.subr.mxu0 0.0
    %2620 = vmatpush2.msra.mxu0 0.0
    %2621 = vmatprep.subr.mxu0 0.0
    %2622 = vmatpush2.msra.mxu0 0.0
    %2623 = vmatprep.subr.mxu0 0.0
    %2624 = vmatpush2.msra.mxu0 0.0
    %2625 = vmatprep.subr.mxu0 0.0
    %2626 = vmatpush2.msra.mxu0 0.0
    %2627 = vmatprep.subr.mxu0 0.0
    %2628 = vmatpush2.msra.mxu0 0.0
    %2629 = vmatprep.subr.mxu0 0.0
    %2630 = vmatpush2.msra.mxu0 0.0
    %2631 = vmatprep.mubr.f32.mxu0 0.0
    %2632 = vmatmul.mubr.f32.gmra.mxu0 %v2562
    %v2633 = vpop.f32.mrf.mxu0
    %v2634 = vadd.f32 0.0, %v2633
    %v2635 = vpop.f32.mrf.mxu0
    %2636 = vdwg.mxu0
    %vm2637 = vcmp.gt.f32.partialorder %v2634, 0.0
    %v2638 = vmin.f32 %v2634, 0.0
    %v2639 = vmul.f32 %v2638, 1.442695
    %v2640 = vpow.pop %v2639
    %v2641 = vsub.f32 %v2640, 1.0
    %v2642 = vmul.f32 %v2641, 1.6732632
    %v2643 = vsel %vm2637, %v2634, %v2642
    %v2644 = vmul.f32 %v2643, 1.050701
    %v2646 = vsel %vm196, %v2327, 0
    %2648 = vmatprep.subr.mxu0 0.0
    %2649 = vmatpush1.msra.mxu0 0.0
    %2650 = vmatprep.subr.mxu0 0.0
    %2651 = vmatpush1.msra.mxu0 0.0
    %2652 = vmatprep.subr.mxu0 0.0
    %2653 = vmatpush1.msra.mxu0 0.0
    %2654 = vmatprep.subr.mxu0 0.0
    %2655 = vmatpush1.msra.mxu0 0.0
    %2656 = vmatprep.subr.mxu0 0.0
    %2657 = vmatpush1.msra.mxu0 0.0
    %2658 = vmatprep.subr.mxu0 0.0
    %2659 = vmatpush1.msra.mxu0 0.0
    %2660 = vmatprep.subr.mxu0 0.0
    %2661 = vmatpush1.msra.mxu0 0.0
    %2662 = vmatprep.subr.mxu0 0.0
    %2663 = vmatpush1.msra.mxu0 0.0
    %2664 = vmatprep.subr.mxu0 0.0
    %2665 = vmatpush1.msra.mxu0 0.0
    %2666 = vmatprep.subr.mxu0 0.0
    %2667 = vmatpush1.msra.mxu0 0.0
    %2668 = vmatprep.subr.mxu0 0.0
    %2669 = vmatpush1.msra.mxu0 0.0
    %2670 = vmatprep.subr.mxu0 0.0
    %2671 = vmatpush1.msra.mxu0 0.0
    %2672 = vmatprep.subr.mxu0 0.0
    %2673 = vmatpush1.msra.mxu0 0.0
    %2674 = vmatprep.subr.mxu0 0.0
    %2675 = vmatpush1.msra.mxu0 0.0
    %2676 = vmatprep.subr.mxu0 0.0
    %2677 = vmatpush1.msra.mxu0 %v2646
    %2678 = vmatprep.subr.mxu0 0.0
    %2679 = vmatpush1.msra.mxu0 %v2326
    %2680 = vmatprep.subr.mxu0 0.0
    %2681 = vmatpush2.msra.mxu0 0.0
    %2682 = vmatprep.subr.mxu0 0.0
    %2683 = vmatpush2.msra.mxu0 0.0
    %2684 = vmatprep.subr.mxu0 0.0
    %2685 = vmatpush2.msra.mxu0 0.0
    %2686 = vmatprep.subr.mxu0 0.0
    %2687 = vmatpush2.msra.mxu0 0.0
    %2688 = vmatprep.subr.mxu0 0.0
    %2689 = vmatpush2.msra.mxu0 0.0
    %2690 = vmatprep.subr.mxu0 0.0
    %2691 = vmatpush2.msra.mxu0 0.0
    %2692 = vmatprep.subr.mxu0 0.0
    %2693 = vmatpush2.msra.mxu0 0.0
    %2694 = vmatprep.subr.mxu0 0.0
    %2695 = vmatpush2.msra.mxu0 0.0
    %2696 = vmatprep.subr.mxu0 0.0
    %2697 = vmatpush2.msra.mxu0 0.0
    %2698 = vmatprep.subr.mxu0 0.0
    %2699 = vmatpush2.msra.mxu0 0.0
    %2700 = vmatprep.subr.mxu0 0.0
    %2701 = vmatpush2.msra.mxu0 0.0
    %2702 = vmatprep.subr.mxu0 0.0
    %2703 = vmatpush2.msra.mxu0 0.0
    %2704 = vmatprep.subr.mxu0 0.0
    %2705 = vmatpush2.msra.mxu0 0.0
    %2706 = vmatprep.subr.mxu0 0.0
    %2707 = vmatpush2.msra.mxu0 0.0
    %2708 = vmatprep.subr.mxu0 0.0
    %2709 = vmatpush2.msra.mxu0 0.0
    %2710 = vmatprep.subr.mxu0 0.0
    %2711 = vmatpush2.msra.mxu0 0.0
    %2712 = vmatprep.mubr.f32.mxu0 0.0
    %2713 = vmatmul.mubr.f32.gmra.mxu0 %v2562
    %v2714 = vpop.f32.mrf.mxu0
    %v2715 = vadd.f32 0.0, %v2714
    %v2716 = vpop.f32.mrf.mxu0
    %2717 = vdwg.mxu0
    %v2719 = vsel %vm656, %v2715, 0
    %v2722 = vsel %vm196, %v2528, 0
    %2724 = vmatprep.subr.mxu0 0.0
    %2725 = vmatpush1.msra.mxu0 0.0
    %2726 = vmatprep.subr.mxu0 0.0
    %2727 = vmatpush1.msra.mxu0 0.0
    %2728 = vmatprep.subr.mxu0 0.0
    %2729 = vmatpush1.msra.mxu0 0.0
    %2730 = vmatprep.subr.mxu0 0.0
    %2731 = vmatpush1.msra.mxu0 0.0
    %2732 = vmatprep.subr.mxu0 0.0
    %2733 = vmatpush1.msra.mxu0 0.0
    %2734 = vmatprep.subr.mxu0 0.0
    %2735 = vmatpush1.msra.mxu0 0.0
    %2736 = vmatprep.subr.mxu0 0.0
    %2737 = vmatpush1.msra.mxu0 0.0
    %2738 = vmatprep.subr.mxu0 0.0
    %2739 = vmatpush1.msra.mxu0 0.0
    %2740 = vmatprep.subr.mxu0 0.0
    %2741 = vmatpush1.msra.mxu0 0.0
    %2742 = vmatprep.subr.mxu0 0.0
    %2743 = vmatpush1.msra.mxu0 0.0
    %2744 = vmatprep.subr.mxu0 0.0
    %2745 = vmatpush1.msra.mxu0 0.0
    %2746 = vmatprep.subr.mxu0 0.0
    %2747 = vmatpush1.msra.mxu0 0.0
    %2748 = vmatprep.subr.mxu0 0.0
    %2749 = vmatpush1.msra.mxu0 0.0
    %2750 = vmatprep.subr.mxu0 0.0
    %2751 = vmatpush1.msra.mxu0 0.0
    %2752 = vmatprep.subr.mxu0 0.0
    %2753 = vmatpush1.msra.mxu0 %v2722
    %2754 = vmatprep.subr.mxu0 0.0
    %2755 = vmatpush1.msra.mxu0 %v2527
    %2756 = vmatprep.subr.mxu0 0.0
    %2757 = vmatpush2.msra.mxu0 0.0
    %2758 = vmatprep.subr.mxu0 0.0
    %2759 = vmatpush2.msra.mxu0 0.0
    %2760 = vmatprep.subr.mxu0 0.0
    %2761 = vmatpush2.msra.mxu0 0.0
    %2762 = vmatprep.subr.mxu0 0.0
    %2763 = vmatpush2.msra.mxu0 0.0
    %2764 = vmatprep.subr.mxu0 0.0
    %2765 = vmatpush2.msra.mxu0 0.0
    %2766 = vmatprep.subr.mxu0 0.0
    %2767 = vmatpush2.msra.mxu0 0.0
    %2768 = vmatprep.subr.mxu0 0.0
    %2769 = vmatpush2.msra.mxu0 0.0
    %2770 = vmatprep.subr.mxu0 0.0
    %2771 = vmatpush2.msra.mxu0 0.0
    %2772 = vmatprep.subr.mxu0 0.0
    %2773 = vmatpush2.msra.mxu0 0.0
    %2774 = vmatprep.subr.mxu0 0.0
    %2775 = vmatpush2.msra.mxu0 0.0
    %2776 = vmatprep.subr.mxu0 0.0
    %2777 = vmatpush2.msra.mxu0 0.0
    %2778 = vmatprep.subr.mxu0 0.0
    %2779 = vmatpush2.msra.mxu0 0.0
    %2780 = vmatprep.subr.mxu0 0.0
    %2781 = vmatpush2.msra.mxu0 0.0
    %2782 = vmatprep.subr.mxu0 0.0
    %2783 = vmatpush2.msra.mxu0 0.0
    %2784 = vmatprep.subr.mxu0 0.0
    %2785 = vmatpush2.msra.mxu0 0.0
    %2786 = vmatprep.subr.mxu0 0.0
    %2787 = vmatpush2.msra.mxu0 0.0
    %2788 = vmatprep.mubr.f32.mxu0 0.0
    %2789 = vmatmul.mubr.f32.gmra.mxu0 %v2719
    %v2790 = vpop.f32.mrf.mxu0
    %v2791 = vadd.f32 0.0, %v2790
    %v2792 = vpop.f32.mrf.mxu0
    %2793 = vdwg.mxu0
    %v2794 = vsel %vm656, %v2326, 0.0
    %2795 = vadd.xlane.f32.xlu0 %v2794
    %v2796 = vpop.xlane.xlu0 %2795
    %v2797 = vsel %vm900, %v2327, 0.0
    %2798 = vadd.xlane.f32.xlu0 %v2797
    %v2799 = vpop.xlane.xlu0 %2798
    %v2800 = vmul.f32 %v2796, %v2329
    %v2801 = vmul.f32 %v2799, %v2330
    %v2802 = vsel %vm906, %v2800, 0.0
    %v2803 = vsel %vm908, %v2801, 0.0
    %v2804 = vadd.f32 %v2802, %v2803
    %2805 = vadd.xlane.f32.xlu0 %v2804
    %v2806 = vpop.xlane.xlu0 %2805
    %v2807 = vrot.slane %v2806, 4
    %v2808 = vadd.f32 %v2806, %v2807
    %v2809 = vrot.slane %v2808, 2
    %v2810 = vadd.f32 %v2808, %v2809
    %v2811 = vrot.slane %v2810, 1
    %v2812 = vadd.f32 %v2810, %v2811
    %s2813 = vtos %v2812
    %v2814 = vstv %s2813
    %v2815 = vmax.f32 %v2814, 1e-15
    %v2816 = vrcp.pop %v2815
    %v2818 = vsel %vm196, %v2801, 0
    %2820 = vmatprep.subr.mxu0 0.0
    %2821 = vmatpush1.msra.mxu0 0.0
    %2822 = vmatprep.subr.mxu0 0.0
    %2823 = vmatpush1.msra.mxu0 0.0
    %2824 = vmatprep.subr.mxu0 0.0
    %2825 = vmatpush1.msra.mxu0 0.0
    %2826 = vmatprep.subr.mxu0 0.0
    %2827 = vmatpush1.msra.mxu0 0.0
    %2828 = vmatprep.subr.mxu0 0.0
    %2829 = vmatpush1.msra.mxu0 0.0
    %2830 = vmatprep.subr.mxu0 0.0
    %2831 = vmatpush1.msra.mxu0 0.0
    %2832 = vmatprep.subr.mxu0 0.0
    %2833 = vmatpush1.msra.mxu0 0.0
    %2834 = vmatprep.subr.mxu0 0.0
    %2835 = vmatpush1.msra.mxu0 0.0
    %2836 = vmatprep.subr.mxu0 0.0
    %2837 = vmatpush1.msra.mxu0 0.0
    %2838 = vmatprep.subr.mxu0 0.0
    %2839 = vmatpush1.msra.mxu0 0.0
    %2840 = vmatprep.subr.mxu0 0.0
    %2841 = vmatpush1.msra.mxu0 0.0
    %2842 = vmatprep.subr.mxu0 0.0
    %2843 = vmatpush1.msra.mxu0 0.0
    %2844 = vmatprep.subr.mxu0 0.0
    %2845 = vmatpush1.msra.mxu0 0.0
    %2846 = vmatprep.subr.mxu0 0.0
    %2847 = vmatpush1.msra.mxu0 0.0
    %2848 = vmatprep.subr.mxu0 0.0
    %2849 = vmatpush1.msra.mxu0 %v2818
    %2850 = vmatprep.subr.mxu0 0.0
    %2851 = vmatpush1.msra.mxu0 %v2800
    %2852 = vmatprep.subr.mxu0 0.0
    %2853 = vmatpush2.msra.mxu0 0.0
    %2854 = vmatprep.subr.mxu0 0.0
    %2855 = vmatpush2.msra.mxu0 0.0
    %2856 = vmatprep.subr.mxu0 0.0
    %2857 = vmatpush2.msra.mxu0 0.0
    %2858 = vmatprep.subr.mxu0 0.0
    %2859 = vmatpush2.msra.mxu0 0.0
    %2860 = vmatprep.subr.mxu0 0.0
    %2861 = vmatpush2.msra.mxu0 0.0
    %2862 = vmatprep.subr.mxu0 0.0
    %2863 = vmatpush2.msra.mxu0 0.0
    %2864 = vmatprep.subr.mxu0 0.0
    %2865 = vmatpush2.msra.mxu0 0.0
    %2866 = vmatprep.subr.mxu0 0.0
    %2867 = vmatpush2.msra.mxu0 0.0
    %2868 = vmatprep.subr.mxu0 0.0
    %2869 = vmatpush2.msra.mxu0 0.0
    %2870 = vmatprep.subr.mxu0 0.0
    %2871 = vmatpush2.msra.mxu0 0.0
    %2872 = vmatprep.subr.mxu0 0.0
    %2873 = vmatpush2.msra.mxu0 0.0
    %2874 = vmatprep.subr.mxu0 0.0
    %2875 = vmatpush2.msra.mxu0 0.0
    %2876 = vmatprep.subr.mxu0 0.0
    %2877 = vmatpush2.msra.mxu0 0.0
    %2878 = vmatprep.subr.mxu0 0.0
    %2879 = vmatpush2.msra.mxu0 0.0
    %2880 = vmatprep.subr.mxu0 0.0
    %2881 = vmatpush2.msra.mxu0 0.0
    %2882 = vmatprep.subr.mxu0 0.0
    %2883 = vmatpush2.msra.mxu0 0.0
    %2884 = vmatprep.mubr.f32.mxu0 0.0
    %2885 = vmatmul.mubr.f32.gmra.mxu0 %v2562
    %v2886 = vpop.f32.mrf.mxu0
    %v2887 = vadd.f32 0.0, %v2886
    %v2888 = vpop.f32.mrf.mxu0
    %2889 = vdwg.mxu0
    %v2890 = vmul.f32 %v2791, %v896
    %v2891 = vsel %vm586, %v2890, 0.0
    %2892 = vadd.xlane.f32.xlu0 %v2891
    %v2893 = vpop.xlane.xlu0 %2892
    %v2894 = vrot.slane %v2893, 4
    %v2895 = vadd.f32 %v2893, %v2894
    %v2896 = vrot.slane %v2895, 2
    %v2897 = vadd.f32 %v2895, %v2896
    %v2898 = vrot.slane %v2897, 1
    %v2899 = vadd.f32 %v2897, %v2898
    %s2900 = vtos %v2899
    %v2901 = vstv %s2900
    %v2902 = vmul.f32 %v2887, %v2887
    %v2903 = vsel %vm906, %v2902, 0.0
    %2904 = vadd.xlane.f32.xlu0 %v2903
    %v2905 = vpop.xlane.xlu0 %2904
    %v2906 = vrot.slane %v2905, 4
    %v2907 = vadd.f32 %v2905, %v2906
    %v2908 = vrot.slane %v2907, 2
    %v2909 = vadd.f32 %v2907, %v2908
    %v2910 = vrot.slane %v2909, 1
    %v2911 = vadd.f32 %v2909, %v2910
    %s2912 = vtos %v2911
    %v2913 = vstv %s2912
    %v2914 = vmul.f32 %v2913, %v2816
    %v2915 = vsub.f32 %v2901, %v2914
    %v2916 = vsub.f32 0.0, %v2915
    %v2917 = vmul.f32 %v2916, %v2816
    %2918 = vmatprep.subr.mxu0 0.0
    %2919 = vmatpush1.msra.mxu0 0.0
    %2920 = vmatprep.subr.mxu0 0.0
    %2921 = vmatpush1.msra.mxu0 0.0
    %2922 = vmatprep.subr.mxu0 0.0
    %2923 = vmatpush1.msra.mxu0 0.0
    %2924 = vmatprep.subr.mxu0 0.0
    %2925 = vmatpush1.msra.mxu0 0.0
    %2926 = vmatprep.subr.mxu0 0.0
    %2927 = vmatpush1.msra.mxu0 0.0
    %2928 = vmatprep.subr.mxu0 0.0
    %2929 = vmatpush1.msra.mxu0 0.0
    %2930 = vmatprep.subr.mxu0 0.0
    %2931 = vmatpush1.msra.mxu0 0.0
    %2932 = vmatprep.subr.mxu0 0.0
    %2933 = vmatpush1.msra.mxu0 0.0
    %2934 = vmatprep.subr.mxu0 0.0
    %2935 = vmatpush1.msra.mxu0 0.0
    %2936 = vmatprep.subr.mxu0 0.0
    %2937 = vmatpush1.msra.mxu0 0.0
    %2938 = vmatprep.subr.mxu0 0.0
    %2939 = vmatpush1.msra.mxu0 0.0
    %2940 = vmatprep.subr.mxu0 0.0
    %2941 = vmatpush1.msra.mxu0 0.0
    %2942 = vmatprep.subr.mxu0 0.0
    %2943 = vmatpush1.msra.mxu0 0.0
    %2944 = vmatprep.subr.mxu0 0.0
    %2945 = vmatpush1.msra.mxu0 0.0
    %2946 = vmatprep.subr.mxu0 0.0
    %2947 = vmatpush1.msra.mxu0 %v2722
    %2948 = vmatprep.subr.mxu0 0.0
    %2949 = vmatpush1.msra.mxu0 %v2527
    %2950 = vmatprep.subr.mxu0 0.0
    %2951 = vmatpush2.msra.mxu0 0.0
    %2952 = vmatprep.subr.mxu0 0.0
    %2953 = vmatpush2.msra.mxu0 0.0
    %2954 = vmatprep.subr.mxu0 0.0
    %2955 = vmatpush2.msra.mxu0 0.0
    %2956 = vmatprep.subr.mxu0 0.0
    %2957 = vmatpush2.msra.mxu0 0.0
    %2958 = vmatprep.subr.mxu0 0.0
    %2959 = vmatpush2.msra.mxu0 0.0
    %2960 = vmatprep.subr.mxu0 0.0
    %2961 = vmatpush2.msra.mxu0 0.0
    %2962 = vmatprep.subr.mxu0 0.0
    %2963 = vmatpush2.msra.mxu0 0.0
    %2964 = vmatprep.subr.mxu0 0.0
    %2965 = vmatpush2.msra.mxu0 0.0
    %2966 = vmatprep.subr.mxu0 0.0
    %2967 = vmatpush2.msra.mxu0 0.0
    %2968 = vmatprep.subr.mxu0 0.0
    %2969 = vmatpush2.msra.mxu0 0.0
    %2970 = vmatprep.subr.mxu0 0.0
    %2971 = vmatpush2.msra.mxu0 0.0
    %2972 = vmatprep.subr.mxu0 0.0
    %2973 = vmatpush2.msra.mxu0 0.0
    %2974 = vmatprep.subr.mxu0 0.0
    %2975 = vmatpush2.msra.mxu0 0.0
    %2976 = vmatprep.subr.mxu0 0.0
    %2977 = vmatpush2.msra.mxu0 0.0
    %2978 = vmatprep.subr.mxu0 0.0
    %2979 = vmatpush2.msra.mxu0 0.0
    %2980 = vmatprep.subr.mxu0 0.0
    %2981 = vmatpush2.msra.mxu0 0.0
    %2982 = vmatprep.mubr.f32.mxu0 0.0
    %2983 = vmatmul.mubr.f32.gmra.mxu0 %v2562
    %v2984 = vpop.f32.mrf.mxu0
    %v2985 = vadd.f32 0.0, %v2984
    %v2986 = vpop.f32.mrf.mxu0
    %2987 = vdwg.mxu0
    %v2988 = vmul.f32 %v2985, %v2985
    %v2989 = vsel %vm586, %v2988, 0.0
    %2990 = vadd.xlane.f32.xlu0 %v2989
    %v2991 = vpop.xlane.xlu0 %2990
    %v2992 = vrot.slane %v2991, 4
    %v2993 = vadd.f32 %v2991, %v2992
    %v2994 = vrot.slane %v2993, 2
    %v2995 = vadd.f32 %v2993, %v2994
    %v2996 = vrot.slane %v2995, 1
    %v2997 = vadd.f32 %v2995, %v2996
    %s2998 = vtos %v2997
    %v2999 = vstv %s2998
    %v3000 = vmax.f32 %v2999, 1e-15
    %v3001 = vrsqrt.pop %v3000
    %v3002 = vmul.f32 %v2985, %v3001
    %v3003 = vsub.f32 %v3002, %v1109
    %v3004 = vmul.f32 %v3003, %v3003
    %v3005 = vsel %vm586, %v3004, 0.0
    %3006 = vadd.xlane.f32.xlu0 %v3005
    %v3007 = vpop.xlane.xlu0 %3006
    %v3008 = vrot.slane %v3007, 4
    %v3009 = vadd.f32 %v3007, %v3008
    %v3010 = vrot.slane %v3009, 2
    %v3011 = vadd.f32 %v3009, %v3010
    %v3012 = vrot.slane %v3011, 1
    %v3013 = vadd.f32 %v3011, %v3012
    %s3014 = vtos %v3013
    %v3015 = vstv %s3014
    %v3016 = vrsqrt.pop %v3015
    %v3017 = vmul.f32 %v3015, %v3016
    %vm3018 = vcmp.eq.f32.partialorder %v3015, inf
    %v3019 = vsel %vm3018, %v3015, %v3017
    %vm3020 = vcmp.eq.f32.partialorder %v3015, 0.0
    %v3021 = vand.u32 %v3015, 2147483648
    %v3022 = vsel %vm3020, %v3021, %v3019
    %v3023 = vsel %vm586, %v2527, 0.0
    %v3024 = vsel %vm590, %v2528, 0.0
    %v3025 = vadd.f32 %v3023, %v3024
    %v3026 = vrot.slane %v3025, 4
    %v3027 = vadd.f32 %v3025, %v3026
    %v3028 = vrot.slane %v3027, 2
    %v3029 = vadd.f32 %v3027, %v3028
    %v3030 = vrot.slane %v3029, 1
    %v3031 = vadd.f32 %v3029, %v3030
    %v3032 = vmul.f32 %v3031, %v3031
    %v3033 = vsel %vm1140, %v3032, 0.0
    %3034 = vadd.xlane.f32.xlu0 %v3033
    %v3035 = vpop.xlane.xlu0 %3034
    %v3036 = vrot.slane %v3035, 4
    %v3037 = vadd.f32 %v3035, %v3036
    %v3038 = vrot.slane %v3037, 2
    %v3039 = vadd.f32 %v3037, %v3038
    %v3040 = vrot.slane %v3039, 1
    %v3041 = vadd.f32 %v3039, %v3040
    %s3042 = vtos %v3041
    %v3043 = vstv %s3042
    %v3044 = vrsqrt.pop %v3043
    %v3045 = vmul.f32 %v3043, %v3044
    %vm3046 = vcmp.eq.f32.partialorder %v3043, inf
    %v3047 = vsel %vm3046, %v3043, %v3045
    %vm3048 = vcmp.eq.f32.partialorder %v3043, 0.0
    %v3049 = vand.u32 %v3043, 2147483648
    %v3050 = vsel %vm3048, %v3049, %v3047
    %v3051 = vsel %vm906, %v2329, 0.0
    %v3052 = vsel %vm908, %v2330, 0.0
    %v3053 = vadd.f32 %v3051, %v3052
    %3054 = vadd.xlane.f32.xlu0 %v3053
    %v3055 = vpop.xlane.xlu0 %3054
    %v3056 = vrot.slane %v3055, 4
    %v3057 = vadd.f32 %v3055, %v3056
    %v3058 = vrot.slane %v3057, 2
    %v3059 = vadd.f32 %v3057, %v3058
    %v3060 = vrot.slane %v3059, 1
    %v3061 = vadd.f32 %v3059, %v3060
    %s3062 = vtos %v3061
    %v3063 = vstv %s3062
    %v3064 = vrcp.pop %v3063
    %v3065 = vmul.f32 %v2791, %v1173
    %v3066 = vsel %vm586, %v3065, 0.0
    %3067 = vadd.xlane.f32.xlu0 %v3066
    %v3068 = vpop.xlane.xlu0 %3067
    %v3069 = vrot.slane %v3066, 4
    %v3070 = vadd.f32 %v3066, %v3069
    %v3071 = vrot.slane %v3070, 2
    %v3072 = vadd.f32 %v3070, %v3071
    %v3073 = vrot.slane %v3072, 1
    %v3074 = vadd.f32 %v3072, %v3073
    %v3075 = vrsqrt.pop %v3068
    %v3076 = vmul.f32 %v3068, %v3075
    %vm3077 = vcmp.eq.f32.partialorder %v3068, inf
    %v3078 = vsel %vm3077, %v3068, %v3076
    %vm3079 = vcmp.eq.f32.partialorder %v3068, 0.0
    %v3080 = vand.u32 %v3068, 2147483648
    %v3081 = vsel %vm3079, %v3080, %v3078
    %v3082 = vadd.f32 %v3081, 1e-15
    %v3083 = vrcp.pop %v3082
    %v3084 = vmul.f32 %v3065, %v3083
    %v3085 = vrsqrt.pop %v3074
    %v3086 = vmul.f32 %v3074, %v3085
    %vm3087 = vcmp.eq.f32.partialorder %v3074, inf
    %v3088 = vsel %vm3087, %v3074, %v3086
    %vm3089 = vcmp.eq.f32.partialorder %v3074, 0.0
    %v3090 = vand.u32 %v3074, 2147483648
    %v3091 = vsel %vm3089, %v3090, %v3088
    %v3092 = vadd.f32 %v3091, 1e-15
    %v3093 = vrcp.pop %v3092
    %v3094 = vmul.f32 %v3084, %v3093
    %v3095 = vadd.f32 %v1204, %v2917
    %v3096 = vadd.f32 %v1205, %v3022
    %v3097 = vadd.f32 %v1206, %v3050
    %v3098 = vadd.f32 %v1207, %v3064
    %v3100 = vsel %vm586, %v3094, 0
    %3102 = vmatprep.subr.mxu0 0.0
    %3103 = vmatpush1.msra.mxu0 0.0
    %3104 = vmatprep.subr.mxu0 0.0
    %3105 = vmatpush1.msra.mxu0 0.0
    %3106 = vmatprep.subr.mxu0 0.0
    %3107 = vmatpush1.msra.mxu0 0.0
    %3108 = vmatprep.subr.mxu0 0.0
    %3109 = vmatpush1.msra.mxu0 0.0
    %3110 = vmatprep.subr.mxu0 0.0
    %3111 = vmatpush1.msra.mxu0 0.0
    %3112 = vmatprep.subr.mxu0 0.0
    %3113 = vmatpush1.msra.mxu0 0.0
    %3114 = vmatprep.subr.mxu0 0.0
    %3115 = vmatpush1.msra.mxu0 0.0
    %3116 = vmatprep.subr.mxu0 0.0
    %3117 = vmatpush1.msra.mxu0 0.0
    %3118 = vmatprep.subr.mxu0 0.0
    %3119 = vmatpush1.msra.mxu0 0.0
    %3120 = vmatprep.subr.mxu0 0.0
    %3121 = vmatpush1.msra.mxu0 0.0
    %3122 = vmatprep.subr.mxu0 0.0
    %3123 = vmatpush1.msra.mxu0 0.0
    %3124 = vmatprep.subr.mxu0 0.0
    %3125 = vmatpush1.msra.mxu0 0.0
    %3126 = vmatprep.subr.mxu0 0.0
    %3127 = vmatpush1.msra.mxu0 0.0
    %3128 = vmatprep.subr.mxu0 0.0
    %3129 = vmatpush1.msra.mxu0 0.0
    %3130 = vmatprep.subr.mxu0 0.0
    %3131 = vmatpush1.msra.mxu0 0.0
    %3132 = vmatprep.subr.mxu0 0.0
    %3133 = vmatpush1.msra.mxu0 %v2644
    %3134 = vmatprep.subr.mxu0 0.0
    %3135 = vmatpush2.msra.mxu0 0.0
    %3136 = vmatprep.subr.mxu0 0.0
    %3137 = vmatpush2.msra.mxu0 0.0
    %3138 = vmatprep.subr.mxu0 0.0
    %3139 = vmatpush2.msra.mxu0 0.0
    %3140 = vmatprep.subr.mxu0 0.0
    %3141 = vmatpush2.msra.mxu0 0.0
    %3142 = vmatprep.subr.mxu0 0.0
    %3143 = vmatpush2.msra.mxu0 0.0
    %3144 = vmatprep.subr.mxu0 0.0
    %3145 = vmatpush2.msra.mxu0 0.0
    %3146 = vmatprep.subr.mxu0 0.0
    %3147 = vmatpush2.msra.mxu0 0.0
    %3148 = vmatprep.subr.mxu0 0.0
    %3149 = vmatpush2.msra.mxu0 0.0
    %3150 = vmatprep.subr.mxu0 0.0
    %3151 = vmatpush2.msra.mxu0 0.0
    %3152 = vmatprep.subr.mxu0 0.0
    %3153 = vmatpush2.msra.mxu0 0.0
    %3154 = vmatprep.subr.mxu0 0.0
    %3155 = vmatpush2.msra.mxu0 0.0
    %3156 = vmatprep.subr.mxu0 0.0
    %3157 = vmatpush2.msra.mxu0 0.0
    %3158 = vmatprep.subr.mxu0 0.0
    %3159 = vmatpush2.msra.mxu0 0.0
    %3160 = vmatprep.subr.mxu0 0.0
    %3161 = vmatpush2.msra.mxu0 0.0
    %3162 = vmatprep.subr.mxu0 0.0
    %3163 = vmatpush2.msra.mxu0 0.0
    %3164 = vmatprep.subr.mxu0 0.0
    %3165 = vmatpush2.msra.mxu0 0.0
    %3166 = vmatprep.mubr.f32.mxu0 0.0
    %3167 = vmatmul.mubr.f32.gmra.mxu0 %v3100
    %v3168 = vpop.f32.mrf.mxu0
    %v3169 = vadd.f32 0.0, %v3168
    %v3170 = vpop.f32.mrf.mxu0
    %3171 = vdwg.mxu0
    %3173 = vrot.lane.b32.xlu0 %v2644, 32
    %v3174 = vpop.permute.xlu0 %3173
    %v3176 = vsel %vm417, %v3169, %v3174
    %v3178 = vsel %vm1292, %v3176, 0
    %3180 = vmatprep.subr.mxu0 0.0
    %3181 = vmatpush1.msra.mxu0 0.0
    %3182 = vmatprep.subr.mxu0 0.0
    %3183 = vmatpush1.msra.mxu0 0.0
    %3184 = vmatprep.subr.mxu0 0.0
    %3185 = vmatpush1.msra.mxu0 0.0
    %3186 = vmatprep.subr.mxu0 0.0
    %3187 = vmatpush1.msra.mxu0 0.0
    %3188 = vmatprep.subr.mxu0 0.0
    %3189 = vmatpush1.msra.mxu0 0.0
    %3190 = vmatprep.subr.mxu0 0.0
    %3191 = vmatpush1.msra.mxu0 0.0
    %3192 = vmatprep.subr.mxu0 0.0
    %3193 = vmatpush1.msra.mxu0 0.0
    %3194 = vmatprep.subr.mxu0 0.0
    %3195 = vmatpush1.msra.mxu0 0.0
    %3196 = vmatprep.subr.mxu0 0.0
    %3197 = vmatpush1.msra.mxu0 %v310
    %3198 = vmatprep.subr.mxu0 0.0
    %3199 = vmatpush1.msra.mxu0 %v309
    %3200 = vmatprep.subr.mxu0 0.0
    %3201 = vmatpush1.msra.mxu0 %v308
    %3202 = vmatprep.subr.mxu0 0.0
    %3203 = vmatpush1.msra.mxu0 %v307
    %3204 = vmatprep.subr.mxu0 0.0
    %3205 = vmatpush1.msra.mxu0 %v306
    %3206 = vmatprep.subr.mxu0 0.0
    %3207 = vmatpush1.msra.mxu0 %v305
    %3208 = vmatprep.subr.mxu0 0.0
    %3209 = vmatpush1.msra.mxu0 %v304
    %3210 = vmatprep.subr.mxu0 0.0
    %3211 = vmatpush1.msra.mxu0 %v303
    %3212 = vmatprep.subr.mxu0 0.0
    %3213 = vmatpush2.msra.mxu0 0.0
    %3214 = vmatprep.subr.mxu0 0.0
    %3215 = vmatpush2.msra.mxu0 0.0
    %3216 = vmatprep.subr.mxu0 0.0
    %3217 = vmatpush2.msra.mxu0 0.0
    %3218 = vmatprep.subr.mxu0 0.0
    %3219 = vmatpush2.msra.mxu0 0.0
    %3220 = vmatprep.subr.mxu0 0.0
    %3221 = vmatpush2.msra.mxu0 0.0
    %3222 = vmatprep.subr.mxu0 0.0
    %3223 = vmatpush2.msra.mxu0 0.0
    %3224 = vmatprep.subr.mxu0 0.0
    %3225 = vmatpush2.msra.mxu0 0.0
    %3226 = vmatprep.subr.mxu0 0.0
    %3227 = vmatpush2.msra.mxu0 0.0
    %3228 = vmatprep.subr.mxu0 0.0
    %3229 = vmatpush2.msra.mxu0 0.0
    %3230 = vmatprep.subr.mxu0 0.0
    %3231 = vmatpush2.msra.mxu0 0.0
    %3232 = vmatprep.subr.mxu0 0.0
    %3233 = vmatpush2.msra.mxu0 0.0
    %3234 = vmatprep.subr.mxu0 0.0
    %3235 = vmatpush2.msra.mxu0 0.0
    %3236 = vmatprep.subr.mxu0 0.0
    %3237 = vmatpush2.msra.mxu0 0.0
    %3238 = vmatprep.subr.mxu0 0.0
    %3239 = vmatpush2.msra.mxu0 0.0
    %3240 = vmatprep.subr.mxu0 0.0
    %3241 = vmatpush2.msra.mxu0 0.0
    %3242 = vmatprep.subr.mxu0 0.0
    %3243 = vmatpush2.msra.mxu0 0.0
    %3244 = vmatprep.mubr.f32.mxu0 0.0
    %3245 = vmatmul.mubr.f32.gmra.mxu0 %v3178
    %v3246 = vpop.f32.mrf.mxu0
    %v3247 = vadd.f32 %v1290, %v3246
    %v3248 = vpop.f32.mrf.mxu0
    %3249 = vdwg.mxu0
    %v3250 = vmax.f32 %v3247, 0.0
    %v3252 = vsel %vm417, %v3250, 0
    %3254 = vmatprep.subr.mxu0 0.0
    %3255 = vmatpush1.msra.mxu0 0.0
    %3256 = vmatprep.subr.mxu0 0.0
    %3257 = vmatpush1.msra.mxu0 0.0
    %3258 = vmatprep.subr.mxu0 0.0
    %3259 = vmatpush1.msra.mxu0 0.0
    %3260 = vmatprep.subr.mxu0 0.0
    %3261 = vmatpush1.msra.mxu0 0.0
    %3262 = vmatprep.subr.mxu0 0.0
    %3263 = vmatpush1.msra.mxu0 0.0
    %3264 = vmatprep.subr.mxu0 0.0
    %3265 = vmatpush1.msra.mxu0 0.0
    %3266 = vmatprep.subr.mxu0 0.0
    %3267 = vmatpush1.msra.mxu0 0.0
    %3268 = vmatprep.subr.mxu0 0.0
    %3269 = vmatpush1.msra.mxu0 0.0
    %3270 = vmatprep.subr.mxu0 0.0
    %3271 = vmatpush1.msra.mxu0 0.0
    %3272 = vmatprep.subr.mxu0 0.0
    %3273 = vmatpush1.msra.mxu0 0.0
    %3274 = vmatprep.subr.mxu0 0.0
    %3275 = vmatpush1.msra.mxu0 0.0
    %3276 = vmatprep.subr.mxu0 0.0
    %3277 = vmatpush1.msra.mxu0 0.0
    %3278 = vmatprep.subr.mxu0 0.0
    %3279 = vmatpush1.msra.mxu0 %v296
    %3280 = vmatprep.subr.mxu0 0.0
    %3281 = vmatpush1.msra.mxu0 %v295
    %3282 = vmatprep.subr.mxu0 0.0
    %3283 = vmatpush1.msra.mxu0 %v294
    %3284 = vmatprep.subr.mxu0 0.0
    %3285 = vmatpush1.msra.mxu0 %v293
    %3286 = vmatprep.subr.mxu0 0.0
    %3287 = vmatpush2.msra.mxu0 0.0
    %3288 = vmatprep.subr.mxu0 0.0
    %3289 = vmatpush2.msra.mxu0 0.0
    %3290 = vmatprep.subr.mxu0 0.0
    %3291 = vmatpush2.msra.mxu0 0.0
    %3292 = vmatprep.subr.mxu0 0.0
    %3293 = vmatpush2.msra.mxu0 0.0
    %3294 = vmatprep.subr.mxu0 0.0
    %3295 = vmatpush2.msra.mxu0 0.0
    %3296 = vmatprep.subr.mxu0 0.0
    %3297 = vmatpush2.msra.mxu0 0.0
    %3298 = vmatprep.subr.mxu0 0.0
    %3299 = vmatpush2.msra.mxu0 0.0
    %3300 = vmatprep.subr.mxu0 0.0
    %3301 = vmatpush2.msra.mxu0 0.0
    %3302 = vmatprep.subr.mxu0 0.0
    %3303 = vmatpush2.msra.mxu0 0.0
    %3304 = vmatprep.subr.mxu0 0.0
    %3305 = vmatpush2.msra.mxu0 0.0
    %3306 = vmatprep.subr.mxu0 0.0
    %3307 = vmatpush2.msra.mxu0 0.0
    %3308 = vmatprep.subr.mxu0 0.0
    %3309 = vmatpush2.msra.mxu0 0.0
    %3310 = vmatprep.subr.mxu0 0.0
    %3311 = vmatpush2.msra.mxu0 0.0
    %3312 = vmatprep.subr.mxu0 0.0
    %3313 = vmatpush2.msra.mxu0 0.0
    %3314 = vmatprep.subr.mxu0 0.0
    %3315 = vmatpush2.msra.mxu0 0.0
    %3316 = vmatprep.subr.mxu0 0.0
    %3317 = vmatpush2.msra.mxu0 0.0
    %3318 = vmatprep.mubr.f32.mxu0 0.0
    %3319 = vmatmul.mubr.f32.gmra.mxu0 %v3252
    %v3320 = vpop.f32.mrf.mxu0
    %v3321 = vadd.f32 %v1371, %v3320
    %v3322 = vpop.f32.mrf.mxu0
    %3323 = vdwg.mxu0
    %v3325 = vsel %vm417, %v3321, 0
    %3327 = vmatprep.subr.mxu0 0.0
    %3328 = vmatpush1.msra.mxu0 0.0
    %3329 = vmatprep.subr.mxu0 0.0
    %3330 = vmatpush1.msra.mxu0 0.0
    %3331 = vmatprep.subr.mxu0 0.0
    %3332 = vmatpush1.msra.mxu0 0.0
    %3333 = vmatprep.subr.mxu0 0.0
    %3334 = vmatpush1.msra.mxu0 0.0
    %3335 = vmatprep.subr.mxu0 0.0
    %3336 = vmatpush1.msra.mxu0 0.0
    %3337 = vmatprep.subr.mxu0 0.0
    %3338 = vmatpush1.msra.mxu0 0.0
    %3339 = vmatprep.subr.mxu0 0.0
    %3340 = vmatpush1.msra.mxu0 0.0
    %3341 = vmatprep.subr.mxu0 0.0
    %3342 = vmatpush1.msra.mxu0 0.0
    %3343 = vmatprep.subr.mxu0 0.0
    %3344 = vmatpush1.msra.mxu0 0.0
    %3345 = vmatprep.subr.mxu0 0.0
    %3346 = vmatpush1.msra.mxu0 0.0
    %3347 = vmatprep.subr.mxu0 0.0
    %3348 = vmatpush1.msra.mxu0 0.0
    %3349 = vmatprep.subr.mxu0 0.0
    %3350 = vmatpush1.msra.mxu0 0.0
    %3351 = vmatprep.subr.mxu0 0.0
    %3352 = vmatpush1.msra.mxu0 %v301
    %3353 = vmatprep.subr.mxu0 0.0
    %3354 = vmatpush1.msra.mxu0 %v300
    %3355 = vmatprep.subr.mxu0 0.0
    %3356 = vmatpush1.msra.mxu0 %v299
    %3357 = vmatprep.subr.mxu0 0.0
    %3358 = vmatpush1.msra.mxu0 %v298
    %3359 = vmatprep.subr.mxu0 0.0
    %3360 = vmatpush2.msra.mxu0 0.0
    %3361 = vmatprep.subr.mxu0 0.0
    %3362 = vmatpush2.msra.mxu0 0.0
    %3363 = vmatprep.subr.mxu0 0.0
    %3364 = vmatpush2.msra.mxu0 0.0
    %3365 = vmatprep.subr.mxu0 0.0
    %3366 = vmatpush2.msra.mxu0 0.0
    %3367 = vmatprep.subr.mxu0 0.0
    %3368 = vmatpush2.msra.mxu0 0.0
    %3369 = vmatprep.subr.mxu0 0.0
    %3370 = vmatpush2.msra.mxu0 0.0
    %3371 = vmatprep.subr.mxu0 0.0
    %3372 = vmatpush2.msra.mxu0 0.0
    %3373 = vmatprep.subr.mxu0 0.0
    %3374 = vmatpush2.msra.mxu0 0.0
    %3375 = vmatprep.subr.mxu0 0.0
    %3376 = vmatpush2.msra.mxu0 0.0
    %3377 = vmatprep.subr.mxu0 0.0
    %3378 = vmatpush2.msra.mxu0 0.0
    %3379 = vmatprep.subr.mxu0 0.0
    %3380 = vmatpush2.msra.mxu0 0.0
    %3381 = vmatprep.subr.mxu0 0.0
    %3382 = vmatpush2.msra.mxu0 0.0
    %3383 = vmatprep.subr.mxu0 0.0
    %3384 = vmatpush2.msra.mxu0 0.0
    %3385 = vmatprep.subr.mxu0 0.0
    %3386 = vmatpush2.msra.mxu0 0.0
    %3387 = vmatprep.subr.mxu0 0.0
    %3388 = vmatpush2.msra.mxu0 0.0
    %3389 = vmatprep.subr.mxu0 0.0
    %3390 = vmatpush2.msra.mxu0 0.0
    %3391 = vmatprep.mubr.f32.mxu0 0.0
    %3392 = vmatmul.mubr.f32.gmra.mxu0 %v3325
    %v3393 = vpop.f32.mrf.mxu0
    %v3394 = vadd.f32 %v1450, %v3393
    %v3395 = vpop.f32.mrf.mxu0
    %3396 = vdwg.mxu0
    %v3397 = vsel %vm186, %v3394, -inf
    %3398 = vmax.xlane.f32.xlu0 %v3397
    %v3399 = vpop.xlane.xlu0 %3398
    %v3400 = vsub.f32 %v3394, %v3399
    %v3401 = vmul.f32 %v3400, 1.442695
    %v3402 = vpow.pop %v3401
    %v3403 = vsel %vm186, %v3402, 0.0
    %3404 = vadd.xlane.f32.xlu0 %v3403
    %v3405 = vpop.xlane.xlu0 %3404
    %v3406 = vrcp.pop %v3405
    %v3407 = vmul.f32 %v3402, %v3406
    %3408 = vxpose.xlu0.b32.start [1/16] %v3407, 128
    %3409 = vxpose.xlu0.b32.cont [2/16] 0.0, 128
    %3410 = vxpose.xlu0.b32.cont [3/16] 0.0, 128
    %3411 = vxpose.xlu0.b32.cont [4/16] 0.0, 128
    %3412 = vxpose.xlu0.b32.cont [5/16] 0.0, 128
    %3413 = vxpose.xlu0.b32.cont [6/16] 0.0, 128
    %3414 = vxpose.xlu0.b32.cont [7/16] 0.0, 128
    %3415 = vxpose.xlu0.b32.cont [8/16] 0.0, 128
    %3416 = vxpose.xlu0.b32.cont [9/16] 0.0, 128
    %3417 = vxpose.xlu0.b32.cont [10/16] 0.0, 128
    %3418 = vxpose.xlu0.b32.cont [11/16] 0.0, 128
    %3419 = vxpose.xlu0.b32.cont [12/16] 0.0, 128
    %3420 = vxpose.xlu0.b32.cont [13/16] 0.0, 128
    %3421 = vxpose.xlu0.b32.cont [14/16] 0.0, 128
    %3422 = vxpose.xlu0.b32.cont [15/16] 0.0, 128
    %3423 = vxpose.xlu0.b32.end [16/16] 0.0, 128
    %v3424 = vpop.trf.xlu0
    %v3425 = vpop.trf.xlu0
    %v3426 = vpop.trf.xlu0
    %v3427 = vpop.trf.xlu0
    %v3428 = vpop.trf.xlu0
    %v3429 = vpop.trf.xlu0
    %v3430 = vpop.trf.xlu0
    %v3431 = vpop.trf.xlu0
    %v3432 = vpop.trf.xlu0
    %v3433 = vpop.trf.xlu0
    %v3434 = vpop.trf.xlu0
    %v3435 = vpop.trf.xlu0
    %v3436 = vpop.trf.xlu0
    %v3437 = vpop.trf.xlu0
    %v3438 = vpop.trf.xlu0
    %v3439 = vpop.trf.xlu0
    %v3441 = vsel %vm586, %v3424, 0
    %3443 = vmatprep.subr.mxu0 0.0
    %3444 = vmatpush1.msra.mxu0 0.0
    %3445 = vmatprep.subr.mxu0 0.0
    %3446 = vmatpush1.msra.mxu0 0.0
    %3447 = vmatprep.subr.mxu0 0.0
    %3448 = vmatpush1.msra.mxu0 0.0
    %3449 = vmatprep.subr.mxu0 0.0
    %3450 = vmatpush1.msra.mxu0 0.0
    %3451 = vmatprep.subr.mxu0 0.0
    %3452 = vmatpush1.msra.mxu0 0.0
    %3453 = vmatprep.subr.mxu0 0.0
    %3454 = vmatpush1.msra.mxu0 0.0
    %3455 = vmatprep.subr.mxu0 0.0
    %3456 = vmatpush1.msra.mxu0 0.0
    %3457 = vmatprep.subr.mxu0 0.0
    %3458 = vmatpush1.msra.mxu0 0.0
    %3459 = vmatprep.subr.mxu0 0.0
    %3460 = vmatpush1.msra.mxu0 0.0
    %3461 = vmatprep.subr.mxu0 0.0
    %3462 = vmatpush1.msra.mxu0 0.0
    %3463 = vmatprep.subr.mxu0 0.0
    %3464 = vmatpush1.msra.mxu0 0.0
    %3465 = vmatprep.subr.mxu0 0.0
    %3466 = vmatpush1.msra.mxu0 0.0
    %3467 = vmatprep.subr.mxu0 0.0
    %3468 = vmatpush1.msra.mxu0 0.0
    %3469 = vmatprep.subr.mxu0 0.0
    %3470 = vmatpush1.msra.mxu0 0.0
    %3471 = vmatprep.subr.mxu0 0.0
    %3472 = vmatpush1.msra.mxu0 0.0
    %3473 = vmatprep.subr.mxu0 0.0
    %3474 = vmatpush1.msra.mxu0 %v3250
    %3475 = vmatprep.subr.mxu0 0.0
    %3476 = vmatpush2.msra.mxu0 0.0
    %3477 = vmatprep.subr.mxu0 0.0
    %3478 = vmatpush2.msra.mxu0 0.0
    %3479 = vmatprep.subr.mxu0 0.0
    %3480 = vmatpush2.msra.mxu0 0.0
    %3481 = vmatprep.subr.mxu0 0.0
    %3482 = vmatpush2.msra.mxu0 0.0
    %3483 = vmatprep.subr.mxu0 0.0
    %3484 = vmatpush2.msra.mxu0 0.0
    %3485 = vmatprep.subr.mxu0 0.0
    %3486 = vmatpush2.msra.mxu0 0.0
    %3487 = vmatprep.subr.mxu0 0.0
    %3488 = vmatpush2.msra.mxu0 0.0
    %3489 = vmatprep.subr.mxu0 0.0
    %3490 = vmatpush2.msra.mxu0 0.0
    %3491 = vmatprep.subr.mxu0 0.0
    %3492 = vmatpush2.msra.mxu0 0.0
    %3493 = vmatprep.subr.mxu0 0.0
    %3494 = vmatpush2.msra.mxu0 0.0
    %3495 = vmatprep.subr.mxu0 0.0
    %3496 = vmatpush2.msra.mxu0 0.0
    %3497 = vmatprep.subr.mxu0 0.0
    %3498 = vmatpush2.msra.mxu0 0.0
    %3499 = vmatprep.subr.mxu0 0.0
    %3500 = vmatpush2.msra.mxu0 0.0
    %3501 = vmatprep.subr.mxu0 0.0
    %3502 = vmatpush2.msra.mxu0 0.0
    %3503 = vmatprep.subr.mxu0 0.0
    %3504 = vmatpush2.msra.mxu0 0.0
    %3505 = vmatprep.subr.mxu0 0.0
    %3506 = vmatpush2.msra.mxu0 0.0
    %3507 = vmatprep.mubr.f32.mxu0 0.0
    %3508 = vmatmul.mubr.f32.gmra.mxu0 %v3441
    %v3509 = vpop.f32.mrf.mxu0
    %v3510 = vadd.f32 0.0, %v3509
    %v3511 = vpop.f32.mrf.mxu0
    %3512 = vdwg.mxu0
    %vm3513 = vcmp.gt.f32.partialorder %v3510, 0.0
    %v3514 = vmin.f32 %v3510, 0.0
    %v3515 = vmul.f32 %v3514, 1.442695
    %v3516 = vpow.pop %v3515
    %v3517 = vsub.f32 %v3516, 1.0
    %v3518 = vmul.f32 %v3517, 1.6732632
    %v3519 = vsel %vm3513, %v3510, %v3518
    %v3520 = vmul.f32 %v3519, 1.050701
    %3521 = vmatprep.subr.mxu0 0.0
    %3522 = vmatpush1.msra.mxu0 0.0
    %3523 = vmatprep.subr.mxu0 0.0
    %3524 = vmatpush1.msra.mxu0 0.0
    %3525 = vmatprep.subr.mxu0 0.0
    %3526 = vmatpush1.msra.mxu0 0.0
    %3527 = vmatprep.subr.mxu0 0.0
    %3528 = vmatpush1.msra.mxu0 0.0
    %3529 = vmatprep.subr.mxu0 0.0
    %3530 = vmatpush1.msra.mxu0 0.0
    %3531 = vmatprep.subr.mxu0 0.0
    %3532 = vmatpush1.msra.mxu0 0.0
    %3533 = vmatprep.subr.mxu0 0.0
    %3534 = vmatpush1.msra.mxu0 0.0
    %3535 = vmatprep.subr.mxu0 0.0
    %3536 = vmatpush1.msra.mxu0 0.0
    %3537 = vmatprep.subr.mxu0 0.0
    %3538 = vmatpush1.msra.mxu0 0.0
    %3539 = vmatprep.subr.mxu0 0.0
    %3540 = vmatpush1.msra.mxu0 0.0
    %3541 = vmatprep.subr.mxu0 0.0
    %3542 = vmatpush1.msra.mxu0 0.0
    %3543 = vmatprep.subr.mxu0 0.0
    %3544 = vmatpush1.msra.mxu0 0.0
    %3545 = vmatprep.subr.mxu0 0.0
    %3546 = vmatpush1.msra.mxu0 0.0
    %3547 = vmatprep.subr.mxu0 0.0
    %3548 = vmatpush1.msra.mxu0 0.0
    %3549 = vmatprep.subr.mxu0 0.0
    %3550 = vmatpush1.msra.mxu0 0.0
    %3551 = vmatprep.subr.mxu0 0.0
    %3552 = vmatpush1.msra.mxu0 %v3094
    %3553 = vmatprep.subr.mxu0 0.0
    %3554 = vmatpush2.msra.mxu0 0.0
    %3555 = vmatprep.subr.mxu0 0.0
    %3556 = vmatpush2.msra.mxu0 0.0
    %3557 = vmatprep.subr.mxu0 0.0
    %3558 = vmatpush2.msra.mxu0 0.0
    %3559 = vmatprep.subr.mxu0 0.0
    %3560 = vmatpush2.msra.mxu0 0.0
    %3561 = vmatprep.subr.mxu0 0.0
    %3562 = vmatpush2.msra.mxu0 0.0
    %3563 = vmatprep.subr.mxu0 0.0
    %3564 = vmatpush2.msra.mxu0 0.0
    %3565 = vmatprep.subr.mxu0 0.0
    %3566 = vmatpush2.msra.mxu0 0.0
    %3567 = vmatprep.subr.mxu0 0.0
    %3568 = vmatpush2.msra.mxu0 0.0
    %3569 = vmatprep.subr.mxu0 0.0
    %3570 = vmatpush2.msra.mxu0 0.0
    %3571 = vmatprep.subr.mxu0 0.0
    %3572 = vmatpush2.msra.mxu0 0.0
    %3573 = vmatprep.subr.mxu0 0.0
    %3574 = vmatpush2.msra.mxu0 0.0
    %3575 = vmatprep.subr.mxu0 0.0
    %3576 = vmatpush2.msra.mxu0 0.0
    %3577 = vmatprep.subr.mxu0 0.0
    %3578 = vmatpush2.msra.mxu0 0.0
    %3579 = vmatprep.subr.mxu0 0.0
    %3580 = vmatpush2.msra.mxu0 0.0
    %3581 = vmatprep.subr.mxu0 0.0
    %3582 = vmatpush2.msra.mxu0 0.0
    %3583 = vmatprep.subr.mxu0 0.0
    %3584 = vmatpush2.msra.mxu0 0.0
    %3585 = vmatprep.mubr.f32.mxu0 0.0
    %3586 = vmatmul.mubr.f32.gmra.mxu0 %v3441
    %v3587 = vpop.f32.mrf.mxu0
    %v3588 = vadd.f32 0.0, %v3587
    %v3589 = vpop.f32.mrf.mxu0
    %3590 = vdwg.mxu0
    %v3592 = vsel %vm586, %v3588, 0
    %3594 = vmatprep.subr.mxu0 0.0
    %3595 = vmatpush1.msra.mxu0 0.0
    %3596 = vmatprep.subr.mxu0 0.0
    %3597 = vmatpush1.msra.mxu0 0.0
    %3598 = vmatprep.subr.mxu0 0.0
    %3599 = vmatpush1.msra.mxu0 0.0
    %3600 = vmatprep.subr.mxu0 0.0
    %3601 = vmatpush1.msra.mxu0 0.0
    %3602 = vmatprep.subr.mxu0 0.0
    %3603 = vmatpush1.msra.mxu0 0.0
    %3604 = vmatprep.subr.mxu0 0.0
    %3605 = vmatpush1.msra.mxu0 0.0
    %3606 = vmatprep.subr.mxu0 0.0
    %3607 = vmatpush1.msra.mxu0 0.0
    %3608 = vmatprep.subr.mxu0 0.0
    %3609 = vmatpush1.msra.mxu0 0.0
    %3610 = vmatprep.subr.mxu0 0.0
    %3611 = vmatpush1.msra.mxu0 0.0
    %3612 = vmatprep.subr.mxu0 0.0
    %3613 = vmatpush1.msra.mxu0 0.0
    %3614 = vmatprep.subr.mxu0 0.0
    %3615 = vmatpush1.msra.mxu0 0.0
    %3616 = vmatprep.subr.mxu0 0.0
    %3617 = vmatpush1.msra.mxu0 0.0
    %3618 = vmatprep.subr.mxu0 0.0
    %3619 = vmatpush1.msra.mxu0 0.0
    %3620 = vmatprep.subr.mxu0 0.0
    %3621 = vmatpush1.msra.mxu0 0.0
    %3622 = vmatprep.subr.mxu0 0.0
    %3623 = vmatpush1.msra.mxu0 0.0
    %3624 = vmatprep.subr.mxu0 0.0
    %3625 = vmatpush1.msra.mxu0 %v3407
    %3626 = vmatprep.subr.mxu0 0.0
    %3627 = vmatpush2.msra.mxu0 0.0
    %3628 = vmatprep.subr.mxu0 0.0
    %3629 = vmatpush2.msra.mxu0 0.0
    %3630 = vmatprep.subr.mxu0 0.0
    %3631 = vmatpush2.msra.mxu0 0.0
    %3632 = vmatprep.subr.mxu0 0.0
    %3633 = vmatpush2.msra.mxu0 0.0
    %3634 = vmatprep.subr.mxu0 0.0
    %3635 = vmatpush2.msra.mxu0 0.0
    %3636 = vmatprep.subr.mxu0 0.0
    %3637 = vmatpush2.msra.mxu0 0.0
    %3638 = vmatprep.subr.mxu0 0.0
    %3639 = vmatpush2.msra.mxu0 0.0
    %3640 = vmatprep.subr.mxu0 0.0
    %3641 = vmatpush2.msra.mxu0 0.0
    %3642 = vmatprep.subr.mxu0 0.0
    %3643 = vmatpush2.msra.mxu0 0.0
    %3644 = vmatprep.subr.mxu0 0.0
    %3645 = vmatpush2.msra.mxu0 0.0
    %3646 = vmatprep.subr.mxu0 0.0
    %3647 = vmatpush2.msra.mxu0 0.0
    %3648 = vmatprep.subr.mxu0 0.0
    %3649 = vmatpush2.msra.mxu0 0.0
    %3650 = vmatprep.subr.mxu0 0.0
    %3651 = vmatpush2.msra.mxu0 0.0
    %3652 = vmatprep.subr.mxu0 0.0
    %3653 = vmatpush2.msra.mxu0 0.0
    %3654 = vmatprep.subr.mxu0 0.0
    %3655 = vmatpush2.msra.mxu0 0.0
    %3656 = vmatprep.subr.mxu0 0.0
    %3657 = vmatpush2.msra.mxu0 0.0
    %3658 = vmatprep.mubr.f32.mxu0 0.0
    %3659 = vmatmul.mubr.f32.gmra.mxu0 %v3592
    %v3660 = vpop.f32.mrf.mxu0
    %v3661 = vadd.f32 0.0, %v3660
    %v3662 = vpop.f32.mrf.mxu0
    %3663 = vdwg.mxu0
    %v3664 = vsel %vm586, %v3094, 0.0
    %3665 = vadd.xlane.f32.xlu0 %v3664
    %v3666 = vpop.xlane.xlu0 %3665
    %v3667 = vsel %vm906, %v3666, 0.0
    %3668 = vadd.xlane.f32.xlu0 %v3667
    %v3669 = vpop.xlane.xlu0 %3668
    %v3670 = vrot.slane %v3669, 4
    %v3671 = vadd.f32 %v3669, %v3670
    %v3672 = vrot.slane %v3671, 2
    %v3673 = vadd.f32 %v3671, %v3672
    %v3674 = vrot.slane %v3673, 1
    %v3675 = vadd.f32 %v3673, %v3674
    %s3676 = vtos %v3675
    %v3677 = vstv %s3676
    %v3678 = vmax.f32 %v3677, 1e-15
    %v3679 = vrcp.pop %v3678
    %3680 = vmatprep.subr.mxu0 0.0
    %3681 = vmatpush1.msra.mxu0 0.0
    %3682 = vmatprep.subr.mxu0 0.0
    %3683 = vmatpush1.msra.mxu0 0.0
    %3684 = vmatprep.subr.mxu0 0.0
    %3685 = vmatpush1.msra.mxu0 0.0
    %3686 = vmatprep.subr.mxu0 0.0
    %3687 = vmatpush1.msra.mxu0 0.0
    %3688 = vmatprep.subr.mxu0 0.0
    %3689 = vmatpush1.msra.mxu0 0.0
    %3690 = vmatprep.subr.mxu0 0.0
    %3691 = vmatpush1.msra.mxu0 0.0
    %3692 = vmatprep.subr.mxu0 0.0
    %3693 = vmatpush1.msra.mxu0 0.0
    %3694 = vmatprep.subr.mxu0 0.0
    %3695 = vmatpush1.msra.mxu0 0.0
    %3696 = vmatprep.subr.mxu0 0.0
    %3697 = vmatpush1.msra.mxu0 0.0
    %3698 = vmatprep.subr.mxu0 0.0
    %3699 = vmatpush1.msra.mxu0 0.0
    %3700 = vmatprep.subr.mxu0 0.0
    %3701 = vmatpush1.msra.mxu0 0.0
    %3702 = vmatprep.subr.mxu0 0.0
    %3703 = vmatpush1.msra.mxu0 0.0
    %3704 = vmatprep.subr.mxu0 0.0
    %3705 = vmatpush1.msra.mxu0 0.0
    %3706 = vmatprep.subr.mxu0 0.0
    %3707 = vmatpush1.msra.mxu0 0.0
    %3708 = vmatprep.subr.mxu0 0.0
    %3709 = vmatpush1.msra.mxu0 0.0
    %3710 = vmatprep.subr.mxu0 0.0
    %3711 = vmatpush1.msra.mxu0 %v3666
    %3712 = vmatprep.subr.mxu0 0.0
    %3713 = vmatpush2.msra.mxu0 0.0
    %3714 = vmatprep.subr.mxu0 0.0
    %3715 = vmatpush2.msra.mxu0 0.0
    %3716 = vmatprep.subr.mxu0 0.0
    %3717 = vmatpush2.msra.mxu0 0.0
    %3718 = vmatprep.subr.mxu0 0.0
    %3719 = vmatpush2.msra.mxu0 0.0
    %3720 = vmatprep.subr.mxu0 0.0
    %3721 = vmatpush2.msra.mxu0 0.0
    %3722 = vmatprep.subr.mxu0 0.0
    %3723 = vmatpush2.msra.mxu0 0.0
    %3724 = vmatprep.subr.mxu0 0.0
    %3725 = vmatpush2.msra.mxu0 0.0
    %3726 = vmatprep.subr.mxu0 0.0
    %3727 = vmatpush2.msra.mxu0 0.0
    %3728 = vmatprep.subr.mxu0 0.0
    %3729 = vmatpush2.msra.mxu0 0.0
    %3730 = vmatprep.subr.mxu0 0.0
    %3731 = vmatpush2.msra.mxu0 0.0
    %3732 = vmatprep.subr.mxu0 0.0
    %3733 = vmatpush2.msra.mxu0 0.0
    %3734 = vmatprep.subr.mxu0 0.0
    %3735 = vmatpush2.msra.mxu0 0.0
    %3736 = vmatprep.subr.mxu0 0.0
    %3737 = vmatpush2.msra.mxu0 0.0
    %3738 = vmatprep.subr.mxu0 0.0
    %3739 = vmatpush2.msra.mxu0 0.0
    %3740 = vmatprep.subr.mxu0 0.0
    %3741 = vmatpush2.msra.mxu0 0.0
    %3742 = vmatprep.subr.mxu0 0.0
    %3743 = vmatpush2.msra.mxu0 0.0
    %3744 = vmatprep.mubr.f32.mxu0 0.0
    %3745 = vmatmul.mubr.f32.gmra.mxu0 %v3441
    %v3746 = vpop.f32.mrf.mxu0
    %v3747 = vadd.f32 0.0, %v3746
    %v3748 = vpop.f32.mrf.mxu0
    %3749 = vdwg.mxu0
    %v3750 = vmul.f32 %v3661, %v896
    %v3751 = vsel %vm1879, %v3750, 0.0
    %3752 = vadd.xlane.f32.xlu0 %v3751
    %v3753 = vpop.xlane.xlu0 %3752
    %v3754 = vrot.slane %v3753, 4
    %v3755 = vadd.f32 %v3753, %v3754
    %v3756 = vrot.slane %v3755, 2
    %v3757 = vadd.f32 %v3755, %v3756
    %v3758 = vrot.slane %v3757, 1
    %v3759 = vadd.f32 %v3757, %v3758
    %s3760 = vtos %v3759
    %v3761 = vstv %s3760
    %v3762 = vmul.f32 %v3747, %v3747
    %v3763 = vsel %vm908, %v3762, 0.0
    %3764 = vadd.xlane.f32.xlu0 %v3763
    %v3765 = vpop.xlane.xlu0 %3764
    %v3766 = vrot.slane %v3765, 4
    %v3767 = vadd.f32 %v3765, %v3766
    %v3768 = vrot.slane %v3767, 2
    %v3769 = vadd.f32 %v3767, %v3768
    %v3770 = vrot.slane %v3769, 1
    %v3771 = vadd.f32 %v3769, %v3770
    %s3772 = vtos %v3771
    %v3773 = vstv %s3772
    %v3774 = vmul.f32 %v3773, %v3679
    %v3775 = vsub.f32 %v3761, %v3774
    %v3776 = vsub.f32 0.0, %v3775
    %v3777 = vmul.f32 %v3776, %v3679
    %3778 = vmatprep.subr.mxu0 0.0
    %3779 = vmatpush1.msra.mxu0 0.0
    %3780 = vmatprep.subr.mxu0 0.0
    %3781 = vmatpush1.msra.mxu0 0.0
    %3782 = vmatprep.subr.mxu0 0.0
    %3783 = vmatpush1.msra.mxu0 0.0
    %3784 = vmatprep.subr.mxu0 0.0
    %3785 = vmatpush1.msra.mxu0 0.0
    %3786 = vmatprep.subr.mxu0 0.0
    %3787 = vmatpush1.msra.mxu0 0.0
    %3788 = vmatprep.subr.mxu0 0.0
    %3789 = vmatpush1.msra.mxu0 0.0
    %3790 = vmatprep.subr.mxu0 0.0
    %3791 = vmatpush1.msra.mxu0 0.0
    %3792 = vmatprep.subr.mxu0 0.0
    %3793 = vmatpush1.msra.mxu0 0.0
    %3794 = vmatprep.subr.mxu0 0.0
    %3795 = vmatpush1.msra.mxu0 0.0
    %3796 = vmatprep.subr.mxu0 0.0
    %3797 = vmatpush1.msra.mxu0 0.0
    %3798 = vmatprep.subr.mxu0 0.0
    %3799 = vmatpush1.msra.mxu0 0.0
    %3800 = vmatprep.subr.mxu0 0.0
    %3801 = vmatpush1.msra.mxu0 0.0
    %3802 = vmatprep.subr.mxu0 0.0
    %3803 = vmatpush1.msra.mxu0 0.0
    %3804 = vmatprep.subr.mxu0 0.0
    %3805 = vmatpush1.msra.mxu0 0.0
    %3806 = vmatprep.subr.mxu0 0.0
    %3807 = vmatpush1.msra.mxu0 0.0
    %3808 = vmatprep.subr.mxu0 0.0
    %3809 = vmatpush1.msra.mxu0 %v3407
    %3810 = vmatprep.subr.mxu0 0.0
    %3811 = vmatpush2.msra.mxu0 0.0
    %3812 = vmatprep.subr.mxu0 0.0
    %3813 = vmatpush2.msra.mxu0 0.0
    %3814 = vmatprep.subr.mxu0 0.0
    %3815 = vmatpush2.msra.mxu0 0.0
    %3816 = vmatprep.subr.mxu0 0.0
    %3817 = vmatpush2.msra.mxu0 0.0
    %3818 = vmatprep.subr.mxu0 0.0
    %3819 = vmatpush2.msra.mxu0 0.0
    %3820 = vmatprep.subr.mxu0 0.0
    %3821 = vmatpush2.msra.mxu0 0.0
    %3822 = vmatprep.subr.mxu0 0.0
    %3823 = vmatpush2.msra.mxu0 0.0
    %3824 = vmatprep.subr.mxu0 0.0
    %3825 = vmatpush2.msra.mxu0 0.0
    %3826 = vmatprep.subr.mxu0 0.0
    %3827 = vmatpush2.msra.mxu0 0.0
    %3828 = vmatprep.subr.mxu0 0.0
    %3829 = vmatpush2.msra.mxu0 0.0
    %3830 = vmatprep.subr.mxu0 0.0
    %3831 = vmatpush2.msra.mxu0 0.0
    %3832 = vmatprep.subr.mxu0 0.0
    %3833 = vmatpush2.msra.mxu0 0.0
    %3834 = vmatprep.subr.mxu0 0.0
    %3835 = vmatpush2.msra.mxu0 0.0
    %3836 = vmatprep.subr.mxu0 0.0
    %3837 = vmatpush2.msra.mxu0 0.0
    %3838 = vmatprep.subr.mxu0 0.0
    %3839 = vmatpush2.msra.mxu0 0.0
    %3840 = vmatprep.subr.mxu0 0.0
    %3841 = vmatpush2.msra.mxu0 0.0
    %3842 = vmatprep.mubr.f32.mxu0 0.0
    %3843 = vmatmul.mubr.f32.gmra.mxu0 %v3441
    %v3844 = vpop.f32.mrf.mxu0
    %v3845 = vadd.f32 0.0, %v3844
    %v3846 = vpop.f32.mrf.mxu0
    %3847 = vdwg.mxu0
    %v3848 = vmul.f32 %v3845, %v3845
    %v3849 = vsel %vm1879, %v3848, 0.0
    %3850 = vadd.xlane.f32.xlu0 %v3849
    %v3851 = vpop.xlane.xlu0 %3850
    %v3852 = vrot.slane %v3851, 4
    %v3853 = vadd.f32 %v3851, %v3852
    %v3854 = vrot.slane %v3853, 2
    %v3855 = vadd.f32 %v3853, %v3854
    %v3856 = vrot.slane %v3855, 1
    %v3857 = vadd.f32 %v3855, %v3856
    %s3858 = vtos %v3857
    %v3859 = vstv %s3858
    %v3860 = vmax.f32 %v3859, 1e-15
    %v3861 = vrsqrt.pop %v3860
    %v3862 = vmul.f32 %v3845, %v3861
    %v3863 = vsub.f32 %v3862, %v1992
    %v3864 = vmul.f32 %v3863, %v3863
    %v3865 = vsel %vm1879, %v3864, 0.0
    %3866 = vadd.xlane.f32.xlu0 %v3865
    %v3867 = vpop.xlane.xlu0 %3866
    %v3868 = vrot.slane %v3867, 4
    %v3869 = vadd.f32 %v3867, %v3868
    %v3870 = vrot.slane %v3869, 2
    %v3871 = vadd.f32 %v3869, %v3870
    %v3872 = vrot.slane %v3871, 1
    %v3873 = vadd.f32 %v3871, %v3872
    %s3874 = vtos %v3873
    %v3875 = vstv %s3874
    %v3876 = vrsqrt.pop %v3875
    %v3877 = vmul.f32 %v3875, %v3876
    %vm3878 = vcmp.eq.f32.partialorder %v3875, inf
    %v3879 = vsel %vm3878, %v3875, %v3877
    %vm3880 = vcmp.eq.f32.partialorder %v3875, 0.0
    %v3881 = vand.u32 %v3875, 2147483648
    %v3882 = vsel %vm3880, %v3881, %v3879
    %v3883 = vsel %vm186, %v3407, 0.0
    %v3884 = vrot.slane %v3883, 4
    %v3885 = vadd.f32 %v3883, %v3884
    %v3886 = vrot.slane %v3885, 2
    %v3887 = vadd.f32 %v3885, %v3886
    %v3888 = vrot.slane %v3887, 1
    %v3889 = vadd.f32 %v3887, %v3888
    %v3890 = vmul.f32 %v3889, %v3889
    %v3891 = vsel %vm2021, %v3890, 0.0
    %3892 = vadd.xlane.f32.xlu0 %v3891
    %v3893 = vpop.xlane.xlu0 %3892
    %v3894 = vrot.slane %v3893, 4
    %v3895 = vadd.f32 %v3893, %v3894
    %v3896 = vrot.slane %v3895, 2
    %v3897 = vadd.f32 %v3895, %v3896
    %v3898 = vrot.slane %v3897, 1
    %v3899 = vadd.f32 %v3897, %v3898
    %s3900 = vtos %v3899
    %v3901 = vstv %s3900
    %v3902 = vrsqrt.pop %v3901
    %v3903 = vmul.f32 %v3901, %v3902
    %vm3904 = vcmp.eq.f32.partialorder %v3901, inf
    %v3905 = vsel %vm3904, %v3901, %v3903
    %vm3906 = vcmp.eq.f32.partialorder %v3901, 0.0
    %v3907 = vand.u32 %v3901, 2147483648
    %v3908 = vsel %vm3906, %v3907, %v3905
    %v3909 = vmul.f32 %v3661, %v1173
    %v3910 = vsel %vm1879, %v3909, 0.0
    %3911 = vadd.xlane.f32.xlu0 %v3910
    %v3912 = vpop.xlane.xlu0 %3911
    %v3913 = vrot.slane %v3910, 4
    %v3914 = vadd.f32 %v3910, %v3913
    %v3915 = vrot.slane %v3914, 2
    %v3916 = vadd.f32 %v3914, %v3915
    %v3917 = vrot.slane %v3916, 1
    %v3918 = vadd.f32 %v3916, %v3917
    %v3919 = vrsqrt.pop %v3912
    %v3920 = vmul.f32 %v3912, %v3919
    %vm3921 = vcmp.eq.f32.partialorder %v3912, inf
    %v3922 = vsel %vm3921, %v3912, %v3920
    %vm3923 = vcmp.eq.f32.partialorder %v3912, 0.0
    %v3924 = vand.u32 %v3912, 2147483648
    %v3925 = vsel %vm3923, %v3924, %v3922
    %v3926 = vadd.f32 %v3925, 1e-15
    %v3927 = vrcp.pop %v3926
    %v3928 = vmul.f32 %v3909, %v3927
    %v3929 = vrsqrt.pop %v3918
    %v3930 = vmul.f32 %v3918, %v3929
    %vm3931 = vcmp.eq.f32.partialorder %v3918, inf
    %v3932 = vsel %vm3931, %v3918, %v3930
    %vm3933 = vcmp.eq.f32.partialorder %v3918, 0.0
    %v3934 = vand.u32 %v3918, 2147483648
    %v3935 = vsel %vm3933, %v3934, %v3932
    %v3936 = vadd.f32 %v3935, 1e-15
    %v3937 = vrcp.pop %v3936
    %v3938 = vmul.f32 %v3928, %v3937
    %v3939 = vadd.f32 %v2070, %v3777
    %v3940 = vadd.f32 %v2071, %v3882
    %v3941 = vadd.f32 %v2072, %v3908
    %v3943 = vsel %vm186, %v3938, 0
    %v3946 = vsel %vm196, %v3520, 0
    %3948 = vmatprep.subr.mxu0 0.0
    %3949 = vmatpush1.msra.mxu0 0.0
    %3950 = vmatprep.subr.mxu0 0.0
    %3951 = vmatpush1.msra.mxu0 0.0
    %3952 = vmatprep.subr.mxu0 0.0
    %3953 = vmatpush1.msra.mxu0 0.0
    %3954 = vmatprep.subr.mxu0 0.0
    %3955 = vmatpush1.msra.mxu0 0.0
    %3956 = vmatprep.subr.mxu0 0.0
    %3957 = vmatpush1.msra.mxu0 0.0
    %3958 = vmatprep.subr.mxu0 0.0
    %3959 = vmatpush1.msra.mxu0 0.0
    %3960 = vmatprep.subr.mxu0 0.0
    %3961 = vmatpush1.msra.mxu0 0.0
    %3962 = vmatprep.subr.mxu0 0.0
    %3963 = vmatpush1.msra.mxu0 0.0
    %3964 = vmatprep.subr.mxu0 0.0
    %3965 = vmatpush1.msra.mxu0 0.0
    %3966 = vmatprep.subr.mxu0 0.0
    %3967 = vmatpush1.msra.mxu0 0.0
    %3968 = vmatprep.subr.mxu0 0.0
    %3969 = vmatpush1.msra.mxu0 0.0
    %3970 = vmatprep.subr.mxu0 0.0
    %3971 = vmatpush1.msra.mxu0 0.0
    %3972 = vmatprep.subr.mxu0 0.0
    %3973 = vmatpush1.msra.mxu0 0.0
    %3974 = vmatprep.subr.mxu0 0.0
    %3975 = vmatpush1.msra.mxu0 0.0
    %3976 = vmatprep.subr.mxu0 0.0
    %3977 = vmatpush1.msra.mxu0 0.0
    %3978 = vmatprep.subr.mxu0 0.0
    %3979 = vmatpush1.msra.mxu0 %v3946
    %3980 = vmatprep.subr.mxu0 0.0
    %3981 = vmatpush2.msra.mxu0 0.0
    %3982 = vmatprep.subr.mxu0 0.0
    %3983 = vmatpush2.msra.mxu0 0.0
    %3984 = vmatprep.subr.mxu0 0.0
    %3985 = vmatpush2.msra.mxu0 0.0
    %3986 = vmatprep.subr.mxu0 0.0
    %3987 = vmatpush2.msra.mxu0 0.0
    %3988 = vmatprep.subr.mxu0 0.0
    %3989 = vmatpush2.msra.mxu0 0.0
    %3990 = vmatprep.subr.mxu0 0.0
    %3991 = vmatpush2.msra.mxu0 0.0
    %3992 = vmatprep.subr.mxu0 0.0
    %3993 = vmatpush2.msra.mxu0 0.0
    %3994 = vmatprep.subr.mxu0 0.0
    %3995 = vmatpush2.msra.mxu0 0.0
    %3996 = vmatprep.subr.mxu0 0.0
    %3997 = vmatpush2.msra.mxu0 0.0
    %3998 = vmatprep.subr.mxu0 0.0
    %3999 = vmatpush2.msra.mxu0 0.0
    %4000 = vmatprep.subr.mxu0 0.0
    %4001 = vmatpush2.msra.mxu0 0.0
    %4002 = vmatprep.subr.mxu0 0.0
    %4003 = vmatpush2.msra.mxu0 0.0
    %4004 = vmatprep.subr.mxu0 0.0
    %4005 = vmatpush2.msra.mxu0 0.0
    %4006 = vmatprep.subr.mxu0 0.0
    %4007 = vmatpush2.msra.mxu0 0.0
    %4008 = vmatprep.subr.mxu0 0.0
    %4009 = vmatpush2.msra.mxu0 0.0
    %4010 = vmatprep.subr.mxu0 0.0
    %4011 = vmatpush2.msra.mxu0 0.0
    %4012 = vmatprep.mubr.f32.mxu0 0.0
    %4013 = vmatmul.mubr.f32.gmra.mxu0 %v3943
    %v4014 = vpop.f32.mrf.mxu0
    %v4015 = vadd.f32 0.0, %v4014
    %v4016 = vpop.f32.mrf.mxu0
    %4017 = vdwg.mxu0
    %4018 = vrot.lane.b32.xlu0 %v3520, 32
    %v4019 = vpop.permute.xlu0 %4018
    %v4021 = vsel %vm417, %v4015, %v4019
    %v4023 = vsel %vm1292, %v4021, 0
    %4025 = vmatprep.subr.mxu0 0.0
    %4026 = vmatpush1.msra.mxu0 0.0
    %4027 = vmatprep.subr.mxu0 0.0
    %4028 = vmatpush1.msra.mxu0 0.0
    %4029 = vmatprep.subr.mxu0 0.0
    %4030 = vmatpush1.msra.mxu0 0.0
    %4031 = vmatprep.subr.mxu0 0.0
    %4032 = vmatpush1.msra.mxu0 0.0
    %4033 = vmatprep.subr.mxu0 0.0
    %4034 = vmatpush1.msra.mxu0 0.0
    %4035 = vmatprep.subr.mxu0 0.0
    %4036 = vmatpush1.msra.mxu0 0.0
    %4037 = vmatprep.subr.mxu0 0.0
    %4038 = vmatpush1.msra.mxu0 0.0
    %4039 = vmatprep.subr.mxu0 0.0
    %4040 = vmatpush1.msra.mxu0 0.0
    %4041 = vmatprep.subr.mxu0 0.0
    %4042 = vmatpush1.msra.mxu0 %v319
    %4043 = vmatprep.subr.mxu0 0.0
    %4044 = vmatpush1.msra.mxu0 %v318
    %4045 = vmatprep.subr.mxu0 0.0
    %4046 = vmatpush1.msra.mxu0 %v317
    %4047 = vmatprep.subr.mxu0 0.0
    %4048 = vmatpush1.msra.mxu0 %v316
    %4049 = vmatprep.subr.mxu0 0.0
    %4050 = vmatpush1.msra.mxu0 %v315
    %4051 = vmatprep.subr.mxu0 0.0
    %4052 = vmatpush1.msra.mxu0 %v314
    %4053 = vmatprep.subr.mxu0 0.0
    %4054 = vmatpush1.msra.mxu0 %v313
    %4055 = vmatprep.subr.mxu0 0.0
    %4056 = vmatpush1.msra.mxu0 %v312
    %4057 = vmatprep.subr.mxu0 0.0
    %4058 = vmatpush2.msra.mxu0 0.0
    %4059 = vmatprep.subr.mxu0 0.0
    %4060 = vmatpush2.msra.mxu0 0.0
    %4061 = vmatprep.subr.mxu0 0.0
    %4062 = vmatpush2.msra.mxu0 0.0
    %4063 = vmatprep.subr.mxu0 0.0
    %4064 = vmatpush2.msra.mxu0 0.0
    %4065 = vmatprep.subr.mxu0 0.0
    %4066 = vmatpush2.msra.mxu0 0.0
    %4067 = vmatprep.subr.mxu0 0.0
    %4068 = vmatpush2.msra.mxu0 0.0
    %4069 = vmatprep.subr.mxu0 0.0
    %4070 = vmatpush2.msra.mxu0 0.0
    %4071 = vmatprep.subr.mxu0 0.0
    %4072 = vmatpush2.msra.mxu0 0.0
    %4073 = vmatprep.subr.mxu0 0.0
    %4074 = vmatpush2.msra.mxu0 0.0
    %4075 = vmatprep.subr.mxu0 0.0
    %4076 = vmatpush2.msra.mxu0 0.0
    %4077 = vmatprep.subr.mxu0 0.0
    %4078 = vmatpush2.msra.mxu0 0.0
    %4079 = vmatprep.subr.mxu0 0.0
    %4080 = vmatpush2.msra.mxu0 0.0
    %4081 = vmatprep.subr.mxu0 0.0
    %4082 = vmatpush2.msra.mxu0 0.0
    %4083 = vmatprep.subr.mxu0 0.0
    %4084 = vmatpush2.msra.mxu0 0.0
    %4085 = vmatprep.subr.mxu0 0.0
    %4086 = vmatpush2.msra.mxu0 0.0
    %4087 = vmatprep.subr.mxu0 0.0
    %4088 = vmatpush2.msra.mxu0 0.0
    %4089 = vmatprep.mubr.f32.mxu0 0.0
    %4090 = vmatmul.mubr.f32.gmra.mxu0 %v4023
    %v4091 = vpop.f32.mrf.mxu0
    %v4092 = vadd.f32 %v2157, %v4091
    %v4093 = vpop.f32.mrf.mxu0
    %4094 = vdwg.mxu0
    %v4095 = vsel %vm2232, %v4092, 0.0
    %v4096 = vrot.slane %v4095, 4
    %v4097 = vadd.f32 %v4095, %v4096
    %v4098 = vrot.slane %v4097, 2
    %v4099 = vadd.f32 %v4097, %v4098
    %v4100 = vrot.slane %v4099, 1
    %v4101 = vadd.f32 %v4099, %v4100
    %v4102 = vmul.f32 %v4101, 0.25
    %vm4103 = vcmask 1040384
    %v4104 = vsel %vm4103, %v2240, %v4102
    %v4105 = vld [vmem:[%s19] sm:$0xff]
    %v4106 = vld [vmem:[%s19 + $0x8] sm:$0xff]
    %v4107 = vld [vmem:[%s19 + $0x10] sm:$0xff]
    %v4108 = vld [vmem:[%s19 + $0x18] sm:$0xff]
    %v4109 = vld [vmem:[%s20] sm:$0x1]
    %v4111 = vlaneseq
    %v4112 = vshrl.u32 %v4111, 7
    %v4113 = vsub.s32 0, %v4112
    %v4114 = vrot.slane %v4109, %v4113
    %v4117 = vsel %vm417, %v4104, 0
    %4119 = vmatprep.subr.mxu0 0.0
    %4120 = vmatpush1.msra.mxu0 0.0
    %4121 = vmatprep.subr.mxu0 0.0
    %4122 = vmatpush1.msra.mxu0 0.0
    %4123 = vmatprep.subr.mxu0 0.0
    %4124 = vmatpush1.msra.mxu0 0.0
    %4125 = vmatprep.subr.mxu0 0.0
    %4126 = vmatpush1.msra.mxu0 0.0
    %4127 = vmatprep.subr.mxu0 0.0
    %4128 = vmatpush1.msra.mxu0 0.0
    %4129 = vmatprep.subr.mxu0 0.0
    %4130 = vmatpush1.msra.mxu0 0.0
    %4131 = vmatprep.subr.mxu0 0.0
    %4132 = vmatpush1.msra.mxu0 0.0
    %4133 = vmatprep.subr.mxu0 0.0
    %4134 = vmatpush1.msra.mxu0 0.0
    %4135 = vmatprep.subr.mxu0 0.0
    %4136 = vmatpush1.msra.mxu0 0.0
    %4137 = vmatprep.subr.mxu0 0.0
    %4138 = vmatpush1.msra.mxu0 0.0
    %4139 = vmatprep.subr.mxu0 0.0
    %4140 = vmatpush1.msra.mxu0 0.0
    %4141 = vmatprep.subr.mxu0 0.0
    %4142 = vmatpush1.msra.mxu0 0.0
    %4143 = vmatprep.subr.mxu0 0.0
    %4144 = vmatpush1.msra.mxu0 %v4108
    %4145 = vmatprep.subr.mxu0 0.0
    %4146 = vmatpush1.msra.mxu0 %v4107
    %4147 = vmatprep.subr.mxu0 0.0
    %4148 = vmatpush1.msra.mxu0 %v4106
    %4149 = vmatprep.subr.mxu0 0.0
    %4150 = vmatpush1.msra.mxu0 %v4105
    %4151 = vmatprep.subr.mxu0 0.0
    %4152 = vmatpush2.msra.mxu0 0.0
    %4153 = vmatprep.subr.mxu0 0.0
    %4154 = vmatpush2.msra.mxu0 0.0
    %4155 = vmatprep.subr.mxu0 0.0
    %4156 = vmatpush2.msra.mxu0 0.0
    %4157 = vmatprep.subr.mxu0 0.0
    %4158 = vmatpush2.msra.mxu0 0.0
    %4159 = vmatprep.subr.mxu0 0.0
    %4160 = vmatpush2.msra.mxu0 0.0
    %4161 = vmatprep.subr.mxu0 0.0
    %4162 = vmatpush2.msra.mxu0 0.0
    %4163 = vmatprep.subr.mxu0 0.0
    %4164 = vmatpush2.msra.mxu0 0.0
    %4165 = vmatprep.subr.mxu0 0.0
    %4166 = vmatpush2.msra.mxu0 0.0
    %4167 = vmatprep.subr.mxu0 0.0
    %4168 = vmatpush2.msra.mxu0 0.0
    %4169 = vmatprep.subr.mxu0 0.0
    %4170 = vmatpush2.msra.mxu0 0.0
    %4171 = vmatprep.subr.mxu0 0.0
    %4172 = vmatpush2.msra.mxu0 0.0
    %4173 = vmatprep.subr.mxu0 0.0
    %4174 = vmatpush2.msra.mxu0 0.0
    %4175 = vmatprep.subr.mxu0 0.0
    %4176 = vmatpush2.msra.mxu0 0.0
    %4177 = vmatprep.subr.mxu0 0.0
    %4178 = vmatpush2.msra.mxu0 0.0
    %4179 = vmatprep.subr.mxu0 0.0
    %4180 = vmatpush2.msra.mxu0 0.0
    %4181 = vmatprep.subr.mxu0 0.0
    %4182 = vmatpush2.msra.mxu0 0.0
    %4183 = vmatprep.mubr.f32.mxu0 0.0
    %4184 = vmatmul.mubr.f32.gmra.mxu0 %v4117
    %v4185 = vpop.f32.mrf.mxu0
    %v4186 = vadd.f32 %v4114, %v4185
    %v4187 = vpop.f32.mrf.mxu0
    %4188 = vdwg.mxu0
    %v4189 = vmax.f32 %v4186, 0.0
    %v4190 = vld [vmem:[%s21] sm:$0xff]
    %v4191 = vld [vmem:[%s21 + $0x8] sm:$0xff]
    %v4192 = vld [vmem:[%s21 + $0x10] sm:$0xff]
    %v4193 = vld [vmem:[%s21 + $0x18] sm:$0xff]
    %v4194 = vld [vmem:[%s22] sm:$0x1]
    %v4196 = vlaneseq
    %v4197 = vshrl.u32 %v4196, 7
    %v4198 = vsub.s32 0, %v4197
    %v4199 = vrot.slane %v4194, %v4198
    %v4202 = vsel %vm417, %v4189, 0
    %4204 = vmatprep.subr.mxu0 0.0
    %4205 = vmatpush1.msra.mxu0 0.0
    %4206 = vmatprep.subr.mxu0 0.0
    %4207 = vmatpush1.msra.mxu0 0.0
    %4208 = vmatprep.subr.mxu0 0.0
    %4209 = vmatpush1.msra.mxu0 0.0
    %4210 = vmatprep.subr.mxu0 0.0
    %4211 = vmatpush1.msra.mxu0 0.0
    %4212 = vmatprep.subr.mxu0 0.0
    %4213 = vmatpush1.msra.mxu0 0.0
    %4214 = vmatprep.subr.mxu0 0.0
    %4215 = vmatpush1.msra.mxu0 0.0
    %4216 = vmatprep.subr.mxu0 0.0
    %4217 = vmatpush1.msra.mxu0 0.0
    %4218 = vmatprep.subr.mxu0 0.0
    %4219 = vmatpush1.msra.mxu0 0.0
    %4220 = vmatprep.subr.mxu0 0.0
    %4221 = vmatpush1.msra.mxu0 0.0
    %4222 = vmatprep.subr.mxu0 0.0
    %4223 = vmatpush1.msra.mxu0 0.0
    %4224 = vmatprep.subr.mxu0 0.0
    %4225 = vmatpush1.msra.mxu0 0.0
    %4226 = vmatprep.subr.mxu0 0.0
    %4227 = vmatpush1.msra.mxu0 0.0
    %4228 = vmatprep.subr.mxu0 0.0
    %4229 = vmatpush1.msra.mxu0 %v4193
    %4230 = vmatprep.subr.mxu0 0.0
    %4231 = vmatpush1.msra.mxu0 %v4192
    %4232 = vmatprep.subr.mxu0 0.0
    %4233 = vmatpush1.msra.mxu0 %v4191
    %4234 = vmatprep.subr.mxu0 0.0
    %4235 = vmatpush1.msra.mxu0 %v4190
    %4236 = vmatprep.subr.mxu0 0.0
    %4237 = vmatpush2.msra.mxu0 0.0
    %4238 = vmatprep.subr.mxu0 0.0
    %4239 = vmatpush2.msra.mxu0 0.0
    %4240 = vmatprep.subr.mxu0 0.0
    %4241 = vmatpush2.msra.mxu0 0.0
    %4242 = vmatprep.subr.mxu0 0.0
    %4243 = vmatpush2.msra.mxu0 0.0
    %4244 = vmatprep.subr.mxu0 0.0
    %4245 = vmatpush2.msra.mxu0 0.0
    %4246 = vmatprep.subr.mxu0 0.0
    %4247 = vmatpush2.msra.mxu0 0.0
    %4248 = vmatprep.subr.mxu0 0.0
    %4249 = vmatpush2.msra.mxu0 0.0
    %4250 = vmatprep.subr.mxu0 0.0
    %4251 = vmatpush2.msra.mxu0 0.0
    %4252 = vmatprep.subr.mxu0 0.0
    %4253 = vmatpush2.msra.mxu0 0.0
    %4254 = vmatprep.subr.mxu0 0.0
    %4255 = vmatpush2.msra.mxu0 0.0
    %4256 = vmatprep.subr.mxu0 0.0
    %4257 = vmatpush2.msra.mxu0 0.0
    %4258 = vmatprep.subr.mxu0 0.0
    %4259 = vmatpush2.msra.mxu0 0.0
    %4260 = vmatprep.subr.mxu0 0.0
    %4261 = vmatpush2.msra.mxu0 0.0
    %4262 = vmatprep.subr.mxu0 0.0
    %4263 = vmatpush2.msra.mxu0 0.0
    %4264 = vmatprep.subr.mxu0 0.0
    %4265 = vmatpush2.msra.mxu0 0.0
    %4266 = vmatprep.subr.mxu0 0.0
    %4267 = vmatpush2.msra.mxu0 0.0
    %4268 = vmatprep.mubr.f32.mxu0 0.0
    %4269 = vmatmul.mubr.f32.gmra.mxu0 %v4202
    %v4270 = vpop.f32.mrf.mxu0
    %v4271 = vadd.f32 %v4199, %v4270
    %v4272 = vpop.f32.mrf.mxu0
    %4273 = vdwg.mxu0
    %vm4274 = vcmask 41984
    %v4275 = vsel %vm4274, %v4271, -inf
    %4276 = vmax.xlane.f32.xlu0 %v4275
    %v4277 = vpop.xlane.xlu0 %4276
    %v4278 = vsub.f32 %v4271, %v4277
    %v4279 = vmul.f32 %v4278, 1.442695
    %v4280 = vpow.pop %v4279
    %v4281 = vsel %vm4274, %v4280, 0.0
    %4282 = vadd.xlane.f32.xlu0 %v4281
    %v4283 = vpop.xlane.xlu0 %4282
    %v4284 = vlog2.pop %v4283
    %v4285 = vmul.f32 %v4284, 0.6931472
    %v4286 = vsub.f32 %v4278, %v4285
    %4287 = vst.msk [vmem:[#allocation2] sm:$0x3] %vm4274, %v4286
    %v4288 = vadd.f32 %v3095, %v3939
    %v4289 = vmul.f32 %v4288, 0.5
    %v4290 = vadd.f32 %v3096, %v3940
    %v4291 = vmul.f32 %v4290, 0.5
    %v4292 = vmul.f32 %v3097, %v3098
    %v4293 = vmul.f32 %v4292, 2.828427
    %v4294 = vmul.f32 %v3941, 0.25
    %v4295 = vmul.f32 %v4294, 2.0
    %v4296 = vadd.f32 %v4293, %v4295
    %v4297 = vmul.f32 %v4296, 0.25
    %v4298 = vsub.f32 %v4297, 2.0
    %v4299 = vadd.f32 %v4289, %v4291
    %v4300 = vadd.f32 %v4299, %v4298
    %s4301 = vtos %v4300
    %s4302 = scalar_lea.smem [#allocation5], 0
    %4303 = sst [smem:[%s4302]] %s4301
    // Predicated region
    $region94: #{net_forward.1} parent=1 // pred_check
      _
    $region95: #{net_forward.1} parent=1 // pred_check_branch
      %4305 = sbr.rel (0) target = $region97
    $region96: #{net_forward.1} parent=1 // pred_region
      %s4307 = ssub.s32 32, 32
      %4308 = vsyncadd [#allocation3], %s4307
      %s4310 = sshll.u32 [#allocation2], 4
      %s4311 = int_to_ptr.vmem [resolvable:$true] %s4310
      %4313 = dma.vmem_to_hbm [thread:$0]  %s4311, 32, %s23, [#allocation3]
    $region97: #{net_forward.1} parent=1 // pred_fallthru
      _
    // Predicated region
    $region98: #{net_forward.1} parent=1 // pred_check
      _
    $region99: #{net_forward.1} parent=1 // pred_check_branch
      %4315 = sbr.rel (0) target = $region101
    $region100: #{net_forward.1} parent=1 // pred_region
      %s4317 = ssub.s32 16, 16
      %4318 = vsyncadd [#allocation4], %s4317
      %4321 = dma.smem_to_hbm [#allocation5], 16, %s24, [#allocation4]
    $region101: #{net_forward.1} parent=1 // pred_fallthru
      _
    // Predicated region
    $region102: #{net_forward.1} parent=1 // pred_check
      _
    $region103: #{net_forward.1} parent=1 // pred_check_branch
      %4323 = sbr.rel (0) target = $region105
    $region104: #{net_forward.1} parent=1 // pred_region
      %4324 = dma.done [#allocation3], 32
    $region105: #{net_forward.1} parent=1 // pred_fallthru
      _
    // Predicated region
    $region106: #{net_forward.1} parent=1 // pred_check
      _
    $region107: #{net_forward.1} parent=1 // pred_check_branch
      %4326 = sbr.rel (0) target = $region109
    $region108: #{net_forward.1} parent=1 // pred_region
      %4327 = dma.done [#allocation4], 16
    $region109: #{net_forward.1} parent=1 // pred_fallthru
      _
    %4328 = sfence
    %4329 = vsyncpa [#allocation3], 1
    %4330 = vsyncpa [#allocation4], 1

</llo_original>
